<compile_context>
chip_gen: v6e
topology: v6e:2x2x1
jax: 0.10.0
libtpu: 0.0.40
codegen_flags: <defaults>
</compile_context>

<pallas_src>
import jax
import jax.numpy as jnp
from jax import lax
from jax.experimental import pallas as pl
from jax.experimental.pallas import tpu as pltpu


# ----------------------------- Pallas kernel ------------------------------- #

def _make_kernel(H, W, Cin, taps, compute_dtype):
    """3x3 conv (9 accumulated MXU matmuls) + bias + PReLU for one image."""

    def kernel(x_ref, w_ref, b_ref, alpha_ref, o_ref):
        # x_ref : (1, H, W, Cin)     input image (original dtype)
        # w_ref : (9, Cin, Cout)     per-tap weight matrices (compute_dtype)
        # b_ref : (1, Cout)          bias (f32)
        # alpha : (1,)               PReLU alpha (SMEM scalar, f32)
        # o_ref : (1, H, W, Cout)    pre-shuffle conv output (lane-dense Cout)
        a = alpha_ref[0]                       # read SMEM scalar up front
        x3 = x_ref[0]                          # (H, W, Cin)

        # --- W (lane-row) shifts: XLU roll + zero-mask of the wrapped column.
        w_idx = lax.broadcasted_iota(jnp.int32, (1, W, 1), 1)

        def shift_w(v, dw):
            if dw == 0:
                return v
            rolled = pltpu.roll(v, shift=(-dw) % W, axis=1)   # rolled[h,w] = v[h,w+dw]
            valid = (w_idx + dw >= 0) & (w_idx + dw < W)
            return jnp.where(valid, rolled, 0.0)

        # Cast once after the shifts so the MXU sees compute_dtype operands
        # while the shifts themselves run on the (f32) input layout.
        cols = {dw: shift_w(x3, dw).astype(compute_dtype) for dw in (-1, 0, 1)}
        zrow = jnp.zeros((1, W, Cin), compute_dtype)

        # --- H shifts: free leading-axis slice + concat with a zero row.
        def shift_h(v, dh):
            if dh == 0:
                return v
            if dh > 0:
                return jnp.concatenate([v[dh:], zrow], axis=0)
            return jnp.concatenate([zrow, v[:H + dh]], axis=0)

        # --- 9 accumulated matmuls (K = Cin) into an f32 accumulator.
        acc = None
        for t, (dh, dw) in enumerate(taps):
            xs = shift_h(cols[dw], dh)                         # (H, W, Cin), zeros at border
            contrib = jnp.einsum("hwc,cd->hwd", xs, w_ref[t],
                                 preferred_element_type=jnp.float32)
            acc = contrib if acc is None else acc + contrib

        acc = acc + b_ref[0][None, None, :]
        # PReLU with a single shared alpha commutes with the pixel shuffle.
        y = jnp.where(acc >= 0, acc, a * acc)
        o_ref[...] = y[None].astype(o_ref.dtype)

    return kernel


# ----------------------------- Pallas wrapper ------------------------------- #

def subpixel_conv_prelu(x_nhwc, w_oihw, bias, alpha, *, compute_dtype=None):
    """Conv3x3 (+bias) + PReLU; NHWC in / NHWC out with Cout = C*s^2 channels."""
    N, H, W, Cin = x_nhwc.shape
    Cout, Cin2, KH, KW = w_oihw.shape
    assert (Cin2, KH, KW) == (Cin, 3, 3)
    assert alpha.size == 1, "kernel assumes a single shared PReLU alpha (nn.PReLU() default)"

    cdt = jnp.dtype(compute_dtype) if compute_dtype is not None else jnp.dtype(x_nhwc.dtype)

    # Tap order t = (dh+1)*3 + (dw+1) must match the weight reshape below.
    taps = tuple((dh, dw) for dh in (-1, 0, 1) for dw in (-1, 0, 1))
    wt = jnp.transpose(w_oihw, (2, 3, 1, 0)).reshape(9, Cin, Cout).astype(cdt)
    b2 = bias.reshape(1, Cout).astype(jnp.float32)
    a1 = alpha.reshape(1).astype(jnp.float32)

    itemsize = jnp.dtype(x_nhwc.dtype).itemsize
    flops = 2 * N * H * W * 9 * Cin * Cout
    bytes_accessed = (x_nhwc.size * itemsize + wt.size * jnp.dtype(cdt).itemsize
                      + b2.size * 4 + N * H * W * Cout * itemsize)

    # TODO(synk): for N == 1 or very large H*W, add a row-tiled grid axis with
    # halo rows (double-buffered in-kernel DMA) so blocks fit VMEM and both
    # v7x TensorCores get work; at these sizes one image per step is optimal.
    return pl.pallas_call(
        _make_kernel(H, W, Cin, taps, cdt),
        out_shape=jax.ShapeDtypeStruct((N, H, W, Cout), x_nhwc.dtype),
        grid=(N,),
        in_specs=[
            pl.BlockSpec((1, H, W, Cin), lambda n: (n, 0, 0, 0)),    # image (auto-pipelined)
            pl.BlockSpec((9, Cin, Cout), lambda n: (0, 0, 0)),       # weights (constant map)
            pl.BlockSpec((1, Cout), lambda n: (0, 0)),               # bias
            pl.BlockSpec(memory_space=pltpu.MemorySpace.SMEM),       # PReLU alpha scalar
        ],
        out_specs=pl.BlockSpec((1, H, W, Cout), lambda n: (n, 0, 0, 0)),
        compiler_params=pltpu.CompilerParams(
            dimension_semantics=("parallel",),   # batch axis splits across v7x cores
            # vmem_limit_bytes intentionally omitted: footprint < 2 MiB.
        ),
        cost_estimate=pl.CostEstimate(
            flops=flops, transcendentals=0, bytes_accessed=int(bytes_accessed)),
    )(x_nhwc, wt, b2, a1)


# ----------------------------- Module forward ------------------------------- #

def subpixel_block_forward_nhwc(x_nhwc, params, *, scaling_factor=2, compute_dtype=None):
    """NHWC-native forward (preferred when stacking blocks: no NCHW transposes)."""
    r = scaling_factor
    N, H, W, C = x_nhwc.shape
    y = subpixel_conv_prelu(x_nhwc, params["w"], params["b"], params["prelu_a"],
                            compute_dtype=compute_dtype)
    # PixelShuffle in NHWC: out[n, h*r+i, w*r+j, c] = y[n, h, w, c*r*r + i*r + j]
    o = y.reshape(N, H, W, C, r, r)
    o = jnp.transpose(o, (0, 1, 4, 2, 5, 3))                 # (N, H, r, W, r, C)
    return o.reshape(N, H * r, W * r, C)


def subpixel_block_forward(x_nchw, params, *, scaling_factor=2, compute_dtype=None):
    """NCHW boundary (PyTorch parity). PixelShuffle + NHWC->NCHW fused into one transpose."""
    r = scaling_factor
    N, C, H, W = x_nchw.shape
    x = jnp.transpose(x_nchw, (0, 2, 3, 1))                  # NCHW -> NHWC
    y = subpixel_conv_prelu(x, params["w"], params["b"], params["prelu_a"],
                            compute_dtype=compute_dtype)
    # out[n, c, h*r+i, w*r+j] = y[n, h, w, c*r*r + i*r + j]
    o = y.reshape(N, H, W, C, r, r)
    o = jnp.transpose(o, (0, 3, 1, 4, 2, 5))                 # (N, C, H, r, W, r)
    return o.reshape(N, C, H * r, W * r)


# ----------------------------- Pure-JAX reference --------------------------- #

def ref_forward(x_nchw, params, r):
    y = jax.lax.conv_general_dilated(
        x_nchw, params["w"], window_strides=(1, 1), padding="SAME",
        dimension_numbers=("NCHW", "OIHW", "NCHW"))
    y = y + params["b"][None, :, None, None]
    N, Crr, H, W = y.shape
    C = Crr // (r * r)
    y = y.reshape(N, C, r, r, H, W)
    y = jnp.transpose(y, (0, 1, 4, 2, 5, 3)).reshape(N, C, H * r, W * r)
    return jnp.where(y >= 0, y, params["prelu_a"] * y)


# ---------------------------------- Main ------------------------------------ #

if __name__ == "__main__":
    N, C, H, W = 2, 64, 16, 16     # n_channels=64 (module default), small spatial
    r = 2                          # scaling_factor=2 (module default)
    K = 3
    Cout = C * r * r               # 256 output channels before pixel shuffle

    key = jax.random.PRNGKey(0)
    k_x, k_w, k_b = jax.random.split(key, 3)

    fan_in = C * K * K
    params = {
        "w": jax.random.normal(k_w, (Cout, C, K, K), jnp.float32) / jnp.sqrt(fan_in),
        "b": 0.01 * jax.random.normal(k_b, (Cout,), jnp.float32),
        "prelu_a": jnp.array(0.25, jnp.float32),   # PyTorch PReLU default
    }
    x = jax.random.normal(k_x, (N, C, H, W), jnp.float32)

    ref = jax.block_until_ready(ref_forward(x, params, r))

    # f32 path, NCHW boundary (PyTorch parity).
    out = jax.block_until_ready(subpixel_block_forward(x, params, scaling_factor=r))
    assert out.shape == (N, C, H * r, W * r)
    err = float(jnp.max(jnp.abs(out - ref)))
    assert jnp.allclose(out, ref, atol=2e-3, rtol=2e-3), f"f32 max abs err = {err}"

    # NHWC-native path (no NCHW boundary transposes when stacking blocks).
    out_nhwc = jax.block_until_ready(
        subpixel_block_forward_nhwc(jnp.transpose(x, (0, 2, 3, 1)), params, scaling_factor=r))
    err_nhwc = float(jnp.max(jnp.abs(jnp.transpose(out_nhwc, (0, 3, 1, 2)) - ref)))
    assert err_nhwc < 2e-3, f"NHWC max abs err = {err_nhwc}"

    # bf16 MXU path (f32 accumulation / activation math), looser tolerance.
    out_bf16 = jax.block_until_ready(
        subpixel_block_forward(x, params, scaling_factor=r, compute_dtype=jnp.bfloat16))
    err_bf16 = float(jnp.max(jnp.abs(out_bf16 - ref)))
    assert jnp.allclose(out_bf16, ref, atol=3e-2, rtol=3e-2), f"bf16 max abs err = {err_bf16}"

    print("KERNEL_OK")
</pallas_src>

<mosaic_0001>
module attributes {stable_mosaic.version = 11 : i64} {
  func.func @kernel(%arg0: i32, %arg1: memref<1x16x16x64xf32, #tpu.memory_space<vmem>>, %arg2: memref<9x64x256xf32, #tpu.memory_space<vmem>>, %arg3: memref<1x256xf32, #tpu.memory_space<vmem>>, %arg4: memref<1xf32, #tpu.memory_space<smem>>, %arg5: memref<1x16x16x256xf32, #tpu.memory_space<vmem>>) attributes {dimension_semantics = [#tpu.dimension_semantics<parallel>], iteration_bounds = array<i64: 2>, scalar_prefetch = 0 : i64, scratch_operands = 0 : i64, tpu.core_type = #tpu.core_type<tc>, window_params = [{transform_indices = @transform_0, window_bounds = array<i64: 1, 16, 16, 64>}, {pipeline_mode = #tpu.pipeline_mode<synchronous>, transform_indices = @transform_1, window_bounds = array<i64: 9, 64, 256>}, {pipeline_mode = #tpu.pipeline_mode<synchronous>, transform_indices = @transform_2, window_bounds = array<i64: 1, 256>}, {transform_indices = @transform_3, window_bounds = array<i64: 1>}, {transform_indices = @transform_4, window_bounds = array<i64: 1, 16, 16, 256>}]} {
    %c0 = arith.constant 0 : index
    %0 = memref.load %arg4[%c0] : memref<1xf32, #tpu.memory_space<smem>>
    %c0_0 = arith.constant 0 : index
    %c0_1 = arith.constant 0 : index
    %c0_2 = arith.constant 0 : index
    %c0_3 = arith.constant 0 : index
    %1 = vector.load %arg1[%c0_0, %c0_1, %c0_2, %c0_3] : memref<1x16x16x64xf32, #tpu.memory_space<vmem>>, vector<1x16x16x64xf32>
    %2 = vector.shape_cast %1 : vector<1x16x16x64xf32> to vector<16x16x64xf32>
    %3 = tpu.iota {dimensions = array<i32: 1>} : vector<1x16x1xi32>
    %c1_i32 = arith.constant 1 : i32
    %4 = tpu.dynamic_rotate %2 by %c1_i32 dim 1 : vector<16x16x64xf32>, i32 -> vector<16x16x64xf32>
    %c-1_i32 = arith.constant -1 : i32
    %5 = vector.broadcast %c-1_i32 : i32 to vector<1x16x1xi32>
    %6 = arith.addi %3, %5 : vector<1x16x1xi32>
    %c0_i32 = arith.constant 0 : i32
    %7 = vector.broadcast %c0_i32 : i32 to vector<1x16x1xi32>
    %8 = arith.cmpi sge, %6, %7 : vector<1x16x1xi32>
    %c-1_i32_4 = arith.constant -1 : i32
    %9 = vector.broadcast %c-1_i32_4 : i32 to vector<1x16x1xi32>
    %10 = arith.addi %3, %9 : vector<1x16x1xi32>
    %c16_i32 = arith.constant 16 : i32
    %11 = vector.broadcast %c16_i32 : i32 to vector<1x16x1xi32>
    %12 = arith.cmpi slt, %10, %11 : vector<1x16x1xi32>
    %13 = arith.andi %8, %12 : vector<1x16x1xi1>
    %cst = arith.constant 0.000000e+00 : f32
    %14 = vector.shape_cast %13 : vector<1x16x1xi1> to vector<1x16x1xi1>
    %15 = vector.broadcast %14 : vector<1x16x1xi1> to vector<16x16x64xi1>
    %16 = vector.broadcast %cst : f32 to vector<16x16x64xf32>
    %17 = arith.select %15, %4, %16 : vector<16x16x64xi1>, vector<16x16x64xf32>
    %c15_i32 = arith.constant 15 : i32
    %18 = tpu.dynamic_rotate %2 by %c15_i32 dim 1 : vector<16x16x64xf32>, i32 -> vector<16x16x64xf32>
    %c1_i32_5 = arith.constant 1 : i32
    %19 = vector.broadcast %c1_i32_5 : i32 to vector<1x16x1xi32>
    %20 = arith.addi %3, %19 : vector<1x16x1xi32>
    %c0_i32_6 = arith.constant 0 : i32
    %21 = vector.broadcast %c0_i32_6 : i32 to vector<1x16x1xi32>
    %22 = arith.cmpi sge, %20, %21 : vector<1x16x1xi32>
    %c1_i32_7 = arith.constant 1 : i32
    %23 = vector.broadcast %c1_i32_7 : i32 to vector<1x16x1xi32>
    %24 = arith.addi %3, %23 : vector<1x16x1xi32>
    %c16_i32_8 = arith.constant 16 : i32
    %25 = vector.broadcast %c16_i32_8 : i32 to vector<1x16x1xi32>
    %26 = arith.cmpi slt, %24, %25 : vector<1x16x1xi32>
    %27 = arith.andi %22, %26 : vector<1x16x1xi1>
    %cst_9 = arith.constant 0.000000e+00 : f32
    %28 = vector.shape_cast %27 : vector<1x16x1xi1> to vector<1x16x1xi1>
    %29 = vector.broadcast %28 : vector<1x16x1xi1> to vector<16x16x64xi1>
    %30 = vector.broadcast %cst_9 : f32 to vector<16x16x64xf32>
    %31 = arith.select %29, %18, %30 : vector<16x16x64xi1>, vector<16x16x64xf32>
    %cst_10 = arith.constant 0.000000e+00 : f32
    %32 = vector.broadcast %cst_10 : f32 to vector<1x16x64xf32>
    %33 = vector.extract_strided_slice %17 {offsets = [0, 0, 0], sizes = [15, 16, 64], strides = [1, 1, 1]} : vector<16x16x64xf32> to vector<15x16x64xf32>
    %34 = tpu.concatenate %32, %33 in 0 : vector<1x16x64xf32>, vector<15x16x64xf32> -> vector<16x16x64xf32>
    %c0_11 = arith.constant 0 : index
    %c0_12 = arith.constant 0 : index
    %c0_13 = arith.constant 0 : index
    %35 = vector.load %arg2[%c0_11, %c0_12, %c0_13] : memref<9x64x256xf32, #tpu.memory_space<vmem>>, vector<1x64x256xf32>
    %36 = vector.shape_cast %35 : vector<1x64x256xf32> to vector<64x256xf32>
    "tpu.trace_start"() <{level = 10 : i32, message = "hwc,cd->hwd"}> : () -> ()
    %cst_14 = arith.constant dense<0.000000e+00> : vector<16x16x256xf32>
    %37 = tpu.matmul %34, %36, %cst_14 {dimension_numbers = #tpu.dot_dimension_numbers<[2], [0], [0, 1], [1], [0, 0, 0, 1, 1, 1], [], []>} : vector<16x16x64xf32>, vector<64x256xf32>, vector<16x16x256xf32> -> vector<16x16x256xf32>
    "tpu.trace_stop"() : () -> ()
    %38 = vector.extract_strided_slice %2 {offsets = [0, 0, 0], sizes = [15, 16, 64], strides = [1, 1, 1]} : vector<16x16x64xf32> to vector<15x16x64xf32>
    %39 = tpu.concatenate %32, %38 in 0 : vector<1x16x64xf32>, vector<15x16x64xf32> -> vector<16x16x64xf32>
    %c1 = arith.constant 1 : index
    %c0_15 = arith.constant 0 : index
    %c0_16 = arith.constant 0 : index
    %40 = vector.load %arg2[%c1, %c0_15, %c0_16] : memref<9x64x256xf32, #tpu.memory_space<vmem>>, vector<1x64x256xf32>
    %41 = vector.shape_cast %40 : vector<1x64x256xf32> to vector<64x256xf32>
    "tpu.trace_start"() <{level = 10 : i32, message = "hwc,cd->hwd"}> : () -> ()
    %cst_17 = arith.constant dense<0.000000e+00> : vector<16x16x256xf32>
    %42 = tpu.matmul %39, %41, %cst_17 {dimension_numbers = #tpu.dot_dimension_numbers<[2], [0], [0, 1], [1], [0, 0, 0, 1, 1, 1], [], []>} : vector<16x16x64xf32>, vector<64x256xf32>, vector<16x16x256xf32> -> vector<16x16x256xf32>
    "tpu.trace_stop"() : () -> ()
    %43 = arith.addf %37, %42 : vector<16x16x256xf32>
    %44 = vector.extract_strided_slice %31 {offsets = [0, 0, 0], sizes = [15, 16, 64], strides = [1, 1, 1]} : vector<16x16x64xf32> to vector<15x16x64xf32>
    %45 = tpu.concatenate %32, %44 in 0 : vector<1x16x64xf32>, vector<15x16x64xf32> -> vector<16x16x64xf32>
    %c2 = arith.constant 2 : index
    %c0_18 = arith.constant 0 : index
    %c0_19 = arith.constant 0 : index
    %46 = vector.load %arg2[%c2, %c0_18, %c0_19] : memref<9x64x256xf32, #tpu.memory_space<vmem>>, vector<1x64x256xf32>
    %47 = vector.shape_cast %46 : vector<1x64x256xf32> to vector<64x256xf32>
    "tpu.trace_start"() <{level = 10 : i32, message = "hwc,cd->hwd"}> : () -> ()
    %cst_20 = arith.constant dense<0.000000e+00> : vector<16x16x256xf32>
    %48 = tpu.matmul %45, %47, %cst_20 {dimension_numbers = #tpu.dot_dimension_numbers<[2], [0], [0, 1], [1], [0, 0, 0, 1, 1, 1], [], []>} : vector<16x16x64xf32>, vector<64x256xf32>, vector<16x16x256xf32> -> vector<16x16x256xf32>
    "tpu.trace_stop"() : () -> ()
    %49 = arith.addf %43, %48 : vector<16x16x256xf32>
    %c3 = arith.constant 3 : index
    %c0_21 = arith.constant 0 : index
    %c0_22 = arith.constant 0 : index
    %50 = vector.load %arg2[%c3, %c0_21, %c0_22] : memref<9x64x256xf32, #tpu.memory_space<vmem>>, vector<1x64x256xf32>
    %51 = vector.shape_cast %50 : vector<1x64x256xf32> to vector<64x256xf32>
    "tpu.trace_start"() <{level = 10 : i32, message = "hwc,cd->hwd"}> : () -> ()
    %cst_23 = arith.constant dense<0.000000e+00> : vector<16x16x256xf32>
    %52 = tpu.matmul %17, %51, %cst_23 {dimension_numbers = #tpu.dot_dimension_numbers<[2], [0], [0, 1], [1], [0, 0, 0, 1, 1, 1], [], []>} : vector<16x16x64xf32>, vector<64x256xf32>, vector<16x16x256xf32> -> vector<16x16x256xf32>
    "tpu.trace_stop"() : () -> ()
    %53 = arith.addf %49, %52 : vector<16x16x256xf32>
    %c4 = arith.constant 4 : index
    %c0_24 = arith.constant 0 : index
    %c0_25 = arith.constant 0 : index
    %54 = vector.load %arg2[%c4, %c0_24, %c0_25] : memref<9x64x256xf32, #tpu.memory_space<vmem>>, vector<1x64x256xf32>
    %55 = vector.shape_cast %54 : vector<1x64x256xf32> to vector<64x256xf32>
    "tpu.trace_start"() <{level = 10 : i32, message = "hwc,cd->hwd"}> : () -> ()
    %cst_26 = arith.constant dense<0.000000e+00> : vector<16x16x256xf32>
    %56 = tpu.matmul %2, %55, %cst_26 {dimension_numbers = #tpu.dot_dimension_numbers<[2], [0], [0, 1], [1], [0, 0, 0, 1, 1, 1], [], []>} : vector<16x16x64xf32>, vector<64x256xf32>, vector<16x16x256xf32> -> vector<16x16x256xf32>
    "tpu.trace_stop"() : () -> ()
    %57 = arith.addf %53, %56 : vector<16x16x256xf32>
    %c5 = arith.constant 5 : index
    %c0_27 = arith.constant 0 : index
    %c0_28 = arith.constant 0 : index
    %58 = vector.load %arg2[%c5, %c0_27, %c0_28] : memref<9x64x256xf32, #tpu.memory_space<vmem>>, vector<1x64x256xf32>
    %59 = vector.shape_cast %58 : vector<1x64x256xf32> to vector<64x256xf32>
    "tpu.trace_start"() <{level = 10 : i32, message = "hwc,cd->hwd"}> : () -> ()
    %cst_29 = arith.constant dense<0.000000e+00> : vector<16x16x256xf32>
    %60 = tpu.matmul %31, %59, %cst_29 {dimension_numbers = #tpu.dot_dimension_numbers<[2], [0], [0, 1], [1], [0, 0, 0, 1, 1, 1], [], []>} : vector<16x16x64xf32>, vector<64x256xf32>, vector<16x16x256xf32> -> vector<16x16x256xf32>
    "tpu.trace_stop"() : () -> ()
    %61 = arith.addf %57, %60 : vector<16x16x256xf32>
    %62 = vector.extract_strided_slice %17 {offsets = [1, 0, 0], sizes = [15, 16, 64], strides = [1, 1, 1]} : vector<16x16x64xf32> to vector<15x16x64xf32>
    %63 = tpu.concatenate %62, %32 in 0 : vector<15x16x64xf32>, vector<1x16x64xf32> -> vector<16x16x64xf32>
    %c6 = arith.constant 6 : index
    %c0_30 = arith.constant 0 : index
    %c0_31 = arith.constant 0 : index
    %64 = vector.load %arg2[%c6, %c0_30, %c0_31] : memref<9x64x256xf32, #tpu.memory_space<vmem>>, vector<1x64x256xf32>
    %65 = vector.shape_cast %64 : vector<1x64x256xf32> to vector<64x256xf32>
    "tpu.trace_start"() <{level = 10 : i32, message = "hwc,cd->hwd"}> : () -> ()
    %cst_32 = arith.constant dense<0.000000e+00> : vector<16x16x256xf32>
    %66 = tpu.matmul %63, %65, %cst_32 {dimension_numbers = #tpu.dot_dimension_numbers<[2], [0], [0, 1], [1], [0, 0, 0, 1, 1, 1], [], []>} : vector<16x16x64xf32>, vector<64x256xf32>, vector<16x16x256xf32> -> vector<16x16x256xf32>
    "tpu.trace_stop"() : () -> ()
    %67 = arith.addf %61, %66 : vector<16x16x256xf32>
    %68 = vector.extract_strided_slice %2 {offsets = [1, 0, 0], sizes = [15, 16, 64], strides = [1, 1, 1]} : vector<16x16x64xf32> to vector<15x16x64xf32>
    %69 = tpu.concatenate %68, %32 in 0 : vector<15x16x64xf32>, vector<1x16x64xf32> -> vector<16x16x64xf32>
    %c7 = arith.constant 7 : index
    %c0_33 = arith.constant 0 : index
    %c0_34 = arith.constant 0 : index
    %70 = vector.load %arg2[%c7, %c0_33, %c0_34] : memref<9x64x256xf32, #tpu.memory_space<vmem>>, vector<1x64x256xf32>
    %71 = vector.shape_cast %70 : vector<1x64x256xf32> to vector<64x256xf32>
    "tpu.trace_start"() <{level = 10 : i32, message = "hwc,cd->hwd"}> : () -> ()
    %cst_35 = arith.constant dense<0.000000e+00> : vector<16x16x256xf32>
    %72 = tpu.matmul %69, %71, %cst_35 {dimension_numbers = #tpu.dot_dimension_numbers<[2], [0], [0, 1], [1], [0, 0, 0, 1, 1, 1], [], []>} : vector<16x16x64xf32>, vector<64x256xf32>, vector<16x16x256xf32> -> vector<16x16x256xf32>
    "tpu.trace_stop"() : () -> ()
    %73 = arith.addf %67, %72 : vector<16x16x256xf32>
    %74 = vector.extract_strided_slice %31 {offsets = [1, 0, 0], sizes = [15, 16, 64], strides = [1, 1, 1]} : vector<16x16x64xf32> to vector<15x16x64xf32>
    %75 = tpu.concatenate %74, %32 in 0 : vector<15x16x64xf32>, vector<1x16x64xf32> -> vector<16x16x64xf32>
    %c8 = arith.constant 8 : index
    %c0_36 = arith.constant 0 : index
    %c0_37 = arith.constant 0 : index
    %76 = vector.load %arg2[%c8, %c0_36, %c0_37] : memref<9x64x256xf32, #tpu.memory_space<vmem>>, vector<1x64x256xf32>
    %77 = vector.shape_cast %76 : vector<1x64x256xf32> to vector<64x256xf32>
    "tpu.trace_start"() <{level = 10 : i32, message = "hwc,cd->hwd"}> : () -> ()
    %cst_38 = arith.constant dense<0.000000e+00> : vector<16x16x256xf32>
    %78 = tpu.matmul %75, %77, %cst_38 {dimension_numbers = #tpu.dot_dimension_numbers<[2], [0], [0, 1], [1], [0, 0, 0, 1, 1, 1], [], []>} : vector<16x16x64xf32>, vector<64x256xf32>, vector<16x16x256xf32> -> vector<16x16x256xf32>
    "tpu.trace_stop"() : () -> ()
    %79 = arith.addf %73, %78 : vector<16x16x256xf32>
    %c0_39 = arith.constant 0 : index
    %c0_40 = arith.constant 0 : index
    %80 = vector.load %arg3[%c0_39, %c0_40] : memref<1x256xf32, #tpu.memory_space<vmem>>, vector<1x256xf32>
    %81 = vector.shape_cast %80 : vector<1x256xf32> to vector<256xf32>
    %82 = vector.shape_cast %81 : vector<256xf32> to vector<1x1x256xf32>
    %83 = vector.broadcast %82 : vector<1x1x256xf32> to vector<16x16x256xf32>
    %84 = arith.addf %79, %83 : vector<16x16x256xf32>
    %cst_41 = arith.constant 0.000000e+00 : f32
    %85 = vector.broadcast %cst_41 : f32 to vector<16x16x256xf32>
    %86 = arith.cmpf oge, %84, %85 : vector<16x16x256xf32>
    %87 = vector.broadcast %0 : f32 to vector<16x16x256xf32>
    %88 = arith.mulf %87, %84 : vector<16x16x256xf32>
    %89 = arith.select %86, %84, %88 : vector<16x16x256xi1>, vector<16x16x256xf32>
    %90 = vector.shape_cast %89 : vector<16x16x256xf32> to vector<1x16x16x256xf32>
    %c0_42 = arith.constant 0 : index
    %c0_43 = arith.constant 0 : index
    %c0_44 = arith.constant 0 : index
    %c0_45 = arith.constant 0 : index
    %91 = vector.load %arg5[%c0_42, %c0_43, %c0_44, %c0_45] : memref<1x16x16x256xf32, #tpu.memory_space<vmem>>, vector<1x16x16x256xf32>
    tpu.vector_store %arg5[%c0_42, %c0_43, %c0_44, %c0_45], %90 {strides = array<i32>} : memref<1x16x16x256xf32, #tpu.memory_space<vmem>>, vector<1x16x16x256xf32>,
    return
  }
  func.func @transform_0(%arg0: i32) -> (i32, i32, i32, i32) {
    %c0_i32 = arith.constant 0 : i32
    %c0_i32_0 = arith.constant 0 : i32
    %c0_i32_1 = arith.constant 0 : i32
    %c0_i32_2 = arith.constant 0 : i32
    return %arg0, %c0_i32, %c0_i32_0, %c0_i32_1 : i32, i32, i32, i32
  }
  func.func @transform_1(%arg0: i32) -> (i32, i32, i32) {
    %c0_i32 = arith.constant 0 : i32
    %c0_i32_0 = arith.constant 0 : i32
    %c0_i32_1 = arith.constant 0 : i32
    %c0_i32_2 = arith.constant 0 : i32
    return %c0_i32, %c0_i32_0, %c0_i32_1 : i32, i32, i32
  }
  func.func @transform_2(%arg0: i32) -> (i32, i32) {
    %c0_i32 = arith.constant 0 : i32
    %c0_i32_0 = arith.constant 0 : i32
    %c0_i32_1 = arith.constant 0 : i32
    return %c0_i32, %c0_i32_0 : i32, i32
  }
  func.func @transform_3(%arg0: i32) -> i32 {
    %c0_i32 = arith.constant 0 : i32
    %c0_i32_0 = arith.constant 0 : i32
    return %c0_i32 : i32
  }
  func.func @transform_4(%arg0: i32) -> (i32, i32, i32, i32) {
    %c0_i32 = arith.constant 0 : i32
    %c0_i32_0 = arith.constant 0 : i32
    %c0_i32_1 = arith.constant 0 : i32
    %c0_i32_2 = arith.constant 0 : i32
    return %arg0, %c0_i32, %c0_i32_0, %c0_i32_1 : i32, i32, i32, i32
  }
}

</mosaic_0001>

<llo_original>
// kernel: tpu_custom_call.1
$region0: #{tpu_custom_call.1}
  #allocation0 [shape = 'u32[]', space=smem, size = 0x4, offset = 0x4, fixed_abs, tag = 'smem constant byte address 0x4 - core index']
  #allocation1 [shape = 'u32[144,128]{1,0:T(1,128)}', space=vmem, size = 0x12000, scoped, tag = 'internal scratch']
  #allocation2 [shape = 'f32[1]{0:T(128)S(6)}', space=smem, size = 0x200, scoped, tag = 'scoped memory for tpu_custom_call.1']
  %s0 = inlined_call_operand.hbm [shape: f32[2,16,16,64], index: 0, kind: input, shape index: {}]
  %s1 = inlined_call_operand.hbm [shape: f32[9,64,256], index: 1, kind: input, shape index: {}]
  %s2 = inlined_call_operand.vmem [shape: f32[1,256], index: 2, kind: input, shape index: {}]
  %s3 = inlined_call_operand.<no memory space> [shape: f32[1], index: 3, kind: input, shape index: {}]
  %s4 = inlined_call_operand.hbm [shape: f32[2,16,16,256], index: 4, kind: output, shape index: {}]
  %s5 = sld [smem:[#allocation0]]
  $region57: #{tpu_custom_call.1} parent=0
    _
  %s7 = ssub.s32 1, %s5
  %s8 = scalar_select 0, %s7, %s5
  %9 = sst [smem:[#allocation2]] %s3
  $region1: #{tpu_custom_call.1} parent=0
    #allocation3 [shape = 'u8[262144]{0}', space=vmem, size = 0x40000, scoped, tag = 'input window, operand 0']
    #allocation4 [shape = 's32[2]{0}', space=sflag, size = 0x8, scoped, tag = 'scoped memory for tpu_custom_call.1']
    #allocation5 [shape = 's32[2]{0}', space=sflag, size = 0x8, scoped, tag = 'scoped memory for tpu_custom_call.1']
    #allocation6 [shape = 'u8[589824]{0}', space=vmem, size = 0x90000, scoped, tag = 'input window, operand 1, single buffered']
    #allocation7 [shape = 's32[1]{0}', space=sflag, size = 0x4, scoped, tag = 'scoped memory for tpu_custom_call.1']
    #allocation8 [shape = 'u8[524288]{0}', space=vmem, size = 0x80000, scoped, tag = 'output window, operand 0']
    %10 = vsyncpa [#allocation4], 0
    %s11 = scalar_lea.sflag [#allocation4], 1
    %12 = vsyncpa %s11, 0
    %13 = vsyncpa [#allocation7], 0
    %14 = vsyncpa [#allocation5], 0
    %s15 = scalar_lea.sflag [#allocation5], 1
    %16 = vsyncpa %s15, 0
    loop: start=0, step=1, limit=4
    $region2: #{tpu_custom_call.1} parent=1 // loop_pre_header
      _
    $region3: #{tpu_custom_call.1} parent=1 // loop_header
      %s18 = sphi 0, %s22
      %p19 = scmp.ge.s32.totalorder %s18, 4
      %s28 = sphi 0, %s30
      %s31 = sphi 0, %s28
      %s32 = sphi 0, %s31
      %s48 = sphi 0, %s32
      %s52 = sphi 0, %s52
      %s54 = sphi 0, %s52
      %s55 = sphi 0, %s54
      %s69 = sphi 0, %s55
      %s73 = sphi 0, %s73
      %s75 = sphi 0, %s73
      %s76 = sphi 0, %s75
      %s90 = sphi 0, %s76
      %s94 = sphi 0, %s94
      %s96 = sphi 0, %s94
      %s97 = sphi 0, %s96
      %s111 = sphi 0, %s97
      %s117 = sphi 0, %s119
      %s120 = sphi 0, %s117
      %s121 = sphi 0, %s120
      %s137 = sphi 0, %s121
    $region4: #{tpu_custom_call.1} parent=1 // loop_header_branch
      %21 = sbr.rel (%p19) target = $region8
    $region5: #{tpu_custom_call.1} parent=1 // loop_body
      %s23 = ssub.s32 %s18, 1
      %s24 = ssub.s32 %s18, 2
      %s25 = sadd.s32 %s18, 1
      %s26 = ssub.s32 %s18, %s25
      %p27 = scmp.eq.s32.totalorder %s26, 0
      %s29 = sadd.s32 %s28, 1
      %s30 = scalar_select %p27, %s28, %s29
      %p33 = pneg %p27
      %p34 = scmp.eq.s32.totalorder %s18, 1
      %p35 = por %p33, %p34
      %p36 = scmp.ne.s32.totalorder %s28, %s31
      %p37 = scmp.eq.s32.totalorder %s18, 0
      %p38 = por %p36, %p37
      %p39 = scmp.ne.s32.totalorder %s28, %s31
      %p40 = scmp.eq.s32.totalorder %s23, 1
      %p41 = por %p39, %p40
      %p42 = scmp.ne.s32.totalorder %s31, %s32
      %p43 = scmp.eq.s32.totalorder %s23, 0
      %p44 = por %p42, %p43
      %p45 = scmp.ne.s32.totalorder %s31, %s32
      %p46 = scmp.eq.s32.totalorder %s24, 1
      %p47 = por %p45, %p46
      %p49 = scmp.ne.s32.totalorder %s32, %s48
      %p50 = scmp.eq.s32.totalorder %s24, 0
      %p51 = por %p49, %p50
      %s53 = sadd.s32 %s52, 1
      %p56 = scmp.eq.s32.totalorder %s18, 1
      %p57 = scmp.ne.s32.totalorder %s52, %s54
      %p58 = scmp.eq.s32.totalorder %s18, 0
      %p59 = por %p57, %p58
      %p60 = scmp.ne.s32.totalorder %s52, %s54
      %p61 = scmp.eq.s32.totalorder %s23, 1
      %p62 = por %p60, %p61
      %p63 = scmp.ne.s32.totalorder %s54, %s55
      %p64 = scmp.eq.s32.totalorder %s23, 0
      %p65 = por %p63, %p64
      %p66 = scmp.ne.s32.totalorder %s54, %s55
      %p67 = scmp.eq.s32.totalorder %s24, 1
      %p68 = por %p66, %p67
      %p70 = scmp.ne.s32.totalorder %s55, %s69
      %p71 = scmp.eq.s32.totalorder %s24, 0
      %p72 = por %p70, %p71
      %s74 = sadd.s32 %s73, 1
      %p77 = scmp.eq.s32.totalorder %s18, 1
      %p78 = scmp.ne.s32.totalorder %s73, %s75
      %p79 = scmp.eq.s32.totalorder %s18, 0
      %p80 = por %p78, %p79
      %p81 = scmp.ne.s32.totalorder %s73, %s75
      %p82 = scmp.eq.s32.totalorder %s23, 1
      %p83 = por %p81, %p82
      %p84 = scmp.ne.s32.totalorder %s75, %s76
      %p85 = scmp.eq.s32.totalorder %s23, 0
      %p86 = por %p84, %p85
      %p87 = scmp.ne.s32.totalorder %s75, %s76
      %p88 = scmp.eq.s32.totalorder %s24, 1
      %p89 = por %p87, %p88
      %p91 = scmp.ne.s32.totalorder %s76, %s90
      %p92 = scmp.eq.s32.totalorder %s24, 0
      %p93 = por %p91, %p92
      %s95 = sadd.s32 %s94, 1
      %p98 = scmp.eq.s32.totalorder %s18, 1
      %p99 = scmp.ne.s32.totalorder %s94, %s96
      %p100 = scmp.eq.s32.totalorder %s18, 0
      %p101 = por %p99, %p100
      %p102 = scmp.ne.s32.totalorder %s94, %s96
      %p103 = scmp.eq.s32.totalorder %s23, 1
      %p104 = por %p102, %p103
      %p105 = scmp.ne.s32.totalorder %s96, %s97
      %p106 = scmp.eq.s32.totalorder %s23, 0
      %p107 = por %p105, %p106
      %p108 = scmp.ne.s32.totalorder %s96, %s97
      %p109 = scmp.eq.s32.totalorder %s24, 1
      %p110 = por %p108, %p109
      %p112 = scmp.ne.s32.totalorder %s97, %s111
      %p113 = scmp.eq.s32.totalorder %s24, 0
      %p114 = por %p112, %p113
      %s115 = ssub.s32 %s18, %s25
      %p116 = scmp.eq.s32.totalorder %s115, 0
      %s118 = sadd.s32 %s117, 1
      %s119 = scalar_select %p116, %s117, %s118
      %p122 = pneg %p116
      %p123 = scmp.eq.s32.totalorder %s18, 1
      %p124 = por %p122, %p123
      %p125 = scmp.ne.s32.totalorder %s117, %s120
      %p126 = scmp.eq.s32.totalorder %s18, 0
      %p127 = por %p125, %p126
      %p128 = scmp.ne.s32.totalorder %s117, %s120
      %p129 = scmp.eq.s32.totalorder %s23, 1
      %p130 = por %p128, %p129
      %p131 = scmp.ne.s32.totalorder %s120, %s121
      %p132 = scmp.eq.s32.totalorder %s23, 0
      %p133 = por %p131, %p132
      %p134 = scmp.ne.s32.totalorder %s120, %s121
      %p135 = scmp.eq.s32.totalorder %s24, 1
      %p136 = por %p134, %p135
      %p138 = scmp.ne.s32.totalorder %s121, %s137
      %p139 = scmp.eq.s32.totalorder %s24, 0
      %p140 = por %p138, %p139
      %p141 = scmp.le.s32.totalorder 1, %s18
      %p142 = scmp.lt.s32.totalorder %s18, 3
      %p143 = pnand %p141, %p142
      %p144 = pneg %p143
      // Predicated region
      $region9: #{tpu_custom_call.1} parent=5 // pred_check
        _
      $region10: #{tpu_custom_call.1} parent=5 // pred_check_branch
        %146 = sbr.rel (%p143) target = $region12
      $region11: #{tpu_custom_call.1} parent=5 // pred_region
        %s147 = ssub.s32 %s18, 1
        // Predicated region
        $region13: #{tpu_custom_call.1} parent=11 // pred_check
          %p148 = pneg %p65
        $region14: #{tpu_custom_call.1} parent=11 // pred_check_branch
          %150 = sbr.rel (%p148) target = $region16
        $region15: #{tpu_custom_call.1} parent=11 // pred_region
          %s152 = ssub.s32 18432, 18432
          %153 = vsyncadd [#allocation7], %s152
          %s154 = sshll.u32 [#allocation6], 4
          %s155 = int_to_ptr.vmem [resolvable:$true] %s154
          %160 = dma.hbm_to_vmem [thread:$0]  %s1, 18432, %s155, [#allocation7], 256, 256, 16
        $region16: #{tpu_custom_call.1} parent=11 // pred_fallthru
          _
        // Predicated region
        $region17: #{tpu_custom_call.1} parent=11 // pred_check
          %p161 = pneg %p86
        $region18: #{tpu_custom_call.1} parent=11 // pred_check_branch
          %163 = sbr.rel (%p161) target = $region20
        $region19: #{tpu_custom_call.1} parent=11 // pred_region
          _
        $region20: #{tpu_custom_call.1} parent=11 // pred_fallthru
          _
        // Predicated region
        $region21: #{tpu_custom_call.1} parent=11 // pred_check
          %p164 = pneg %p107
        $region22: #{tpu_custom_call.1} parent=11 // pred_check_branch
          %166 = sbr.rel (%p164) target = $region24
        $region23: #{tpu_custom_call.1} parent=11 // pred_region
          _
        $region24: #{tpu_custom_call.1} parent=11 // pred_fallthru
          _
      $region12: #{tpu_custom_call.1} parent=5 // pred_fallthru
        _
      %p167 = scmp.lt.s32.totalorder %s18, 2
      // Predicated region
      $region25: #{tpu_custom_call.1} parent=5 // pred_check
        %p168 = pneg %p167
      $region26: #{tpu_custom_call.1} parent=5 // pred_check_branch
        %170 = sbr.rel (%p168) target = $region28
      $region27: #{tpu_custom_call.1} parent=5 // pred_region
        // Predicated region
        $region29: #{tpu_custom_call.1} parent=27 // pred_check
          %p171 = pneg %p38
        $region30: #{tpu_custom_call.1} parent=27 // pred_check_branch
          %173 = sbr.rel (%p171) target = $region32
        $region31: #{tpu_custom_call.1} parent=27 // pred_region
          %s174 = sand.u32 %s28, 1
          %s175 = scalar_lea.sflag [#allocation4], %s174
          %s176 = sand.u32 %s28, 1
          %s177 = smul.addr %s176, 256
          %s178 = scalar_lea.vmem [#allocation3], %s177
          %s180 = ssub.s32 4096, 4096
          %181 = vsyncadd %s175, %s180
          %s182 = smul.addr %s18, 32
          %s183 = smul.addr %s182, 128
          %s184 = scalar_lea.hbm %s0, %s183
          %s185 = sshll.u32 %s178, 4
          %s186 = int_to_ptr.vmem [resolvable:$true] %s185
          %191 = dma.hbm_to_vmem [thread:$0]  %s184, 4096, %s186, %s175, 128, 128, 8
        $region32: #{tpu_custom_call.1} parent=27 // pred_fallthru
          _
      $region28: #{tpu_custom_call.1} parent=5 // pred_fallthru
        _
      %p192 = scmp.le.s32.totalorder 1, %s18
      %p193 = scmp.lt.s32.totalorder %s18, 3
      %p194 = pnand %p192, %p193
      %p195 = pneg %p194
      // Predicated region
      $region33: #{tpu_custom_call.1} parent=5 // pred_check
        _
      $region34: #{tpu_custom_call.1} parent=5 // pred_check_branch
        %197 = sbr.rel (%p194) target = $region36
      $region35: #{tpu_custom_call.1} parent=5 // pred_region
        %s198 = ssub.s32 %s18, 1
        %s199 = sand.u32 %s31, 1
        %s200 = scalar_lea.sflag [#allocation4], %s199
        %s201 = sand.u32 %s31, 1
        %s202 = smul.addr %s201, 256
        %s203 = scalar_lea.vmem [#allocation3], %s202
        // Predicated region
        $region37: #{tpu_custom_call.1} parent=35 // pred_check
          %p204 = pneg %p44
        $region38: #{tpu_custom_call.1} parent=35 // pred_check_branch
          %206 = sbr.rel (%p204) target = $region40
        $region39: #{tpu_custom_call.1} parent=35 // pred_region
          %207 = dma.done %s200, 4096
        $region40: #{tpu_custom_call.1} parent=35 // pred_fallthru
          _
        // Predicated region
        $region41: #{tpu_custom_call.1} parent=35 // pred_check
          %p208 = pneg %p65
        $region42: #{tpu_custom_call.1} parent=35 // pred_check_branch
          %210 = sbr.rel (%p208) target = $region44
        $region43: #{tpu_custom_call.1} parent=35 // pred_region
          %211 = dma.done [#allocation7], 18432
        $region44: #{tpu_custom_call.1} parent=35 // pred_fallthru
          _
        %s212 = sand.u32 %s31, 1
        %s213 = scalar_lea.sflag [#allocation4], %s212
        %s214 = sand.u32 %s31, 1
        %s215 = smul.addr %s214, 256
        %s216 = scalar_lea.vmem [#allocation3], %s215
        %p217 = pneg %p44
        %p218 = pneg %p41
        %p219 = pneg %p65
        %p220 = pneg %p62
        %p221 = pneg %p86
        %p222 = pneg %p83
        %p223 = pneg %p107
        %p224 = pneg %p104
        %p225 = pneg %p133
        %p226 = pneg %p130
        %s227 = sand.u32 %s120, 1
        %s228 = scalar_lea.sflag [#allocation5], %s227
        %s229 = sand.u32 %s120, 1
        %s230 = smul.addr %s229, 512
        %s231 = scalar_lea.vmem [#allocation8], %s230
        %s232 = sld [smem:[#allocation2]]
        %v233 = vld [vmem:[%s203] sm:$0xff]
        %v234 = vld [vmem:[%s203 + $0x8] sm:$0xff]
        %v235 = vld [vmem:[%s203 + $0x10] sm:$0xff]
        %v236 = vld [vmem:[%s203 + $0x18] sm:$0xff]
        %v237 = vld [vmem:[%s203 + $0x20] sm:$0xff]
        %v238 = vld [vmem:[%s203 + $0x28] sm:$0xff]
        %v239 = vld [vmem:[%s203 + $0x30] sm:$0xff]
        %v240 = vld [vmem:[%s203 + $0x38] sm:$0xff]
        %v241 = vld [vmem:[%s203 + $0x40] sm:$0xff]
        %v242 = vld [vmem:[%s203 + $0x48] sm:$0xff]
        %v243 = vld [vmem:[%s203 + $0x50] sm:$0xff]
        %v244 = vld [vmem:[%s203 + $0x58] sm:$0xff]
        %v245 = vld [vmem:[%s203 + $0x60] sm:$0xff]
        %v246 = vld [vmem:[%s203 + $0x68] sm:$0xff]
        %v247 = vld [vmem:[%s203 + $0x70] sm:$0xff]
        %v248 = vld [vmem:[%s203 + $0x78] sm:$0xff]
        %v249 = vld [vmem:[%s203 + $0x80] sm:$0xff]
        %v250 = vld [vmem:[%s203 + $0x88] sm:$0xff]
        %v251 = vld [vmem:[%s203 + $0x90] sm:$0xff]
        %v252 = vld [vmem:[%s203 + $0x98] sm:$0xff]
        %v253 = vld [vmem:[%s203 + $0xa0] sm:$0xff]
        %v254 = vld [vmem:[%s203 + $0xa8] sm:$0xff]
        %v255 = vld [vmem:[%s203 + $0xb0] sm:$0xff]
        %v256 = vld [vmem:[%s203 + $0xb8] sm:$0xff]
        %v257 = vld [vmem:[%s203 + $0xc0] sm:$0xff]
        %v258 = vld [vmem:[%s203 + $0xc8] sm:$0xff]
        %v259 = vld [vmem:[%s203 + $0xd0] sm:$0xff]
        %v260 = vld [vmem:[%s203 + $0xd8] sm:$0xff]
        %v261 = vld [vmem:[%s203 + $0xe0] sm:$0xff]
        %v262 = vld [vmem:[%s203 + $0xe8] sm:$0xff]
        %v263 = vld [vmem:[%s203 + $0xf0] sm:$0xff]
        %v264 = vld [vmem:[%s203 + $0xf8] sm:$0xff]
        %v265 = vlaneseq
        %v266 = vshrl.u32 %v265, 7
        %v267 = vadd.s32 %v266, 8
        %v268 = vrot.slane %v233, 7
        %v269 = vrot.slane %v235, 7
        %v270 = vrot.slane %v237, 7
        %v271 = vrot.slane %v239, 7
        %v272 = vrot.slane %v241, 7
        %v273 = vrot.slane %v243, 7
        %v274 = vrot.slane %v245, 7
        %v275 = vrot.slane %v247, 7
        %v276 = vrot.slane %v249, 7
        %v277 = vrot.slane %v251, 7
        %v278 = vrot.slane %v253, 7
        %v279 = vrot.slane %v255, 7
        %v280 = vrot.slane %v257, 7
        %v281 = vrot.slane %v259, 7
        %v282 = vrot.slane %v261, 7
        %v283 = vrot.slane %v263, 7
        %v284 = vrot.slane %v234, 7
        %v285 = vrot.slane %v236, 7
        %v286 = vrot.slane %v238, 7
        %v287 = vrot.slane %v240, 7
        %v288 = vrot.slane %v242, 7
        %v289 = vrot.slane %v244, 7
        %v290 = vrot.slane %v246, 7
        %v291 = vrot.slane %v248, 7
        %v292 = vrot.slane %v250, 7
        %v293 = vrot.slane %v252, 7
        %v294 = vrot.slane %v254, 7
        %v295 = vrot.slane %v256, 7
        %v296 = vrot.slane %v258, 7
        %v297 = vrot.slane %v260, 7
        %v298 = vrot.slane %v262, 7
        %v299 = vrot.slane %v264, 7
        %vm300 = vcmp.lt.s32.totalorder %v266, 1
        %v301 = vsel %vm300, %v268, %v284
        %v302 = vsel %vm300, %v269, %v285
        %v303 = vsel %vm300, %v270, %v286
        %v304 = vsel %vm300, %v271, %v287
        %v305 = vsel %vm300, %v272, %v288
        %v306 = vsel %vm300, %v273, %v289
        %v307 = vsel %vm300, %v274, %v290
        %v308 = vsel %vm300, %v275, %v291
        %v309 = vsel %vm300, %v276, %v292
        %v310 = vsel %vm300, %v277, %v293
        %v311 = vsel %vm300, %v278, %v294
        %v312 = vsel %vm300, %v279, %v295
        %v313 = vsel %vm300, %v280, %v296
        %v314 = vsel %vm300, %v281, %v297
        %v315 = vsel %vm300, %v282, %v298
        %v316 = vsel %vm300, %v283, %v299
        %v317 = vsel %vm300, %v284, %v268
        %v318 = vsel %vm300, %v285, %v269
        %v319 = vsel %vm300, %v286, %v270
        %v320 = vsel %vm300, %v287, %v271
        %v321 = vsel %vm300, %v288, %v272
        %v322 = vsel %vm300, %v289, %v273
        %v323 = vsel %vm300, %v290, %v274
        %v324 = vsel %vm300, %v291, %v275
        %v325 = vsel %vm300, %v292, %v276
        %v326 = vsel %vm300, %v293, %v277
        %v327 = vsel %vm300, %v294, %v278
        %v328 = vsel %vm300, %v295, %v279
        %v329 = vsel %vm300, %v296, %v280
        %v330 = vsel %vm300, %v297, %v281
        %v331 = vsel %vm300, %v298, %v282
        %v332 = vsel %vm300, %v299, %v283
        %v333 = vadd.s32 %v266, 4294967295
        %v334 = vadd.s32 %v267, 4294967295
        %vm335 = vcmp.ge.s32.totalorder %v333, 0
        %vm336 = vcmp.ge.s32.totalorder %v334, 0
        %vm337 = vcmp.lt.s32.totalorder %v333, 16
        %vm338 = vcmp.lt.s32.totalorder %v334, 16
        %vm339 = vmand %vm335, %vm337
        %vm340 = vmand %vm336, %vm338
        %v341 = vsel %vm339, 1, 0
        %v342 = vsel %vm340, 1, 0
        %vm343 = vcmp.eq.s32.totalorder %v341, 1
        %vm344 = vcmp.eq.s32.totalorder %v342, 1
        %v345 = vsel %vm343, %v317, 0.0
        %v346 = vsel %vm344, %v301, 0.0
        %v347 = vsel %vm343, %v318, 0.0
        %v348 = vsel %vm344, %v302, 0.0
        %v349 = vsel %vm343, %v319, 0.0
        %v350 = vsel %vm344, %v303, 0.0
        %v351 = vsel %vm343, %v320, 0.0
        %v352 = vsel %vm344, %v304, 0.0
        %v353 = vsel %vm343, %v321, 0.0
        %v354 = vsel %vm344, %v305, 0.0
        %v355 = vsel %vm343, %v322, 0.0
        %v356 = vsel %vm344, %v306, 0.0
        %v357 = vsel %vm343, %v323, 0.0
        %v358 = vsel %vm344, %v307, 0.0
        %v359 = vsel %vm343, %v324, 0.0
        %v360 = vsel %vm344, %v308, 0.0
        %v361 = vsel %vm343, %v325, 0.0
        %v362 = vsel %vm344, %v309, 0.0
        %v363 = vsel %vm343, %v326, 0.0
        %v364 = vsel %vm344, %v310, 0.0
        %v365 = vsel %vm343, %v327, 0.0
        %v366 = vsel %vm344, %v311, 0.0
        %v367 = vsel %vm343, %v328, 0.0
        %v368 = vsel %vm344, %v312, 0.0
        %v369 = vsel %vm343, %v329, 0.0
        %v370 = vsel %vm344, %v313, 0.0
        %v371 = vsel %vm343, %v330, 0.0
        %v372 = vsel %vm344, %v314, 0.0
        %v373 = vsel %vm343, %v331, 0.0
        %v374 = vsel %vm344, %v315, 0.0
        %v375 = vsel %vm343, %v332, 0.0
        %v376 = vsel %vm344, %v316, 0.0
        %v377 = vrot.slane %v233, 1
        %v378 = vrot.slane %v235, 1
        %v379 = vrot.slane %v237, 1
        %v380 = vrot.slane %v239, 1
        %v381 = vrot.slane %v241, 1
        %v382 = vrot.slane %v243, 1
        %v383 = vrot.slane %v245, 1
        %v384 = vrot.slane %v247, 1
        %v385 = vrot.slane %v249, 1
        %v386 = vrot.slane %v251, 1
        %v387 = vrot.slane %v253, 1
        %v388 = vrot.slane %v255, 1
        %v389 = vrot.slane %v257, 1
        %v390 = vrot.slane %v259, 1
        %v391 = vrot.slane %v261, 1
        %v392 = vrot.slane %v263, 1
        %v393 = vrot.slane %v234, 1
        %v394 = vrot.slane %v236, 1
        %v395 = vrot.slane %v238, 1
        %v396 = vrot.slane %v240, 1
        %v397 = vrot.slane %v242, 1
        %v398 = vrot.slane %v244, 1
        %v399 = vrot.slane %v246, 1
        %v400 = vrot.slane %v248, 1
        %v401 = vrot.slane %v250, 1
        %v402 = vrot.slane %v252, 1
        %v403 = vrot.slane %v254, 1
        %v404 = vrot.slane %v256, 1
        %v405 = vrot.slane %v258, 1
        %v406 = vrot.slane %v260, 1
        %v407 = vrot.slane %v262, 1
        %v408 = vrot.slane %v264, 1
        %vm409 = vcmp.lt.s32.totalorder %v266, 7
        %v410 = vsel %vm409, %v377, %v393
        %v411 = vsel %vm409, %v378, %v394
        %v412 = vsel %vm409, %v379, %v395
        %v413 = vsel %vm409, %v380, %v396
        %v414 = vsel %vm409, %v381, %v397
        %v415 = vsel %vm409, %v382, %v398
        %v416 = vsel %vm409, %v383, %v399
        %v417 = vsel %vm409, %v384, %v400
        %v418 = vsel %vm409, %v385, %v401
        %v419 = vsel %vm409, %v386, %v402
        %v420 = vsel %vm409, %v387, %v403
        %v421 = vsel %vm409, %v388, %v404
        %v422 = vsel %vm409, %v389, %v405
        %v423 = vsel %vm409, %v390, %v406
        %v424 = vsel %vm409, %v391, %v407
        %v425 = vsel %vm409, %v392, %v408
        %v426 = vsel %vm409, %v393, %v377
        %v427 = vsel %vm409, %v394, %v378
        %v428 = vsel %vm409, %v395, %v379
        %v429 = vsel %vm409, %v396, %v380
        %v430 = vsel %vm409, %v397, %v381
        %v431 = vsel %vm409, %v398, %v382
        %v432 = vsel %vm409, %v399, %v383
        %v433 = vsel %vm409, %v400, %v384
        %v434 = vsel %vm409, %v401, %v385
        %v435 = vsel %vm409, %v402, %v386
        %v436 = vsel %vm409, %v403, %v387
        %v437 = vsel %vm409, %v404, %v388
        %v438 = vsel %vm409, %v405, %v389
        %v439 = vsel %vm409, %v406, %v390
        %v440 = vsel %vm409, %v407, %v391
        %v441 = vsel %vm409, %v408, %v392
        %v442 = vadd.s32 %v266, 1
        %v443 = vadd.s32 %v267, 1
        %vm444 = vcmp.ge.s32.totalorder %v442, 0
        %vm445 = vcmp.ge.s32.totalorder %v443, 0
        %vm446 = vcmp.lt.s32.totalorder %v442, 16
        %vm447 = vcmp.lt.s32.totalorder %v443, 16
        %vm448 = vmand %vm444, %vm446
        %vm449 = vmand %vm445, %vm447
        %v450 = vsel %vm448, 1, 0
        %v451 = vsel %vm449, 1, 0
        %vm452 = vcmp.eq.s32.totalorder %v450, 1
        %vm453 = vcmp.eq.s32.totalorder %v451, 1
        %v454 = vsel %vm452, %v410, 0.0
        %v455 = vsel %vm453, %v426, 0.0
        %v456 = vsel %vm452, %v411, 0.0
        %v457 = vsel %vm453, %v427, 0.0
        %v458 = vsel %vm452, %v412, 0.0
        %v459 = vsel %vm453, %v428, 0.0
        %v460 = vsel %vm452, %v413, 0.0
        %v461 = vsel %vm453, %v429, 0.0
        %v462 = vsel %vm452, %v414, 0.0
        %v463 = vsel %vm453, %v430, 0.0
        %v464 = vsel %vm452, %v415, 0.0
        %v465 = vsel %vm453, %v431, 0.0
        %v466 = vsel %vm452, %v416, 0.0
        %v467 = vsel %vm453, %v432, 0.0
        %v468 = vsel %vm452, %v417, 0.0
        %v469 = vsel %vm453, %v433, 0.0
        %v470 = vsel %vm452, %v418, 0.0
        %v471 = vsel %vm453, %v434, 0.0
        %v472 = vsel %vm452, %v419, 0.0
        %v473 = vsel %vm453, %v435, 0.0
        %v474 = vsel %vm452, %v420, 0.0
        %v475 = vsel %vm453, %v436, 0.0
        %v476 = vsel %vm452, %v421, 0.0
        %v477 = vsel %vm453, %v437, 0.0
        %v478 = vsel %vm452, %v422, 0.0
        %v479 = vsel %vm453, %v438, 0.0
        %v480 = vsel %vm452, %v423, 0.0
        %v481 = vsel %vm453, %v439, 0.0
        %v482 = vsel %vm452, %v424, 0.0
        %v483 = vsel %vm453, %v440, 0.0
        %v484 = vsel %vm452, %v425, 0.0
        %v485 = vsel %vm453, %v441, 0.0
        %v486 = vld [vmem:[#allocation6] sm:$0xff]
        %v487 = vld [vmem:[#allocation6 + $0x8] sm:$0xff]
        %v488 = vld [vmem:[#allocation6 + $0x10] sm:$0xff]
        %v489 = vld [vmem:[#allocation6 + $0x18] sm:$0xff]
        %v490 = vld [vmem:[#allocation6 + $0x20] sm:$0xff]
        %v491 = vld [vmem:[#allocation6 + $0x28] sm:$0xff]
        %v492 = vld [vmem:[#allocation6 + $0x30] sm:$0xff]
        %v493 = vld [vmem:[#allocation6 + $0x38] sm:$0xff]
        %v494 = vld [vmem:[#allocation6 + $0x40] sm:$0xff]
        %v495 = vld [vmem:[#allocation6 + $0x48] sm:$0xff]
        %v496 = vld [vmem:[#allocation6 + $0x50] sm:$0xff]
        %v497 = vld [vmem:[#allocation6 + $0x58] sm:$0xff]
        %v498 = vld [vmem:[#allocation6 + $0x60] sm:$0xff]
        %v499 = vld [vmem:[#allocation6 + $0x68] sm:$0xff]
        %v500 = vld [vmem:[#allocation6 + $0x70] sm:$0xff]
        %v501 = vld [vmem:[#allocation6 + $0x78] sm:$0xff]
        %s502 = scalar_lea.vmem [#allocation6], 128
        %v503 = vld [vmem:[%s502] sm:$0xff]
        %v504 = vld [vmem:[%s502 + $0x8] sm:$0xff]
        %v505 = vld [vmem:[%s502 + $0x10] sm:$0xff]
        %v506 = vld [vmem:[%s502 + $0x18] sm:$0xff]
        %v507 = vld [vmem:[%s502 + $0x20] sm:$0xff]
        %v508 = vld [vmem:[%s502 + $0x28] sm:$0xff]
        %v509 = vld [vmem:[%s502 + $0x30] sm:$0xff]
        %v510 = vld [vmem:[%s502 + $0x38] sm:$0xff]
        %v511 = vld [vmem:[%s502 + $0x40] sm:$0xff]
        %v512 = vld [vmem:[%s502 + $0x48] sm:$0xff]
        %v513 = vld [vmem:[%s502 + $0x50] sm:$0xff]
        %v514 = vld [vmem:[%s502 + $0x58] sm:$0xff]
        %v515 = vld [vmem:[%s502 + $0x60] sm:$0xff]
        %v516 = vld [vmem:[%s502 + $0x68] sm:$0xff]
        %v517 = vld [vmem:[%s502 + $0x70] sm:$0xff]
        %v518 = vld [vmem:[%s502 + $0x78] sm:$0xff]
        %vm519 = vcmask 523264
        %v521 = vsel %vm519, 0.0, 0
        %v524 = vsel %vm519, %v233, 0
        %v527 = vsel %vm519, %v234, 0
        %v530 = vsel %vm519, %v235, 0
        %v533 = vsel %vm519, %v236, 0
        %v536 = vsel %vm519, %v237, 0
        %v539 = vsel %vm519, %v238, 0
        %v542 = vsel %vm519, %v239, 0
        %v545 = vsel %vm519, %v240, 0
        %v548 = vsel %vm519, %v241, 0
        %v551 = vsel %vm519, %v242, 0
        %v554 = vsel %vm519, %v243, 0
        %v557 = vsel %vm519, %v244, 0
        %v560 = vsel %vm519, %v245, 0
        %v563 = vsel %vm519, %v246, 0
        %v566 = vsel %vm519, %v247, 0
        %v569 = vsel %vm519, %v248, 0
        %v572 = vsel %vm519, %v249, 0
        %v575 = vsel %vm519, %v250, 0
        %v578 = vsel %vm519, %v251, 0
        %v581 = vsel %vm519, %v252, 0
        %v584 = vsel %vm519, %v253, 0
        %v587 = vsel %vm519, %v254, 0
        %v590 = vsel %vm519, %v255, 0
        %v593 = vsel %vm519, %v256, 0
        %v596 = vsel %vm519, %v257, 0
        %v599 = vsel %vm519, %v258, 0
        %v602 = vsel %vm519, %v259, 0
        %v605 = vsel %vm519, %v260, 0
        %v608 = vsel %vm519, %v261, 0
        %v611 = vsel %vm519, %v262, 0
        %613 = vmatprep.subr.mxu0 0.0
        %614 = vmatpush1.msra.mxu0 0.0
        %615 = vmatprep.subr.mxu0 0.0
        %616 = vmatpush1.msra.mxu0 0.0
        %617 = vmatprep.subr.mxu0 0.0
        %618 = vmatpush1.msra.mxu0 0.0
        %619 = vmatprep.subr.mxu0 0.0
        %620 = vmatpush1.msra.mxu0 0.0
        %621 = vmatprep.subr.mxu0 0.0
        %622 = vmatpush1.msra.mxu0 0.0
        %623 = vmatprep.subr.mxu0 0.0
        %624 = vmatpush1.msra.mxu0 0.0
        %625 = vmatprep.subr.mxu0 0.0
        %626 = vmatpush1.msra.mxu0 0.0
        %627 = vmatprep.subr.mxu0 0.0
        %628 = vmatpush1.msra.mxu0 0.0
        %629 = vmatprep.subr.mxu0 %v518
        %630 = vmatpush1.msra.mxu0 %v517
        %631 = vmatprep.subr.mxu0 %v516
        %632 = vmatpush1.msra.mxu0 %v515
        %633 = vmatprep.subr.mxu0 %v514
        %634 = vmatpush1.msra.mxu0 %v513
        %635 = vmatprep.subr.mxu0 %v512
        %636 = vmatpush1.msra.mxu0 %v511
        %637 = vmatprep.subr.mxu0 %v510
        %638 = vmatpush1.msra.mxu0 %v509
        %639 = vmatprep.subr.mxu0 %v508
        %640 = vmatpush1.msra.mxu0 %v507
        %641 = vmatprep.subr.mxu0 %v506
        %642 = vmatpush1.msra.mxu0 %v505
        %643 = vmatprep.subr.mxu0 %v504
        %644 = vmatpush1.msra.mxu0 %v503
        %645 = vmatprep.subr.mxu0 0.0
        %646 = vmatpush2.msra.mxu0 0.0
        %647 = vmatprep.subr.mxu0 0.0
        %648 = vmatpush2.msra.mxu0 0.0
        %649 = vmatprep.subr.mxu0 0.0
        %650 = vmatpush2.msra.mxu0 0.0
        %651 = vmatprep.subr.mxu0 0.0
        %652 = vmatpush2.msra.mxu0 0.0
        %653 = vmatprep.subr.mxu0 0.0
        %654 = vmatpush2.msra.mxu0 0.0
        %655 = vmatprep.subr.mxu0 0.0
        %656 = vmatpush2.msra.mxu0 0.0
        %657 = vmatprep.subr.mxu0 0.0
        %658 = vmatpush2.msra.mxu0 0.0
        %659 = vmatprep.subr.mxu0 0.0
        %660 = vmatpush2.msra.mxu0 0.0
        %661 = vmatprep.subr.mxu0 0.0
        %662 = vmatpush2.msra.mxu0 0.0
        %663 = vmatprep.subr.mxu0 0.0
        %664 = vmatpush2.msra.mxu0 0.0
        %665 = vmatprep.subr.mxu0 0.0
        %666 = vmatpush2.msra.mxu0 0.0
        %667 = vmatprep.subr.mxu0 0.0
        %668 = vmatpush2.msra.mxu0 0.0
        %669 = vmatprep.subr.mxu0 0.0
        %670 = vmatpush2.msra.mxu0 0.0
        %671 = vmatprep.subr.mxu0 0.0
        %672 = vmatpush2.msra.mxu0 0.0
        %673 = vmatprep.subr.mxu0 0.0
        %674 = vmatpush2.msra.mxu0 0.0
        %675 = vmatprep.subr.mxu0 0.0
        %676 = vmatpush2.msra.mxu0 0.0
        %677 = vmatprep.mubr.f32.mxu0 0.0
        %678 = vmatmul.mubr.f32.gmra.mxu0 %v521
        %v679 = vpop.f32.mrf.mxu0
        %v680 = vadd.f32 0.0, %v679
        %v681 = vpop.f32.mrf.mxu0
        %v682 = vadd.f32 0.0, %v681
        %683 = vmatprep.mubr.f32.mxu0 0.0
        %684 = vmatmul.mubr.f32.gmra.mxu0 %v521
        %v685 = vpop.f32.mrf.mxu0
        %v686 = vadd.f32 0.0, %v685
        %v687 = vpop.f32.mrf.mxu0
        %v688 = vadd.f32 0.0, %v687
        %689 = vmatprep.mubr.f32.mxu0 0.0
        %690 = vmatmul.mubr.f32.gmra.mxu0 %v524
        %v691 = vpop.f32.mrf.mxu0
        %v692 = vadd.f32 0.0, %v691
        %v693 = vpop.f32.mrf.mxu0
        %v694 = vadd.f32 0.0, %v693
        %695 = vmatprep.mubr.f32.mxu0 0.0
        %696 = vmatmul.mubr.f32.gmra.mxu0 %v527
        %v697 = vpop.f32.mrf.mxu0
        %v698 = vadd.f32 0.0, %v697
        %v699 = vpop.f32.mrf.mxu0
        %v700 = vadd.f32 0.0, %v699
        %701 = vmatprep.mubr.f32.mxu0 0.0
        %702 = vmatmul.mubr.f32.gmra.mxu0 %v530
        %v703 = vpop.f32.mrf.mxu0
        %v704 = vadd.f32 0.0, %v703
        %v705 = vpop.f32.mrf.mxu0
        %v706 = vadd.f32 0.0, %v705
        %707 = vmatprep.mubr.f32.mxu0 0.0
        %708 = vmatmul.mubr.f32.gmra.mxu0 %v533
        %v709 = vpop.f32.mrf.mxu0
        %v710 = vadd.f32 0.0, %v709
        %v711 = vpop.f32.mrf.mxu0
        %v712 = vadd.f32 0.0, %v711
        %713 = vmatprep.mubr.f32.mxu0 0.0
        %714 = vmatmul.mubr.f32.gmra.mxu0 %v536
        %v715 = vpop.f32.mrf.mxu0
        %v716 = vadd.f32 0.0, %v715
        %v717 = vpop.f32.mrf.mxu0
        %v718 = vadd.f32 0.0, %v717
        %719 = vmatprep.mubr.f32.mxu0 0.0
        %720 = vmatmul.mubr.f32.gmra.mxu0 %v539
        %v721 = vpop.f32.mrf.mxu0
        %v722 = vadd.f32 0.0, %v721
        %v723 = vpop.f32.mrf.mxu0
        %v724 = vadd.f32 0.0, %v723
        %725 = vmatprep.mubr.f32.mxu0 0.0
        %726 = vmatmul.mubr.f32.gmra.mxu0 %v542
        %v727 = vpop.f32.mrf.mxu0
        %v728 = vadd.f32 0.0, %v727
        %v729 = vpop.f32.mrf.mxu0
        %v730 = vadd.f32 0.0, %v729
        %731 = vmatprep.mubr.f32.mxu0 0.0
        %732 = vmatmul.mubr.f32.gmra.mxu0 %v545
        %v733 = vpop.f32.mrf.mxu0
        %v734 = vadd.f32 0.0, %v733
        %v735 = vpop.f32.mrf.mxu0
        %v736 = vadd.f32 0.0, %v735
        %737 = vmatprep.mubr.f32.mxu0 0.0
        %738 = vmatmul.mubr.f32.gmra.mxu0 %v548
        %v739 = vpop.f32.mrf.mxu0
        %v740 = vadd.f32 0.0, %v739
        %v741 = vpop.f32.mrf.mxu0
        %v742 = vadd.f32 0.0, %v741
        %743 = vmatprep.mubr.f32.mxu0 0.0
        %744 = vmatmul.mubr.f32.gmra.mxu0 %v551
        %v745 = vpop.f32.mrf.mxu0
        %v746 = vadd.f32 0.0, %v745
        %v747 = vpop.f32.mrf.mxu0
        %v748 = vadd.f32 0.0, %v747
        %749 = vmatprep.mubr.f32.mxu0 0.0
        %750 = vmatmul.mubr.f32.gmra.mxu0 %v554
        %v751 = vpop.f32.mrf.mxu0
        %v752 = vadd.f32 0.0, %v751
        %v753 = vpop.f32.mrf.mxu0
        %v754 = vadd.f32 0.0, %v753
        %755 = vmatprep.mubr.f32.mxu0 0.0
        %756 = vmatmul.mubr.f32.gmra.mxu0 %v557
        %v757 = vpop.f32.mrf.mxu0
        %v758 = vadd.f32 0.0, %v757
        %v759 = vpop.f32.mrf.mxu0
        %v760 = vadd.f32 0.0, %v759
        %761 = vmatprep.mubr.f32.mxu0 0.0
        %762 = vmatmul.mubr.f32.gmra.mxu0 %v560
        %v763 = vpop.f32.mrf.mxu0
        %v764 = vadd.f32 0.0, %v763
        %v765 = vpop.f32.mrf.mxu0
        %v766 = vadd.f32 0.0, %v765
        %767 = vmatprep.mubr.f32.mxu0 0.0
        %768 = vmatmul.mubr.f32.gmra.mxu0 %v563
        %v769 = vpop.f32.mrf.mxu0
        %v770 = vadd.f32 0.0, %v769
        %v771 = vpop.f32.mrf.mxu0
        %v772 = vadd.f32 0.0, %v771
        %773 = vmatprep.mubr.f32.mxu0 0.0
        %774 = vmatmul.mubr.f32.gmra.mxu0 %v566
        %v775 = vpop.f32.mrf.mxu0
        %v776 = vadd.f32 0.0, %v775
        %v777 = vpop.f32.mrf.mxu0
        %v778 = vadd.f32 0.0, %v777
        %779 = vmatprep.mubr.f32.mxu0 0.0
        %780 = vmatmul.mubr.f32.gmra.mxu0 %v569
        %v781 = vpop.f32.mrf.mxu0
        %v782 = vadd.f32 0.0, %v781
        %v783 = vpop.f32.mrf.mxu0
        %v784 = vadd.f32 0.0, %v783
        %785 = vmatprep.mubr.f32.mxu0 0.0
        %786 = vmatmul.mubr.f32.gmra.mxu0 %v572
        %v787 = vpop.f32.mrf.mxu0
        %v788 = vadd.f32 0.0, %v787
        %v789 = vpop.f32.mrf.mxu0
        %v790 = vadd.f32 0.0, %v789
        %791 = vmatprep.mubr.f32.mxu0 0.0
        %792 = vmatmul.mubr.f32.gmra.mxu0 %v575
        %v793 = vpop.f32.mrf.mxu0
        %v794 = vadd.f32 0.0, %v793
        %v795 = vpop.f32.mrf.mxu0
        %v796 = vadd.f32 0.0, %v795
        %797 = vmatprep.mubr.f32.mxu0 0.0
        %798 = vmatmul.mubr.f32.gmra.mxu0 %v578
        %v799 = vpop.f32.mrf.mxu0
        %v800 = vadd.f32 0.0, %v799
        %v801 = vpop.f32.mrf.mxu0
        %v802 = vadd.f32 0.0, %v801
        %803 = vmatprep.mubr.f32.mxu0 0.0
        %804 = vmatmul.mubr.f32.gmra.mxu0 %v581
        %v805 = vpop.f32.mrf.mxu0
        %v806 = vadd.f32 0.0, %v805
        %v807 = vpop.f32.mrf.mxu0
        %v808 = vadd.f32 0.0, %v807
        %809 = vmatprep.mubr.f32.mxu0 0.0
        %810 = vmatmul.mubr.f32.gmra.mxu0 %v584
        %v811 = vpop.f32.mrf.mxu0
        %v812 = vadd.f32 0.0, %v811
        %v813 = vpop.f32.mrf.mxu0
        %v814 = vadd.f32 0.0, %v813
        %815 = vmatprep.mubr.f32.mxu0 0.0
        %816 = vmatmul.mubr.f32.gmra.mxu0 %v587
        %v817 = vpop.f32.mrf.mxu0
        %v818 = vadd.f32 0.0, %v817
        %v819 = vpop.f32.mrf.mxu0
        %v820 = vadd.f32 0.0, %v819
        %821 = vmatprep.mubr.f32.mxu0 0.0
        %822 = vmatmul.mubr.f32.gmra.mxu0 %v590
        %v823 = vpop.f32.mrf.mxu0
        %v824 = vadd.f32 0.0, %v823
        %v825 = vpop.f32.mrf.mxu0
        %v826 = vadd.f32 0.0, %v825
        %827 = vmatprep.mubr.f32.mxu0 0.0
        %828 = vmatmul.mubr.f32.gmra.mxu0 %v593
        %v829 = vpop.f32.mrf.mxu0
        %v830 = vadd.f32 0.0, %v829
        %v831 = vpop.f32.mrf.mxu0
        %v832 = vadd.f32 0.0, %v831
        %833 = vmatprep.mubr.f32.mxu0 0.0
        %834 = vmatmul.mubr.f32.gmra.mxu0 %v596
        %v835 = vpop.f32.mrf.mxu0
        %v836 = vadd.f32 0.0, %v835
        %v837 = vpop.f32.mrf.mxu0
        %v838 = vadd.f32 0.0, %v837
        %839 = vmatprep.mubr.f32.mxu0 0.0
        %840 = vmatmul.mubr.f32.gmra.mxu0 %v599
        %v841 = vpop.f32.mrf.mxu0
        %v842 = vadd.f32 0.0, %v841
        %v843 = vpop.f32.mrf.mxu0
        %v844 = vadd.f32 0.0, %v843
        %845 = vmatprep.mubr.f32.mxu0 0.0
        %846 = vmatmul.mubr.f32.gmra.mxu0 %v602
        %v847 = vpop.f32.mrf.mxu0
        %v848 = vadd.f32 0.0, %v847
        %v849 = vpop.f32.mrf.mxu0
        %v850 = vadd.f32 0.0, %v849
        %851 = vmatprep.mubr.f32.mxu0 0.0
        %852 = vmatmul.mubr.f32.gmra.mxu0 %v605
        %v853 = vpop.f32.mrf.mxu0
        %v854 = vadd.f32 0.0, %v853
        %v855 = vpop.f32.mrf.mxu0
        %v856 = vadd.f32 0.0, %v855
        %857 = vmatprep.mubr.f32.mxu0 0.0
        %858 = vmatmul.mubr.f32.gmra.mxu0 %v608
        %v859 = vpop.f32.mrf.mxu0
        %v860 = vadd.f32 0.0, %v859
        %v861 = vpop.f32.mrf.mxu0
        %v862 = vadd.f32 0.0, %v861
        %863 = vmatprep.mubr.f32.mxu0 0.0
        %864 = vmatmul.mubr.f32.gmra.mxu0 %v611
        %v865 = vpop.f32.mrf.mxu0
        %v866 = vadd.f32 0.0, %v865
        %v867 = vpop.f32.mrf.mxu0
        %v868 = vadd.f32 0.0, %v867
        %869 = vdwg.mxu0
        %v871 = vsel %vm519, %v345, 0
        %v874 = vsel %vm519, %v346, 0
        %v877 = vsel %vm519, %v347, 0
        %v880 = vsel %vm519, %v348, 0
        %v883 = vsel %vm519, %v349, 0
        %v886 = vsel %vm519, %v350, 0
        %v889 = vsel %vm519, %v351, 0
        %v892 = vsel %vm519, %v352, 0
        %v895 = vsel %vm519, %v353, 0
        %v898 = vsel %vm519, %v354, 0
        %v901 = vsel %vm519, %v355, 0
        %v904 = vsel %vm519, %v356, 0
        %v907 = vsel %vm519, %v357, 0
        %v910 = vsel %vm519, %v358, 0
        %v913 = vsel %vm519, %v359, 0
        %v916 = vsel %vm519, %v360, 0
        %v919 = vsel %vm519, %v361, 0
        %v922 = vsel %vm519, %v362, 0
        %v925 = vsel %vm519, %v363, 0
        %v928 = vsel %vm519, %v364, 0
        %v931 = vsel %vm519, %v365, 0
        %v934 = vsel %vm519, %v366, 0
        %v937 = vsel %vm519, %v367, 0
        %v940 = vsel %vm519, %v368, 0
        %v943 = vsel %vm519, %v369, 0
        %v946 = vsel %vm519, %v370, 0
        %v949 = vsel %vm519, %v371, 0
        %v952 = vsel %vm519, %v372, 0
        %v955 = vsel %vm519, %v373, 0
        %v958 = vsel %vm519, %v374, 0
        %960 = vmatprep.subr.mxu0 0.0
        %961 = vmatpush1.msra.mxu0 0.0
        %962 = vmatprep.subr.mxu0 0.0
        %963 = vmatpush1.msra.mxu0 0.0
        %964 = vmatprep.subr.mxu0 0.0
        %965 = vmatpush1.msra.mxu0 0.0
        %966 = vmatprep.subr.mxu0 0.0
        %967 = vmatpush1.msra.mxu0 0.0
        %968 = vmatprep.subr.mxu0 0.0
        %969 = vmatpush1.msra.mxu0 0.0
        %970 = vmatprep.subr.mxu0 0.0
        %971 = vmatpush1.msra.mxu0 0.0
        %972 = vmatprep.subr.mxu0 0.0
        %973 = vmatpush1.msra.mxu0 0.0
        %974 = vmatprep.subr.mxu0 0.0
        %975 = vmatpush1.msra.mxu0 0.0
        %976 = vmatprep.subr.mxu0 %v501
        %977 = vmatpush1.msra.mxu0 %v500
        %978 = vmatprep.subr.mxu0 %v499
        %979 = vmatpush1.msra.mxu0 %v498
        %980 = vmatprep.subr.mxu0 %v497
        %981 = vmatpush1.msra.mxu0 %v496
        %982 = vmatprep.subr.mxu0 %v495
        %983 = vmatpush1.msra.mxu0 %v494
        %984 = vmatprep.subr.mxu0 %v493
        %985 = vmatpush1.msra.mxu0 %v492
        %986 = vmatprep.subr.mxu0 %v491
        %987 = vmatpush1.msra.mxu0 %v490
        %988 = vmatprep.subr.mxu0 %v489
        %989 = vmatpush1.msra.mxu0 %v488
        %990 = vmatprep.subr.mxu0 %v487
        %991 = vmatpush1.msra.mxu0 %v486
        %992 = vmatprep.subr.mxu0 0.0
        %993 = vmatpush2.msra.mxu0 0.0
        %994 = vmatprep.subr.mxu0 0.0
        %995 = vmatpush2.msra.mxu0 0.0
        %996 = vmatprep.subr.mxu0 0.0
        %997 = vmatpush2.msra.mxu0 0.0
        %998 = vmatprep.subr.mxu0 0.0
        %999 = vmatpush2.msra.mxu0 0.0
        %1000 = vmatprep.subr.mxu0 0.0
        %1001 = vmatpush2.msra.mxu0 0.0
        %1002 = vmatprep.subr.mxu0 0.0
        %1003 = vmatpush2.msra.mxu0 0.0
        %1004 = vmatprep.subr.mxu0 0.0
        %1005 = vmatpush2.msra.mxu0 0.0
        %1006 = vmatprep.subr.mxu0 0.0
        %1007 = vmatpush2.msra.mxu0 0.0
        %1008 = vmatprep.subr.mxu0 0.0
        %1009 = vmatpush2.msra.mxu0 0.0
        %1010 = vmatprep.subr.mxu0 0.0
        %1011 = vmatpush2.msra.mxu0 0.0
        %1012 = vmatprep.subr.mxu0 0.0
        %1013 = vmatpush2.msra.mxu0 0.0
        %1014 = vmatprep.subr.mxu0 0.0
        %1015 = vmatpush2.msra.mxu0 0.0
        %1016 = vmatprep.subr.mxu0 0.0
        %1017 = vmatpush2.msra.mxu0 0.0
        %1018 = vmatprep.subr.mxu0 0.0
        %1019 = vmatpush2.msra.mxu0 0.0
        %1020 = vmatprep.subr.mxu0 0.0
        %1021 = vmatpush2.msra.mxu0 0.0
        %1022 = vmatprep.subr.mxu0 0.0
        %1023 = vmatpush2.msra.mxu0 0.0
        %1024 = vmatprep.mubr.f32.mxu0 0.0
        %1025 = vmatmul.mubr.f32.gmra.mxu0 %v521
        %v1026 = vpop.f32.mrf.mxu0
        %v1027 = vadd.f32 %v680, %v1026
        %v1028 = vpop.f32.mrf.mxu0
        %v1029 = vadd.f32 %v682, %v1028
        %1030 = vmatprep.mubr.f32.mxu0 0.0
        %1031 = vmatmul.mubr.f32.gmra.mxu0 %v521
        %v1032 = vpop.f32.mrf.mxu0
        %v1033 = vadd.f32 %v686, %v1032
        %v1034 = vpop.f32.mrf.mxu0
        %v1035 = vadd.f32 %v688, %v1034
        %1036 = vmatprep.mubr.f32.mxu0 0.0
        %1037 = vmatmul.mubr.f32.gmra.mxu0 %v871
        %v1038 = vpop.f32.mrf.mxu0
        %v1039 = vadd.f32 %v692, %v1038
        %v1040 = vpop.f32.mrf.mxu0
        %v1041 = vadd.f32 %v694, %v1040
        %1042 = vmatprep.mubr.f32.mxu0 0.0
        %1043 = vmatmul.mubr.f32.gmra.mxu0 %v874
        %v1044 = vpop.f32.mrf.mxu0
        %v1045 = vadd.f32 %v698, %v1044
        %v1046 = vpop.f32.mrf.mxu0
        %v1047 = vadd.f32 %v700, %v1046
        %1048 = vmatprep.mubr.f32.mxu0 0.0
        %1049 = vmatmul.mubr.f32.gmra.mxu0 %v877
        %v1050 = vpop.f32.mrf.mxu0
        %v1051 = vadd.f32 %v704, %v1050
        %v1052 = vpop.f32.mrf.mxu0
        %v1053 = vadd.f32 %v706, %v1052
        %1054 = vmatprep.mubr.f32.mxu0 0.0
        %1055 = vmatmul.mubr.f32.gmra.mxu0 %v880
        %v1056 = vpop.f32.mrf.mxu0
        %v1057 = vadd.f32 %v710, %v1056
        %v1058 = vpop.f32.mrf.mxu0
        %v1059 = vadd.f32 %v712, %v1058
        %1060 = vmatprep.mubr.f32.mxu0 0.0
        %1061 = vmatmul.mubr.f32.gmra.mxu0 %v883
        %v1062 = vpop.f32.mrf.mxu0
        %v1063 = vadd.f32 %v716, %v1062
        %v1064 = vpop.f32.mrf.mxu0
        %v1065 = vadd.f32 %v718, %v1064
        %1066 = vmatprep.mubr.f32.mxu0 0.0
        %1067 = vmatmul.mubr.f32.gmra.mxu0 %v886
        %v1068 = vpop.f32.mrf.mxu0
        %v1069 = vadd.f32 %v722, %v1068
        %v1070 = vpop.f32.mrf.mxu0
        %v1071 = vadd.f32 %v724, %v1070
        %1072 = vmatprep.mubr.f32.mxu0 0.0
        %1073 = vmatmul.mubr.f32.gmra.mxu0 %v889
        %v1074 = vpop.f32.mrf.mxu0
        %v1075 = vadd.f32 %v728, %v1074
        %v1076 = vpop.f32.mrf.mxu0
        %v1077 = vadd.f32 %v730, %v1076
        %1078 = vmatprep.mubr.f32.mxu0 0.0
        %1079 = vmatmul.mubr.f32.gmra.mxu0 %v892
        %v1080 = vpop.f32.mrf.mxu0
        %v1081 = vadd.f32 %v734, %v1080
        %v1082 = vpop.f32.mrf.mxu0
        %v1083 = vadd.f32 %v736, %v1082
        %1084 = vmatprep.mubr.f32.mxu0 0.0
        %1085 = vmatmul.mubr.f32.gmra.mxu0 %v895
        %v1086 = vpop.f32.mrf.mxu0
        %v1087 = vadd.f32 %v740, %v1086
        %v1088 = vpop.f32.mrf.mxu0
        %v1089 = vadd.f32 %v742, %v1088
        %1090 = vmatprep.mubr.f32.mxu0 0.0
        %1091 = vmatmul.mubr.f32.gmra.mxu0 %v898
        %v1092 = vpop.f32.mrf.mxu0
        %v1093 = vadd.f32 %v746, %v1092
        %v1094 = vpop.f32.mrf.mxu0
        %v1095 = vadd.f32 %v748, %v1094
        %1096 = vmatprep.mubr.f32.mxu0 0.0
        %1097 = vmatmul.mubr.f32.gmra.mxu0 %v901
        %v1098 = vpop.f32.mrf.mxu0
        %v1099 = vadd.f32 %v752, %v1098
        %v1100 = vpop.f32.mrf.mxu0
        %v1101 = vadd.f32 %v754, %v1100
        %1102 = vmatprep.mubr.f32.mxu0 0.0
        %1103 = vmatmul.mubr.f32.gmra.mxu0 %v904
        %v1104 = vpop.f32.mrf.mxu0
        %v1105 = vadd.f32 %v758, %v1104
        %v1106 = vpop.f32.mrf.mxu0
        %v1107 = vadd.f32 %v760, %v1106
        %1108 = vmatprep.mubr.f32.mxu0 0.0
        %1109 = vmatmul.mubr.f32.gmra.mxu0 %v907
        %v1110 = vpop.f32.mrf.mxu0
        %v1111 = vadd.f32 %v764, %v1110
        %v1112 = vpop.f32.mrf.mxu0
        %v1113 = vadd.f32 %v766, %v1112
        %1114 = vmatprep.mubr.f32.mxu0 0.0
        %1115 = vmatmul.mubr.f32.gmra.mxu0 %v910
        %v1116 = vpop.f32.mrf.mxu0
        %v1117 = vadd.f32 %v770, %v1116
        %v1118 = vpop.f32.mrf.mxu0
        %v1119 = vadd.f32 %v772, %v1118
        %1120 = vmatprep.mubr.f32.mxu0 0.0
        %1121 = vmatmul.mubr.f32.gmra.mxu0 %v913
        %v1122 = vpop.f32.mrf.mxu0
        %v1123 = vadd.f32 %v776, %v1122
        %v1124 = vpop.f32.mrf.mxu0
        %v1125 = vadd.f32 %v778, %v1124
        %1126 = vmatprep.mubr.f32.mxu0 0.0
        %1127 = vmatmul.mubr.f32.gmra.mxu0 %v916
        %v1128 = vpop.f32.mrf.mxu0
        %v1129 = vadd.f32 %v782, %v1128
        %v1130 = vpop.f32.mrf.mxu0
        %v1131 = vadd.f32 %v784, %v1130
        %1132 = vmatprep.mubr.f32.mxu0 0.0
        %1133 = vmatmul.mubr.f32.gmra.mxu0 %v919
        %v1134 = vpop.f32.mrf.mxu0
        %v1135 = vadd.f32 %v788, %v1134
        %v1136 = vpop.f32.mrf.mxu0
        %v1137 = vadd.f32 %v790, %v1136
        %1138 = vmatprep.mubr.f32.mxu0 0.0
        %1139 = vmatmul.mubr.f32.gmra.mxu0 %v922
        %v1140 = vpop.f32.mrf.mxu0
        %v1141 = vadd.f32 %v794, %v1140
        %v1142 = vpop.f32.mrf.mxu0
        %v1143 = vadd.f32 %v796, %v1142
        %1144 = vmatprep.mubr.f32.mxu0 0.0
        %1145 = vmatmul.mubr.f32.gmra.mxu0 %v925
        %v1146 = vpop.f32.mrf.mxu0
        %v1147 = vadd.f32 %v800, %v1146
        %v1148 = vpop.f32.mrf.mxu0
        %v1149 = vadd.f32 %v802, %v1148
        %1150 = vmatprep.mubr.f32.mxu0 0.0
        %1151 = vmatmul.mubr.f32.gmra.mxu0 %v928
        %v1152 = vpop.f32.mrf.mxu0
        %v1153 = vadd.f32 %v806, %v1152
        %v1154 = vpop.f32.mrf.mxu0
        %v1155 = vadd.f32 %v808, %v1154
        %1156 = vmatprep.mubr.f32.mxu0 0.0
        %1157 = vmatmul.mubr.f32.gmra.mxu0 %v931
        %v1158 = vpop.f32.mrf.mxu0
        %v1159 = vadd.f32 %v812, %v1158
        %v1160 = vpop.f32.mrf.mxu0
        %v1161 = vadd.f32 %v814, %v1160
        %1162 = vmatprep.mubr.f32.mxu0 0.0
        %1163 = vmatmul.mubr.f32.gmra.mxu0 %v934
        %v1164 = vpop.f32.mrf.mxu0
        %v1165 = vadd.f32 %v818, %v1164
        %v1166 = vpop.f32.mrf.mxu0
        %v1167 = vadd.f32 %v820, %v1166
        %1168 = vmatprep.mubr.f32.mxu0 0.0
        %1169 = vmatmul.mubr.f32.gmra.mxu0 %v937
        %v1170 = vpop.f32.mrf.mxu0
        %v1171 = vadd.f32 %v824, %v1170
        %v1172 = vpop.f32.mrf.mxu0
        %v1173 = vadd.f32 %v826, %v1172
        %1174 = vmatprep.mubr.f32.mxu0 0.0
        %1175 = vmatmul.mubr.f32.gmra.mxu0 %v940
        %v1176 = vpop.f32.mrf.mxu0
        %v1177 = vadd.f32 %v830, %v1176
        %v1178 = vpop.f32.mrf.mxu0
        %v1179 = vadd.f32 %v832, %v1178
        %1180 = vmatprep.mubr.f32.mxu0 0.0
        %1181 = vmatmul.mubr.f32.gmra.mxu0 %v943
        %v1182 = vpop.f32.mrf.mxu0
        %v1183 = vadd.f32 %v836, %v1182
        %v1184 = vpop.f32.mrf.mxu0
        %v1185 = vadd.f32 %v838, %v1184
        %1186 = vmatprep.mubr.f32.mxu0 0.0
        %1187 = vmatmul.mubr.f32.gmra.mxu0 %v946
        %v1188 = vpop.f32.mrf.mxu0
        %v1189 = vadd.f32 %v842, %v1188
        %v1190 = vpop.f32.mrf.mxu0
        %v1191 = vadd.f32 %v844, %v1190
        %1192 = vmatprep.mubr.f32.mxu0 0.0
        %1193 = vmatmul.mubr.f32.gmra.mxu0 %v949
        %v1194 = vpop.f32.mrf.mxu0
        %v1195 = vadd.f32 %v848, %v1194
        %v1196 = vpop.f32.mrf.mxu0
        %v1197 = vadd.f32 %v850, %v1196
        %1198 = vmatprep.mubr.f32.mxu0 0.0
        %1199 = vmatmul.mubr.f32.gmra.mxu0 %v952
        %v1200 = vpop.f32.mrf.mxu0
        %v1201 = vadd.f32 %v854, %v1200
        %v1202 = vpop.f32.mrf.mxu0
        %v1203 = vadd.f32 %v856, %v1202
        %1204 = vmatprep.mubr.f32.mxu0 0.0
        %1205 = vmatmul.mubr.f32.gmra.mxu0 %v955
        %v1206 = vpop.f32.mrf.mxu0
        %v1207 = vadd.f32 %v860, %v1206
        %v1208 = vpop.f32.mrf.mxu0
        %v1209 = vadd.f32 %v862, %v1208
        %1210 = vmatprep.mubr.f32.mxu0 0.0
        %1211 = vmatmul.mubr.f32.gmra.mxu0 %v958
        %v1212 = vpop.f32.mrf.mxu0
        %v1213 = vadd.f32 %v866, %v1212
        %v1214 = vpop.f32.mrf.mxu0
        %v1215 = vadd.f32 %v868, %v1214
        %1216 = vdwg.mxu0
        %s1217 = scalar_lea.vmem [#allocation6], 256
        %v1218 = vld [vmem:[%s1217] sm:$0xff]
        %v1219 = vld [vmem:[%s1217 + $0x8] sm:$0xff]
        %v1220 = vld [vmem:[%s1217 + $0x10] sm:$0xff]
        %v1221 = vld [vmem:[%s1217 + $0x18] sm:$0xff]
        %v1222 = vld [vmem:[%s1217 + $0x20] sm:$0xff]
        %v1223 = vld [vmem:[%s1217 + $0x28] sm:$0xff]
        %v1224 = vld [vmem:[%s1217 + $0x30] sm:$0xff]
        %v1225 = vld [vmem:[%s1217 + $0x38] sm:$0xff]
        %v1226 = vld [vmem:[%s1217 + $0x40] sm:$0xff]
        %v1227 = vld [vmem:[%s1217 + $0x48] sm:$0xff]
        %v1228 = vld [vmem:[%s1217 + $0x50] sm:$0xff]
        %v1229 = vld [vmem:[%s1217 + $0x58] sm:$0xff]
        %v1230 = vld [vmem:[%s1217 + $0x60] sm:$0xff]
        %v1231 = vld [vmem:[%s1217 + $0x68] sm:$0xff]
        %v1232 = vld [vmem:[%s1217 + $0x70] sm:$0xff]
        %v1233 = vld [vmem:[%s1217 + $0x78] sm:$0xff]
        %v1235 = vsel %vm519, %v454, 0
        %v1238 = vsel %vm519, %v455, 0
        %v1241 = vsel %vm519, %v456, 0
        %v1244 = vsel %vm519, %v457, 0
        %v1247 = vsel %vm519, %v458, 0
        %v1250 = vsel %vm519, %v459, 0
        %v1253 = vsel %vm519, %v460, 0
        %v1256 = vsel %vm519, %v461, 0
        %v1259 = vsel %vm519, %v462, 0
        %v1262 = vsel %vm519, %v463, 0
        %v1265 = vsel %vm519, %v464, 0
        %v1268 = vsel %vm519, %v465, 0
        %v1271 = vsel %vm519, %v466, 0
        %v1274 = vsel %vm519, %v467, 0
        %v1277 = vsel %vm519, %v468, 0
        %v1280 = vsel %vm519, %v469, 0
        %v1283 = vsel %vm519, %v470, 0
        %v1286 = vsel %vm519, %v471, 0
        %v1289 = vsel %vm519, %v472, 0
        %v1292 = vsel %vm519, %v473, 0
        %v1295 = vsel %vm519, %v474, 0
        %v1298 = vsel %vm519, %v475, 0
        %v1301 = vsel %vm519, %v476, 0
        %v1304 = vsel %vm519, %v477, 0
        %v1307 = vsel %vm519, %v478, 0
        %v1310 = vsel %vm519, %v479, 0
        %v1313 = vsel %vm519, %v480, 0
        %v1316 = vsel %vm519, %v481, 0
        %v1319 = vsel %vm519, %v482, 0
        %v1322 = vsel %vm519, %v483, 0
        %1324 = vmatprep.subr.mxu0 0.0
        %1325 = vmatpush1.msra.mxu0 0.0
        %1326 = vmatprep.subr.mxu0 0.0
        %1327 = vmatpush1.msra.mxu0 0.0
        %1328 = vmatprep.subr.mxu0 0.0
        %1329 = vmatpush1.msra.mxu0 0.0
        %1330 = vmatprep.subr.mxu0 0.0
        %1331 = vmatpush1.msra.mxu0 0.0
        %1332 = vmatprep.subr.mxu0 0.0
        %1333 = vmatpush1.msra.mxu0 0.0
        %1334 = vmatprep.subr.mxu0 0.0
        %1335 = vmatpush1.msra.mxu0 0.0
        %1336 = vmatprep.subr.mxu0 0.0
        %1337 = vmatpush1.msra.mxu0 0.0
        %1338 = vmatprep.subr.mxu0 0.0
        %1339 = vmatpush1.msra.mxu0 0.0
        %1340 = vmatprep.subr.mxu0 %v1233
        %1341 = vmatpush1.msra.mxu0 %v1232
        %1342 = vmatprep.subr.mxu0 %v1231
        %1343 = vmatpush1.msra.mxu0 %v1230
        %1344 = vmatprep.subr.mxu0 %v1229
        %1345 = vmatpush1.msra.mxu0 %v1228
        %1346 = vmatprep.subr.mxu0 %v1227
        %1347 = vmatpush1.msra.mxu0 %v1226
        %1348 = vmatprep.subr.mxu0 %v1225
        %1349 = vmatpush1.msra.mxu0 %v1224
        %1350 = vmatprep.subr.mxu0 %v1223
        %1351 = vmatpush1.msra.mxu0 %v1222
        %1352 = vmatprep.subr.mxu0 %v1221
        %1353 = vmatpush1.msra.mxu0 %v1220
        %1354 = vmatprep.subr.mxu0 %v1219
        %1355 = vmatpush1.msra.mxu0 %v1218
        %1356 = vmatprep.subr.mxu0 0.0
        %1357 = vmatpush2.msra.mxu0 0.0
        %1358 = vmatprep.subr.mxu0 0.0
        %1359 = vmatpush2.msra.mxu0 0.0
        %1360 = vmatprep.subr.mxu0 0.0
        %1361 = vmatpush2.msra.mxu0 0.0
        %1362 = vmatprep.subr.mxu0 0.0
        %1363 = vmatpush2.msra.mxu0 0.0
        %1364 = vmatprep.subr.mxu0 0.0
        %1365 = vmatpush2.msra.mxu0 0.0
        %1366 = vmatprep.subr.mxu0 0.0
        %1367 = vmatpush2.msra.mxu0 0.0
        %1368 = vmatprep.subr.mxu0 0.0
        %1369 = vmatpush2.msra.mxu0 0.0
        %1370 = vmatprep.subr.mxu0 0.0
        %1371 = vmatpush2.msra.mxu0 0.0
        %1372 = vmatprep.subr.mxu0 0.0
        %1373 = vmatpush2.msra.mxu0 0.0
        %1374 = vmatprep.subr.mxu0 0.0
        %1375 = vmatpush2.msra.mxu0 0.0
        %1376 = vmatprep.subr.mxu0 0.0
        %1377 = vmatpush2.msra.mxu0 0.0
        %1378 = vmatprep.subr.mxu0 0.0
        %1379 = vmatpush2.msra.mxu0 0.0
        %1380 = vmatprep.subr.mxu0 0.0
        %1381 = vmatpush2.msra.mxu0 0.0
        %1382 = vmatprep.subr.mxu0 0.0
        %1383 = vmatpush2.msra.mxu0 0.0
        %1384 = vmatprep.subr.mxu0 0.0
        %1385 = vmatpush2.msra.mxu0 0.0
        %1386 = vmatprep.subr.mxu0 0.0
        %1387 = vmatpush2.msra.mxu0 0.0
        %1388 = vmatprep.mubr.f32.mxu0 0.0
        %1389 = vmatmul.mubr.f32.gmra.mxu0 %v521
        %v1390 = vpop.f32.mrf.mxu0
        %v1391 = vadd.f32 0.0, %v1390
        %v1392 = vpop.f32.mrf.mxu0
        %v1393 = vadd.f32 0.0, %v1392
        %1394 = vmatprep.mubr.f32.mxu0 0.0
        %1395 = vmatmul.mubr.f32.gmra.mxu0 %v521
        %v1396 = vpop.f32.mrf.mxu0
        %v1397 = vadd.f32 0.0, %v1396
        %v1398 = vpop.f32.mrf.mxu0
        %v1399 = vadd.f32 0.0, %v1398
        %1400 = vmatprep.mubr.f32.mxu0 0.0
        %1401 = vmatmul.mubr.f32.gmra.mxu0 %v1235
        %v1402 = vpop.f32.mrf.mxu0
        %v1403 = vadd.f32 0.0, %v1402
        %v1404 = vpop.f32.mrf.mxu0
        %v1405 = vadd.f32 0.0, %v1404
        %1406 = vmatprep.mubr.f32.mxu0 0.0
        %1407 = vmatmul.mubr.f32.gmra.mxu0 %v1238
        %v1408 = vpop.f32.mrf.mxu0
        %v1409 = vadd.f32 0.0, %v1408
        %v1410 = vpop.f32.mrf.mxu0
        %v1411 = vadd.f32 0.0, %v1410
        %1412 = vmatprep.mubr.f32.mxu0 0.0
        %1413 = vmatmul.mubr.f32.gmra.mxu0 %v1241
        %v1414 = vpop.f32.mrf.mxu0
        %v1415 = vadd.f32 0.0, %v1414
        %v1416 = vpop.f32.mrf.mxu0
        %v1417 = vadd.f32 0.0, %v1416
        %1418 = vmatprep.mubr.f32.mxu0 0.0
        %1419 = vmatmul.mubr.f32.gmra.mxu0 %v1244
        %v1420 = vpop.f32.mrf.mxu0
        %v1421 = vadd.f32 0.0, %v1420
        %v1422 = vpop.f32.mrf.mxu0
        %v1423 = vadd.f32 0.0, %v1422
        %1424 = vmatprep.mubr.f32.mxu0 0.0
        %1425 = vmatmul.mubr.f32.gmra.mxu0 %v1247
        %v1426 = vpop.f32.mrf.mxu0
        %v1427 = vadd.f32 0.0, %v1426
        %v1428 = vpop.f32.mrf.mxu0
        %v1429 = vadd.f32 0.0, %v1428
        %1430 = vmatprep.mubr.f32.mxu0 0.0
        %1431 = vmatmul.mubr.f32.gmra.mxu0 %v1250
        %v1432 = vpop.f32.mrf.mxu0
        %v1433 = vadd.f32 0.0, %v1432
        %v1434 = vpop.f32.mrf.mxu0
        %v1435 = vadd.f32 0.0, %v1434
        %1436 = vmatprep.mubr.f32.mxu0 0.0
        %1437 = vmatmul.mubr.f32.gmra.mxu0 %v1253
        %v1438 = vpop.f32.mrf.mxu0
        %v1439 = vadd.f32 0.0, %v1438
        %v1440 = vpop.f32.mrf.mxu0
        %v1441 = vadd.f32 0.0, %v1440
        %1442 = vmatprep.mubr.f32.mxu0 0.0
        %1443 = vmatmul.mubr.f32.gmra.mxu0 %v1256
        %v1444 = vpop.f32.mrf.mxu0
        %v1445 = vadd.f32 0.0, %v1444
        %v1446 = vpop.f32.mrf.mxu0
        %v1447 = vadd.f32 0.0, %v1446
        %1448 = vmatprep.mubr.f32.mxu0 0.0
        %1449 = vmatmul.mubr.f32.gmra.mxu0 %v1259
        %v1450 = vpop.f32.mrf.mxu0
        %v1451 = vadd.f32 0.0, %v1450
        %v1452 = vpop.f32.mrf.mxu0
        %v1453 = vadd.f32 0.0, %v1452
        %1454 = vmatprep.mubr.f32.mxu0 0.0
        %1455 = vmatmul.mubr.f32.gmra.mxu0 %v1262
        %v1456 = vpop.f32.mrf.mxu0
        %v1457 = vadd.f32 0.0, %v1456
        %v1458 = vpop.f32.mrf.mxu0
        %v1459 = vadd.f32 0.0, %v1458
        %1460 = vmatprep.mubr.f32.mxu0 0.0
        %1461 = vmatmul.mubr.f32.gmra.mxu0 %v1265
        %v1462 = vpop.f32.mrf.mxu0
        %v1463 = vadd.f32 0.0, %v1462
        %v1464 = vpop.f32.mrf.mxu0
        %v1465 = vadd.f32 0.0, %v1464
        %1466 = vmatprep.mubr.f32.mxu0 0.0
        %1467 = vmatmul.mubr.f32.gmra.mxu0 %v1268
        %v1468 = vpop.f32.mrf.mxu0
        %v1469 = vadd.f32 0.0, %v1468
        %v1470 = vpop.f32.mrf.mxu0
        %v1471 = vadd.f32 0.0, %v1470
        %1472 = vmatprep.mubr.f32.mxu0 0.0
        %1473 = vmatmul.mubr.f32.gmra.mxu0 %v1271
        %v1474 = vpop.f32.mrf.mxu0
        %v1475 = vadd.f32 0.0, %v1474
        %v1476 = vpop.f32.mrf.mxu0
        %v1477 = vadd.f32 0.0, %v1476
        %1478 = vmatprep.mubr.f32.mxu0 0.0
        %1479 = vmatmul.mubr.f32.gmra.mxu0 %v1274
        %v1480 = vpop.f32.mrf.mxu0
        %v1481 = vadd.f32 0.0, %v1480
        %v1482 = vpop.f32.mrf.mxu0
        %v1483 = vadd.f32 0.0, %v1482
        %1484 = vmatprep.mubr.f32.mxu0 0.0
        %1485 = vmatmul.mubr.f32.gmra.mxu0 %v1277
        %v1486 = vpop.f32.mrf.mxu0
        %v1487 = vadd.f32 0.0, %v1486
        %v1488 = vpop.f32.mrf.mxu0
        %v1489 = vadd.f32 0.0, %v1488
        %1490 = vmatprep.mubr.f32.mxu0 0.0
        %1491 = vmatmul.mubr.f32.gmra.mxu0 %v1280
        %v1492 = vpop.f32.mrf.mxu0
        %v1493 = vadd.f32 0.0, %v1492
        %v1494 = vpop.f32.mrf.mxu0
        %v1495 = vadd.f32 0.0, %v1494
        %1496 = vmatprep.mubr.f32.mxu0 0.0
        %1497 = vmatmul.mubr.f32.gmra.mxu0 %v1283
        %v1498 = vpop.f32.mrf.mxu0
        %v1499 = vadd.f32 0.0, %v1498
        %v1500 = vpop.f32.mrf.mxu0
        %v1501 = vadd.f32 0.0, %v1500
        %1502 = vmatprep.mubr.f32.mxu0 0.0
        %1503 = vmatmul.mubr.f32.gmra.mxu0 %v1286
        %v1504 = vpop.f32.mrf.mxu0
        %v1505 = vadd.f32 0.0, %v1504
        %v1506 = vpop.f32.mrf.mxu0
        %v1507 = vadd.f32 0.0, %v1506
        %1508 = vmatprep.mubr.f32.mxu0 0.0
        %1509 = vmatmul.mubr.f32.gmra.mxu0 %v1289
        %v1510 = vpop.f32.mrf.mxu0
        %v1511 = vadd.f32 0.0, %v1510
        %v1512 = vpop.f32.mrf.mxu0
        %v1513 = vadd.f32 0.0, %v1512
        %1514 = vmatprep.mubr.f32.mxu0 0.0
        %1515 = vmatmul.mubr.f32.gmra.mxu0 %v1292
        %v1516 = vpop.f32.mrf.mxu0
        %v1517 = vadd.f32 0.0, %v1516
        %v1518 = vpop.f32.mrf.mxu0
        %v1519 = vadd.f32 0.0, %v1518
        %1520 = vmatprep.mubr.f32.mxu0 0.0
        %1521 = vmatmul.mubr.f32.gmra.mxu0 %v1295
        %v1522 = vpop.f32.mrf.mxu0
        %v1523 = vadd.f32 0.0, %v1522
        %v1524 = vpop.f32.mrf.mxu0
        %v1525 = vadd.f32 0.0, %v1524
        %1526 = vmatprep.mubr.f32.mxu0 0.0
        %1527 = vmatmul.mubr.f32.gmra.mxu0 %v1298
        %v1528 = vpop.f32.mrf.mxu0
        %v1529 = vadd.f32 0.0, %v1528
        %v1530 = vpop.f32.mrf.mxu0
        %v1531 = vadd.f32 0.0, %v1530
        %1532 = vmatprep.mubr.f32.mxu0 0.0
        %1533 = vmatmul.mubr.f32.gmra.mxu0 %v1301
        %v1534 = vpop.f32.mrf.mxu0
        %v1535 = vadd.f32 0.0, %v1534
        %v1536 = vpop.f32.mrf.mxu0
        %v1537 = vadd.f32 0.0, %v1536
        %1538 = vmatprep.mubr.f32.mxu0 0.0
        %1539 = vmatmul.mubr.f32.gmra.mxu0 %v1304
        %v1540 = vpop.f32.mrf.mxu0
        %v1541 = vadd.f32 0.0, %v1540
        %v1542 = vpop.f32.mrf.mxu0
        %v1543 = vadd.f32 0.0, %v1542
        %1544 = vmatprep.mubr.f32.mxu0 0.0
        %1545 = vmatmul.mubr.f32.gmra.mxu0 %v1307
        %v1546 = vpop.f32.mrf.mxu0
        %v1547 = vadd.f32 0.0, %v1546
        %v1548 = vpop.f32.mrf.mxu0
        %v1549 = vadd.f32 0.0, %v1548
        %1550 = vmatprep.mubr.f32.mxu0 0.0
        %1551 = vmatmul.mubr.f32.gmra.mxu0 %v1310
        %v1552 = vpop.f32.mrf.mxu0
        %v1553 = vadd.f32 0.0, %v1552
        %v1554 = vpop.f32.mrf.mxu0
        %v1555 = vadd.f32 0.0, %v1554
        %1556 = vmatprep.mubr.f32.mxu0 0.0
        %1557 = vmatmul.mubr.f32.gmra.mxu0 %v1313
        %v1558 = vpop.f32.mrf.mxu0
        %v1559 = vadd.f32 0.0, %v1558
        %v1560 = vpop.f32.mrf.mxu0
        %v1561 = vadd.f32 0.0, %v1560
        %1562 = vmatprep.mubr.f32.mxu0 0.0
        %1563 = vmatmul.mubr.f32.gmra.mxu0 %v1316
        %v1564 = vpop.f32.mrf.mxu0
        %v1565 = vadd.f32 0.0, %v1564
        %v1566 = vpop.f32.mrf.mxu0
        %v1567 = vadd.f32 0.0, %v1566
        %1568 = vmatprep.mubr.f32.mxu0 0.0
        %1569 = vmatmul.mubr.f32.gmra.mxu0 %v1319
        %v1570 = vpop.f32.mrf.mxu0
        %v1571 = vadd.f32 0.0, %v1570
        %v1572 = vpop.f32.mrf.mxu0
        %v1573 = vadd.f32 0.0, %v1572
        %1574 = vmatprep.mubr.f32.mxu0 0.0
        %1575 = vmatmul.mubr.f32.gmra.mxu0 %v1322
        %v1576 = vpop.f32.mrf.mxu0
        %v1577 = vadd.f32 0.0, %v1576
        %v1578 = vpop.f32.mrf.mxu0
        %v1579 = vadd.f32 0.0, %v1578
        %1580 = vdwg.mxu0
        %v1581 = vadd.f32 %v1027, %v1391
        %v1582 = vadd.f32 %v1029, %v1393
        %v1583 = vadd.f32 %v1033, %v1397
        %v1584 = vadd.f32 %v1035, %v1399
        %v1585 = vadd.f32 %v1039, %v1403
        %v1586 = vadd.f32 %v1041, %v1405
        %v1587 = vadd.f32 %v1045, %v1409
        %v1588 = vadd.f32 %v1047, %v1411
        %v1589 = vadd.f32 %v1051, %v1415
        %v1590 = vadd.f32 %v1053, %v1417
        %v1591 = vadd.f32 %v1057, %v1421
        %v1592 = vadd.f32 %v1059, %v1423
        %v1593 = vadd.f32 %v1063, %v1427
        %v1594 = vadd.f32 %v1065, %v1429
        %v1595 = vadd.f32 %v1069, %v1433
        %v1596 = vadd.f32 %v1071, %v1435
        %v1597 = vadd.f32 %v1075, %v1439
        %v1598 = vadd.f32 %v1077, %v1441
        %v1599 = vadd.f32 %v1081, %v1445
        %v1600 = vadd.f32 %v1083, %v1447
        %v1601 = vadd.f32 %v1087, %v1451
        %v1602 = vadd.f32 %v1089, %v1453
        %v1603 = vadd.f32 %v1093, %v1457
        %v1604 = vadd.f32 %v1095, %v1459
        %v1605 = vadd.f32 %v1099, %v1463
        %v1606 = vadd.f32 %v1101, %v1465
        %v1607 = vadd.f32 %v1105, %v1469
        %v1608 = vadd.f32 %v1107, %v1471
        %v1609 = vadd.f32 %v1111, %v1475
        %v1610 = vadd.f32 %v1113, %v1477
        %v1611 = vadd.f32 %v1117, %v1481
        %v1612 = vadd.f32 %v1119, %v1483
        %v1613 = vadd.f32 %v1123, %v1487
        %v1614 = vadd.f32 %v1125, %v1489
        %v1615 = vadd.f32 %v1129, %v1493
        %v1616 = vadd.f32 %v1131, %v1495
        %v1617 = vadd.f32 %v1135, %v1499
        %v1618 = vadd.f32 %v1137, %v1501
        %v1619 = vadd.f32 %v1141, %v1505
        %v1620 = vadd.f32 %v1143, %v1507
        %v1621 = vadd.f32 %v1147, %v1511
        %v1622 = vadd.f32 %v1149, %v1513
        %v1623 = vadd.f32 %v1153, %v1517
        %v1624 = vadd.f32 %v1155, %v1519
        %v1625 = vadd.f32 %v1159, %v1523
        %v1626 = vadd.f32 %v1161, %v1525
        %v1627 = vadd.f32 %v1165, %v1529
        %v1628 = vadd.f32 %v1167, %v1531
        %v1629 = vadd.f32 %v1171, %v1535
        %v1630 = vadd.f32 %v1173, %v1537
        %v1631 = vadd.f32 %v1177, %v1541
        %v1632 = vadd.f32 %v1179, %v1543
        %v1633 = vadd.f32 %v1183, %v1547
        %v1634 = vadd.f32 %v1185, %v1549
        %v1635 = vadd.f32 %v1189, %v1553
        %v1636 = vadd.f32 %v1191, %v1555
        %v1637 = vadd.f32 %v1195, %v1559
        %v1638 = vadd.f32 %v1197, %v1561
        %v1639 = vadd.f32 %v1201, %v1565
        %v1640 = vadd.f32 %v1203, %v1567
        %v1641 = vadd.f32 %v1207, %v1571
        %v1642 = vadd.f32 %v1209, %v1573
        %v1643 = vadd.f32 %v1213, %v1577
        %v1644 = vadd.f32 %v1215, %v1579
        %s1645 = scalar_lea.vmem [#allocation6], 384
        %v1646 = vld [vmem:[%s1645] sm:$0xff]
        %v1647 = vld [vmem:[%s1645 + $0x8] sm:$0xff]
        %v1648 = vld [vmem:[%s1645 + $0x10] sm:$0xff]
        %v1649 = vld [vmem:[%s1645 + $0x18] sm:$0xff]
        %v1650 = vld [vmem:[%s1645 + $0x20] sm:$0xff]
        %v1651 = vld [vmem:[%s1645 + $0x28] sm:$0xff]
        %v1652 = vld [vmem:[%s1645 + $0x30] sm:$0xff]
        %v1653 = vld [vmem:[%s1645 + $0x38] sm:$0xff]
        %v1654 = vld [vmem:[%s1645 + $0x40] sm:$0xff]
        %v1655 = vld [vmem:[%s1645 + $0x48] sm:$0xff]
        %v1656 = vld [vmem:[%s1645 + $0x50] sm:$0xff]
        %v1657 = vld [vmem:[%s1645 + $0x58] sm:$0xff]
        %v1658 = vld [vmem:[%s1645 + $0x60] sm:$0xff]
        %v1659 = vld [vmem:[%s1645 + $0x68] sm:$0xff]
        %v1660 = vld [vmem:[%s1645 + $0x70] sm:$0xff]
        %v1661 = vld [vmem:[%s1645 + $0x78] sm:$0xff]
        %v1663 = vsel %vm519, %v375, 0
        %v1666 = vsel %vm519, %v376, 0
        %1668 = vmatprep.subr.mxu0 0.0
        %1669 = vmatpush1.msra.mxu0 0.0
        %1670 = vmatprep.subr.mxu0 0.0
        %1671 = vmatpush1.msra.mxu0 0.0
        %1672 = vmatprep.subr.mxu0 0.0
        %1673 = vmatpush1.msra.mxu0 0.0
        %1674 = vmatprep.subr.mxu0 0.0
        %1675 = vmatpush1.msra.mxu0 0.0
        %1676 = vmatprep.subr.mxu0 0.0
        %1677 = vmatpush1.msra.mxu0 0.0
        %1678 = vmatprep.subr.mxu0 0.0
        %1679 = vmatpush1.msra.mxu0 0.0
        %1680 = vmatprep.subr.mxu0 0.0
        %1681 = vmatpush1.msra.mxu0 0.0
        %1682 = vmatprep.subr.mxu0 0.0
        %1683 = vmatpush1.msra.mxu0 0.0
        %1684 = vmatprep.subr.mxu0 %v1661
        %1685 = vmatpush1.msra.mxu0 %v1660
        %1686 = vmatprep.subr.mxu0 %v1659
        %1687 = vmatpush1.msra.mxu0 %v1658
        %1688 = vmatprep.subr.mxu0 %v1657
        %1689 = vmatpush1.msra.mxu0 %v1656
        %1690 = vmatprep.subr.mxu0 %v1655
        %1691 = vmatpush1.msra.mxu0 %v1654
        %1692 = vmatprep.subr.mxu0 %v1653
        %1693 = vmatpush1.msra.mxu0 %v1652
        %1694 = vmatprep.subr.mxu0 %v1651
        %1695 = vmatpush1.msra.mxu0 %v1650
        %1696 = vmatprep.subr.mxu0 %v1649
        %1697 = vmatpush1.msra.mxu0 %v1648
        %1698 = vmatprep.subr.mxu0 %v1647
        %1699 = vmatpush1.msra.mxu0 %v1646
        %1700 = vmatprep.subr.mxu0 0.0
        %1701 = vmatpush2.msra.mxu0 0.0
        %1702 = vmatprep.subr.mxu0 0.0
        %1703 = vmatpush2.msra.mxu0 0.0
        %1704 = vmatprep.subr.mxu0 0.0
        %1705 = vmatpush2.msra.mxu0 0.0
        %1706 = vmatprep.subr.mxu0 0.0
        %1707 = vmatpush2.msra.mxu0 0.0
        %1708 = vmatprep.subr.mxu0 0.0
        %1709 = vmatpush2.msra.mxu0 0.0
        %1710 = vmatprep.subr.mxu0 0.0
        %1711 = vmatpush2.msra.mxu0 0.0
        %1712 = vmatprep.subr.mxu0 0.0
        %1713 = vmatpush2.msra.mxu0 0.0
        %1714 = vmatprep.subr.mxu0 0.0
        %1715 = vmatpush2.msra.mxu0 0.0
        %1716 = vmatprep.subr.mxu0 0.0
        %1717 = vmatpush2.msra.mxu0 0.0
        %1718 = vmatprep.subr.mxu0 0.0
        %1719 = vmatpush2.msra.mxu0 0.0
        %1720 = vmatprep.subr.mxu0 0.0
        %1721 = vmatpush2.msra.mxu0 0.0
        %1722 = vmatprep.subr.mxu0 0.0
        %1723 = vmatpush2.msra.mxu0 0.0
        %1724 = vmatprep.subr.mxu0 0.0
        %1725 = vmatpush2.msra.mxu0 0.0
        %1726 = vmatprep.subr.mxu0 0.0
        %1727 = vmatpush2.msra.mxu0 0.0
        %1728 = vmatprep.subr.mxu0 0.0
        %1729 = vmatpush2.msra.mxu0 0.0
        %1730 = vmatprep.subr.mxu0 0.0
        %1731 = vmatpush2.msra.mxu0 0.0
        %1732 = vmatprep.mubr.f32.mxu0 0.0
        %1733 = vmatmul.mubr.f32.gmra.mxu0 %v871
        %v1734 = vpop.f32.mrf.mxu0
        %v1735 = vadd.f32 0.0, %v1734
        %v1736 = vpop.f32.mrf.mxu0
        %v1737 = vadd.f32 0.0, %v1736
        %1738 = vmatprep.mubr.f32.mxu0 0.0
        %1739 = vmatmul.mubr.f32.gmra.mxu0 %v874
        %v1740 = vpop.f32.mrf.mxu0
        %v1741 = vadd.f32 0.0, %v1740
        %v1742 = vpop.f32.mrf.mxu0
        %v1743 = vadd.f32 0.0, %v1742
        %1744 = vmatprep.mubr.f32.mxu0 0.0
        %1745 = vmatmul.mubr.f32.gmra.mxu0 %v877
        %v1746 = vpop.f32.mrf.mxu0
        %v1747 = vadd.f32 0.0, %v1746
        %v1748 = vpop.f32.mrf.mxu0
        %v1749 = vadd.f32 0.0, %v1748
        %1750 = vmatprep.mubr.f32.mxu0 0.0
        %1751 = vmatmul.mubr.f32.gmra.mxu0 %v880
        %v1752 = vpop.f32.mrf.mxu0
        %v1753 = vadd.f32 0.0, %v1752
        %v1754 = vpop.f32.mrf.mxu0
        %v1755 = vadd.f32 0.0, %v1754
        %1756 = vmatprep.mubr.f32.mxu0 0.0
        %1757 = vmatmul.mubr.f32.gmra.mxu0 %v883
        %v1758 = vpop.f32.mrf.mxu0
        %v1759 = vadd.f32 0.0, %v1758
        %v1760 = vpop.f32.mrf.mxu0
        %v1761 = vadd.f32 0.0, %v1760
        %1762 = vmatprep.mubr.f32.mxu0 0.0
        %1763 = vmatmul.mubr.f32.gmra.mxu0 %v886
        %v1764 = vpop.f32.mrf.mxu0
        %v1765 = vadd.f32 0.0, %v1764
        %v1766 = vpop.f32.mrf.mxu0
        %v1767 = vadd.f32 0.0, %v1766
        %1768 = vmatprep.mubr.f32.mxu0 0.0
        %1769 = vmatmul.mubr.f32.gmra.mxu0 %v889
        %v1770 = vpop.f32.mrf.mxu0
        %v1771 = vadd.f32 0.0, %v1770
        %v1772 = vpop.f32.mrf.mxu0
        %v1773 = vadd.f32 0.0, %v1772
        %1774 = vmatprep.mubr.f32.mxu0 0.0
        %1775 = vmatmul.mubr.f32.gmra.mxu0 %v892
        %v1776 = vpop.f32.mrf.mxu0
        %v1777 = vadd.f32 0.0, %v1776
        %v1778 = vpop.f32.mrf.mxu0
        %v1779 = vadd.f32 0.0, %v1778
        %1780 = vmatprep.mubr.f32.mxu0 0.0
        %1781 = vmatmul.mubr.f32.gmra.mxu0 %v895
        %v1782 = vpop.f32.mrf.mxu0
        %v1783 = vadd.f32 0.0, %v1782
        %v1784 = vpop.f32.mrf.mxu0
        %v1785 = vadd.f32 0.0, %v1784
        %1786 = vmatprep.mubr.f32.mxu0 0.0
        %1787 = vmatmul.mubr.f32.gmra.mxu0 %v898
        %v1788 = vpop.f32.mrf.mxu0
        %v1789 = vadd.f32 0.0, %v1788
        %v1790 = vpop.f32.mrf.mxu0
        %v1791 = vadd.f32 0.0, %v1790
        %1792 = vmatprep.mubr.f32.mxu0 0.0
        %1793 = vmatmul.mubr.f32.gmra.mxu0 %v901
        %v1794 = vpop.f32.mrf.mxu0
        %v1795 = vadd.f32 0.0, %v1794
        %v1796 = vpop.f32.mrf.mxu0
        %v1797 = vadd.f32 0.0, %v1796
        %1798 = vmatprep.mubr.f32.mxu0 0.0
        %1799 = vmatmul.mubr.f32.gmra.mxu0 %v904
        %v1800 = vpop.f32.mrf.mxu0
        %v1801 = vadd.f32 0.0, %v1800
        %v1802 = vpop.f32.mrf.mxu0
        %v1803 = vadd.f32 0.0, %v1802
        %1804 = vmatprep.mubr.f32.mxu0 0.0
        %1805 = vmatmul.mubr.f32.gmra.mxu0 %v907
        %v1806 = vpop.f32.mrf.mxu0
        %v1807 = vadd.f32 0.0, %v1806
        %v1808 = vpop.f32.mrf.mxu0
        %v1809 = vadd.f32 0.0, %v1808
        %1810 = vmatprep.mubr.f32.mxu0 0.0
        %1811 = vmatmul.mubr.f32.gmra.mxu0 %v910
        %v1812 = vpop.f32.mrf.mxu0
        %v1813 = vadd.f32 0.0, %v1812
        %v1814 = vpop.f32.mrf.mxu0
        %v1815 = vadd.f32 0.0, %v1814
        %1816 = vmatprep.mubr.f32.mxu0 0.0
        %1817 = vmatmul.mubr.f32.gmra.mxu0 %v913
        %v1818 = vpop.f32.mrf.mxu0
        %v1819 = vadd.f32 0.0, %v1818
        %v1820 = vpop.f32.mrf.mxu0
        %v1821 = vadd.f32 0.0, %v1820
        %1822 = vmatprep.mubr.f32.mxu0 0.0
        %1823 = vmatmul.mubr.f32.gmra.mxu0 %v916
        %v1824 = vpop.f32.mrf.mxu0
        %v1825 = vadd.f32 0.0, %v1824
        %v1826 = vpop.f32.mrf.mxu0
        %v1827 = vadd.f32 0.0, %v1826
        %1828 = vmatprep.mubr.f32.mxu0 0.0
        %1829 = vmatmul.mubr.f32.gmra.mxu0 %v919
        %v1830 = vpop.f32.mrf.mxu0
        %v1831 = vadd.f32 0.0, %v1830
        %v1832 = vpop.f32.mrf.mxu0
        %v1833 = vadd.f32 0.0, %v1832
        %1834 = vmatprep.mubr.f32.mxu0 0.0
        %1835 = vmatmul.mubr.f32.gmra.mxu0 %v922
        %v1836 = vpop.f32.mrf.mxu0
        %v1837 = vadd.f32 0.0, %v1836
        %v1838 = vpop.f32.mrf.mxu0
        %v1839 = vadd.f32 0.0, %v1838
        %1840 = vmatprep.mubr.f32.mxu0 0.0
        %1841 = vmatmul.mubr.f32.gmra.mxu0 %v925
        %v1842 = vpop.f32.mrf.mxu0
        %v1843 = vadd.f32 0.0, %v1842
        %v1844 = vpop.f32.mrf.mxu0
        %v1845 = vadd.f32 0.0, %v1844
        %1846 = vmatprep.mubr.f32.mxu0 0.0
        %1847 = vmatmul.mubr.f32.gmra.mxu0 %v928
        %v1848 = vpop.f32.mrf.mxu0
        %v1849 = vadd.f32 0.0, %v1848
        %v1850 = vpop.f32.mrf.mxu0
        %v1851 = vadd.f32 0.0, %v1850
        %1852 = vmatprep.mubr.f32.mxu0 0.0
        %1853 = vmatmul.mubr.f32.gmra.mxu0 %v931
        %v1854 = vpop.f32.mrf.mxu0
        %v1855 = vadd.f32 0.0, %v1854
        %v1856 = vpop.f32.mrf.mxu0
        %v1857 = vadd.f32 0.0, %v1856
        %1858 = vmatprep.mubr.f32.mxu0 0.0
        %1859 = vmatmul.mubr.f32.gmra.mxu0 %v934
        %v1860 = vpop.f32.mrf.mxu0
        %v1861 = vadd.f32 0.0, %v1860
        %v1862 = vpop.f32.mrf.mxu0
        %v1863 = vadd.f32 0.0, %v1862
        %1864 = vmatprep.mubr.f32.mxu0 0.0
        %1865 = vmatmul.mubr.f32.gmra.mxu0 %v937
        %v1866 = vpop.f32.mrf.mxu0
        %v1867 = vadd.f32 0.0, %v1866
        %v1868 = vpop.f32.mrf.mxu0
        %v1869 = vadd.f32 0.0, %v1868
        %1870 = vmatprep.mubr.f32.mxu0 0.0
        %1871 = vmatmul.mubr.f32.gmra.mxu0 %v940
        %v1872 = vpop.f32.mrf.mxu0
        %v1873 = vadd.f32 0.0, %v1872
        %v1874 = vpop.f32.mrf.mxu0
        %v1875 = vadd.f32 0.0, %v1874
        %1876 = vmatprep.mubr.f32.mxu0 0.0
        %1877 = vmatmul.mubr.f32.gmra.mxu0 %v943
        %v1878 = vpop.f32.mrf.mxu0
        %v1879 = vadd.f32 0.0, %v1878
        %v1880 = vpop.f32.mrf.mxu0
        %v1881 = vadd.f32 0.0, %v1880
        %1882 = vmatprep.mubr.f32.mxu0 0.0
        %1883 = vmatmul.mubr.f32.gmra.mxu0 %v946
        %v1884 = vpop.f32.mrf.mxu0
        %v1885 = vadd.f32 0.0, %v1884
        %v1886 = vpop.f32.mrf.mxu0
        %v1887 = vadd.f32 0.0, %v1886
        %1888 = vmatprep.mubr.f32.mxu0 0.0
        %1889 = vmatmul.mubr.f32.gmra.mxu0 %v949
        %v1890 = vpop.f32.mrf.mxu0
        %v1891 = vadd.f32 0.0, %v1890
        %v1892 = vpop.f32.mrf.mxu0
        %v1893 = vadd.f32 0.0, %v1892
        %1894 = vmatprep.mubr.f32.mxu0 0.0
        %1895 = vmatmul.mubr.f32.gmra.mxu0 %v952
        %v1896 = vpop.f32.mrf.mxu0
        %v1897 = vadd.f32 0.0, %v1896
        %v1898 = vpop.f32.mrf.mxu0
        %v1899 = vadd.f32 0.0, %v1898
        %1900 = vmatprep.mubr.f32.mxu0 0.0
        %1901 = vmatmul.mubr.f32.gmra.mxu0 %v955
        %v1902 = vpop.f32.mrf.mxu0
        %v1903 = vadd.f32 0.0, %v1902
        %v1904 = vpop.f32.mrf.mxu0
        %v1905 = vadd.f32 0.0, %v1904
        %1906 = vmatprep.mubr.f32.mxu0 0.0
        %1907 = vmatmul.mubr.f32.gmra.mxu0 %v958
        %v1908 = vpop.f32.mrf.mxu0
        %v1909 = vadd.f32 0.0, %v1908
        %v1910 = vpop.f32.mrf.mxu0
        %v1911 = vadd.f32 0.0, %v1910
        %1912 = vmatprep.mubr.f32.mxu0 0.0
        %1913 = vmatmul.mubr.f32.gmra.mxu0 %v1663
        %v1914 = vpop.f32.mrf.mxu0
        %v1915 = vadd.f32 0.0, %v1914
        %v1916 = vpop.f32.mrf.mxu0
        %v1917 = vadd.f32 0.0, %v1916
        %1918 = vmatprep.mubr.f32.mxu0 0.0
        %1919 = vmatmul.mubr.f32.gmra.mxu0 %v1666
        %v1920 = vpop.f32.mrf.mxu0
        %v1921 = vadd.f32 0.0, %v1920
        %v1922 = vpop.f32.mrf.mxu0
        %v1923 = vadd.f32 0.0, %v1922
        %1924 = vdwg.mxu0
        %v1925 = vadd.f32 %v1581, %v1735
        %v1926 = vadd.f32 %v1582, %v1737
        %v1927 = vadd.f32 %v1583, %v1741
        %v1928 = vadd.f32 %v1584, %v1743
        %v1929 = vadd.f32 %v1585, %v1747
        %v1930 = vadd.f32 %v1586, %v1749
        %v1931 = vadd.f32 %v1587, %v1753
        %v1932 = vadd.f32 %v1588, %v1755
        %v1933 = vadd.f32 %v1589, %v1759
        %v1934 = vadd.f32 %v1590, %v1761
        %v1935 = vadd.f32 %v1591, %v1765
        %v1936 = vadd.f32 %v1592, %v1767
        %v1937 = vadd.f32 %v1593, %v1771
        %v1938 = vadd.f32 %v1594, %v1773
        %v1939 = vadd.f32 %v1595, %v1777
        %v1940 = vadd.f32 %v1596, %v1779
        %v1941 = vadd.f32 %v1597, %v1783
        %v1942 = vadd.f32 %v1598, %v1785
        %v1943 = vadd.f32 %v1599, %v1789
        %v1944 = vadd.f32 %v1600, %v1791
        %v1945 = vadd.f32 %v1601, %v1795
        %v1946 = vadd.f32 %v1602, %v1797
        %v1947 = vadd.f32 %v1603, %v1801
        %v1948 = vadd.f32 %v1604, %v1803
        %v1949 = vadd.f32 %v1605, %v1807
        %v1950 = vadd.f32 %v1606, %v1809
        %v1951 = vadd.f32 %v1607, %v1813
        %v1952 = vadd.f32 %v1608, %v1815
        %v1953 = vadd.f32 %v1609, %v1819
        %v1954 = vadd.f32 %v1610, %v1821
        %v1955 = vadd.f32 %v1611, %v1825
        %v1956 = vadd.f32 %v1612, %v1827
        %v1957 = vadd.f32 %v1613, %v1831
        %v1958 = vadd.f32 %v1614, %v1833
        %v1959 = vadd.f32 %v1615, %v1837
        %v1960 = vadd.f32 %v1616, %v1839
        %v1961 = vadd.f32 %v1617, %v1843
        %v1962 = vadd.f32 %v1618, %v1845
        %v1963 = vadd.f32 %v1619, %v1849
        %v1964 = vadd.f32 %v1620, %v1851
        %v1965 = vadd.f32 %v1621, %v1855
        %v1966 = vadd.f32 %v1622, %v1857
        %v1967 = vadd.f32 %v1623, %v1861
        %v1968 = vadd.f32 %v1624, %v1863
        %v1969 = vadd.f32 %v1625, %v1867
        %v1970 = vadd.f32 %v1626, %v1869
        %v1971 = vadd.f32 %v1627, %v1873
        %v1972 = vadd.f32 %v1628, %v1875
        %v1973 = vadd.f32 %v1629, %v1879
        %v1974 = vadd.f32 %v1630, %v1881
        %v1975 = vadd.f32 %v1631, %v1885
        %v1976 = vadd.f32 %v1632, %v1887
        %v1977 = vadd.f32 %v1633, %v1891
        %v1978 = vadd.f32 %v1634, %v1893
        %v1979 = vadd.f32 %v1635, %v1897
        %v1980 = vadd.f32 %v1636, %v1899
        %v1981 = vadd.f32 %v1637, %v1903
        %v1982 = vadd.f32 %v1638, %v1905
        %v1983 = vadd.f32 %v1639, %v1909
        %v1984 = vadd.f32 %v1640, %v1911
        %v1985 = vadd.f32 %v1641, %v1915
        %v1986 = vadd.f32 %v1642, %v1917
        %v1987 = vadd.f32 %v1643, %v1921
        %v1988 = vadd.f32 %v1644, %v1923
        %s1989 = scalar_lea.vmem [#allocation6], 512
        %v1990 = vld [vmem:[%s1989] sm:$0xff]
        %v1991 = vld [vmem:[%s1989 + $0x8] sm:$0xff]
        %v1992 = vld [vmem:[%s1989 + $0x10] sm:$0xff]
        %v1993 = vld [vmem:[%s1989 + $0x18] sm:$0xff]
        %v1994 = vld [vmem:[%s1989 + $0x20] sm:$0xff]
        %v1995 = vld [vmem:[%s1989 + $0x28] sm:$0xff]
        %v1996 = vld [vmem:[%s1989 + $0x30] sm:$0xff]
        %v1997 = vld [vmem:[%s1989 + $0x38] sm:$0xff]
        %v1998 = vld [vmem:[%s1989 + $0x40] sm:$0xff]
        %v1999 = vld [vmem:[%s1989 + $0x48] sm:$0xff]
        %v2000 = vld [vmem:[%s1989 + $0x50] sm:$0xff]
        %v2001 = vld [vmem:[%s1989 + $0x58] sm:$0xff]
        %v2002 = vld [vmem:[%s1989 + $0x60] sm:$0xff]
        %v2003 = vld [vmem:[%s1989 + $0x68] sm:$0xff]
        %v2004 = vld [vmem:[%s1989 + $0x70] sm:$0xff]
        %v2005 = vld [vmem:[%s1989 + $0x78] sm:$0xff]
        %v2007 = vsel %vm519, %v263, 0
        %v2010 = vsel %vm519, %v264, 0
        %2012 = vmatprep.subr.mxu0 0.0
        %2013 = vmatpush1.msra.mxu0 0.0
        %2014 = vmatprep.subr.mxu0 0.0
        %2015 = vmatpush1.msra.mxu0 0.0
        %2016 = vmatprep.subr.mxu0 0.0
        %2017 = vmatpush1.msra.mxu0 0.0
        %2018 = vmatprep.subr.mxu0 0.0
        %2019 = vmatpush1.msra.mxu0 0.0
        %2020 = vmatprep.subr.mxu0 0.0
        %2021 = vmatpush1.msra.mxu0 0.0
        %2022 = vmatprep.subr.mxu0 0.0
        %2023 = vmatpush1.msra.mxu0 0.0
        %2024 = vmatprep.subr.mxu0 0.0
        %2025 = vmatpush1.msra.mxu0 0.0
        %2026 = vmatprep.subr.mxu0 0.0
        %2027 = vmatpush1.msra.mxu0 0.0
        %2028 = vmatprep.subr.mxu0 %v2005
        %2029 = vmatpush1.msra.mxu0 %v2004
        %2030 = vmatprep.subr.mxu0 %v2003
        %2031 = vmatpush1.msra.mxu0 %v2002
        %2032 = vmatprep.subr.mxu0 %v2001
        %2033 = vmatpush1.msra.mxu0 %v2000
        %2034 = vmatprep.subr.mxu0 %v1999
        %2035 = vmatpush1.msra.mxu0 %v1998
        %2036 = vmatprep.subr.mxu0 %v1997
        %2037 = vmatpush1.msra.mxu0 %v1996
        %2038 = vmatprep.subr.mxu0 %v1995
        %2039 = vmatpush1.msra.mxu0 %v1994
        %2040 = vmatprep.subr.mxu0 %v1993
        %2041 = vmatpush1.msra.mxu0 %v1992
        %2042 = vmatprep.subr.mxu0 %v1991
        %2043 = vmatpush1.msra.mxu0 %v1990
        %2044 = vmatprep.subr.mxu0 0.0
        %2045 = vmatpush2.msra.mxu0 0.0
        %2046 = vmatprep.subr.mxu0 0.0
        %2047 = vmatpush2.msra.mxu0 0.0
        %2048 = vmatprep.subr.mxu0 0.0
        %2049 = vmatpush2.msra.mxu0 0.0
        %2050 = vmatprep.subr.mxu0 0.0
        %2051 = vmatpush2.msra.mxu0 0.0
        %2052 = vmatprep.subr.mxu0 0.0
        %2053 = vmatpush2.msra.mxu0 0.0
        %2054 = vmatprep.subr.mxu0 0.0
        %2055 = vmatpush2.msra.mxu0 0.0
        %2056 = vmatprep.subr.mxu0 0.0
        %2057 = vmatpush2.msra.mxu0 0.0
        %2058 = vmatprep.subr.mxu0 0.0
        %2059 = vmatpush2.msra.mxu0 0.0
        %2060 = vmatprep.subr.mxu0 0.0
        %2061 = vmatpush2.msra.mxu0 0.0
        %2062 = vmatprep.subr.mxu0 0.0
        %2063 = vmatpush2.msra.mxu0 0.0
        %2064 = vmatprep.subr.mxu0 0.0
        %2065 = vmatpush2.msra.mxu0 0.0
        %2066 = vmatprep.subr.mxu0 0.0
        %2067 = vmatpush2.msra.mxu0 0.0
        %2068 = vmatprep.subr.mxu0 0.0
        %2069 = vmatpush2.msra.mxu0 0.0
        %2070 = vmatprep.subr.mxu0 0.0
        %2071 = vmatpush2.msra.mxu0 0.0
        %2072 = vmatprep.subr.mxu0 0.0
        %2073 = vmatpush2.msra.mxu0 0.0
        %2074 = vmatprep.subr.mxu0 0.0
        %2075 = vmatpush2.msra.mxu0 0.0
        %2076 = vmatprep.mubr.f32.mxu0 0.0
        %2077 = vmatmul.mubr.f32.gmra.mxu0 %v524
        %v2078 = vpop.f32.mrf.mxu0
        %v2079 = vadd.f32 0.0, %v2078
        %v2080 = vpop.f32.mrf.mxu0
        %v2081 = vadd.f32 0.0, %v2080
        %2082 = vmatprep.mubr.f32.mxu0 0.0
        %2083 = vmatmul.mubr.f32.gmra.mxu0 %v527
        %v2084 = vpop.f32.mrf.mxu0
        %v2085 = vadd.f32 0.0, %v2084
        %v2086 = vpop.f32.mrf.mxu0
        %v2087 = vadd.f32 0.0, %v2086
        %2088 = vmatprep.mubr.f32.mxu0 0.0
        %2089 = vmatmul.mubr.f32.gmra.mxu0 %v530
        %v2090 = vpop.f32.mrf.mxu0
        %v2091 = vadd.f32 0.0, %v2090
        %v2092 = vpop.f32.mrf.mxu0
        %v2093 = vadd.f32 0.0, %v2092
        %2094 = vmatprep.mubr.f32.mxu0 0.0
        %2095 = vmatmul.mubr.f32.gmra.mxu0 %v533
        %v2096 = vpop.f32.mrf.mxu0
        %v2097 = vadd.f32 0.0, %v2096
        %v2098 = vpop.f32.mrf.mxu0
        %v2099 = vadd.f32 0.0, %v2098
        %2100 = vmatprep.mubr.f32.mxu0 0.0
        %2101 = vmatmul.mubr.f32.gmra.mxu0 %v536
        %v2102 = vpop.f32.mrf.mxu0
        %v2103 = vadd.f32 0.0, %v2102
        %v2104 = vpop.f32.mrf.mxu0
        %v2105 = vadd.f32 0.0, %v2104
        %2106 = vmatprep.mubr.f32.mxu0 0.0
        %2107 = vmatmul.mubr.f32.gmra.mxu0 %v539
        %v2108 = vpop.f32.mrf.mxu0
        %v2109 = vadd.f32 0.0, %v2108
        %v2110 = vpop.f32.mrf.mxu0
        %v2111 = vadd.f32 0.0, %v2110
        %2112 = vmatprep.mubr.f32.mxu0 0.0
        %2113 = vmatmul.mubr.f32.gmra.mxu0 %v542
        %v2114 = vpop.f32.mrf.mxu0
        %v2115 = vadd.f32 0.0, %v2114
        %v2116 = vpop.f32.mrf.mxu0
        %v2117 = vadd.f32 0.0, %v2116
        %2118 = vmatprep.mubr.f32.mxu0 0.0
        %2119 = vmatmul.mubr.f32.gmra.mxu0 %v545
        %v2120 = vpop.f32.mrf.mxu0
        %v2121 = vadd.f32 0.0, %v2120
        %v2122 = vpop.f32.mrf.mxu0
        %v2123 = vadd.f32 0.0, %v2122
        %2124 = vmatprep.mubr.f32.mxu0 0.0
        %2125 = vmatmul.mubr.f32.gmra.mxu0 %v548
        %v2126 = vpop.f32.mrf.mxu0
        %v2127 = vadd.f32 0.0, %v2126
        %v2128 = vpop.f32.mrf.mxu0
        %v2129 = vadd.f32 0.0, %v2128
        %2130 = vmatprep.mubr.f32.mxu0 0.0
        %2131 = vmatmul.mubr.f32.gmra.mxu0 %v551
        %v2132 = vpop.f32.mrf.mxu0
        %v2133 = vadd.f32 0.0, %v2132
        %v2134 = vpop.f32.mrf.mxu0
        %v2135 = vadd.f32 0.0, %v2134
        %2136 = vmatprep.mubr.f32.mxu0 0.0
        %2137 = vmatmul.mubr.f32.gmra.mxu0 %v554
        %v2138 = vpop.f32.mrf.mxu0
        %v2139 = vadd.f32 0.0, %v2138
        %v2140 = vpop.f32.mrf.mxu0
        %v2141 = vadd.f32 0.0, %v2140
        %2142 = vmatprep.mubr.f32.mxu0 0.0
        %2143 = vmatmul.mubr.f32.gmra.mxu0 %v557
        %v2144 = vpop.f32.mrf.mxu0
        %v2145 = vadd.f32 0.0, %v2144
        %v2146 = vpop.f32.mrf.mxu0
        %v2147 = vadd.f32 0.0, %v2146
        %2148 = vmatprep.mubr.f32.mxu0 0.0
        %2149 = vmatmul.mubr.f32.gmra.mxu0 %v560
        %v2150 = vpop.f32.mrf.mxu0
        %v2151 = vadd.f32 0.0, %v2150
        %v2152 = vpop.f32.mrf.mxu0
        %v2153 = vadd.f32 0.0, %v2152
        %2154 = vmatprep.mubr.f32.mxu0 0.0
        %2155 = vmatmul.mubr.f32.gmra.mxu0 %v563
        %v2156 = vpop.f32.mrf.mxu0
        %v2157 = vadd.f32 0.0, %v2156
        %v2158 = vpop.f32.mrf.mxu0
        %v2159 = vadd.f32 0.0, %v2158
        %2160 = vmatprep.mubr.f32.mxu0 0.0
        %2161 = vmatmul.mubr.f32.gmra.mxu0 %v566
        %v2162 = vpop.f32.mrf.mxu0
        %v2163 = vadd.f32 0.0, %v2162
        %v2164 = vpop.f32.mrf.mxu0
        %v2165 = vadd.f32 0.0, %v2164
        %2166 = vmatprep.mubr.f32.mxu0 0.0
        %2167 = vmatmul.mubr.f32.gmra.mxu0 %v569
        %v2168 = vpop.f32.mrf.mxu0
        %v2169 = vadd.f32 0.0, %v2168
        %v2170 = vpop.f32.mrf.mxu0
        %v2171 = vadd.f32 0.0, %v2170
        %2172 = vmatprep.mubr.f32.mxu0 0.0
        %2173 = vmatmul.mubr.f32.gmra.mxu0 %v572
        %v2174 = vpop.f32.mrf.mxu0
        %v2175 = vadd.f32 0.0, %v2174
        %v2176 = vpop.f32.mrf.mxu0
        %v2177 = vadd.f32 0.0, %v2176
        %2178 = vmatprep.mubr.f32.mxu0 0.0
        %2179 = vmatmul.mubr.f32.gmra.mxu0 %v575
        %v2180 = vpop.f32.mrf.mxu0
        %v2181 = vadd.f32 0.0, %v2180
        %v2182 = vpop.f32.mrf.mxu0
        %v2183 = vadd.f32 0.0, %v2182
        %2184 = vmatprep.mubr.f32.mxu0 0.0
        %2185 = vmatmul.mubr.f32.gmra.mxu0 %v578
        %v2186 = vpop.f32.mrf.mxu0
        %v2187 = vadd.f32 0.0, %v2186
        %v2188 = vpop.f32.mrf.mxu0
        %v2189 = vadd.f32 0.0, %v2188
        %2190 = vmatprep.mubr.f32.mxu0 0.0
        %2191 = vmatmul.mubr.f32.gmra.mxu0 %v581
        %v2192 = vpop.f32.mrf.mxu0
        %v2193 = vadd.f32 0.0, %v2192
        %v2194 = vpop.f32.mrf.mxu0
        %v2195 = vadd.f32 0.0, %v2194
        %2196 = vmatprep.mubr.f32.mxu0 0.0
        %2197 = vmatmul.mubr.f32.gmra.mxu0 %v584
        %v2198 = vpop.f32.mrf.mxu0
        %v2199 = vadd.f32 0.0, %v2198
        %v2200 = vpop.f32.mrf.mxu0
        %v2201 = vadd.f32 0.0, %v2200
        %2202 = vmatprep.mubr.f32.mxu0 0.0
        %2203 = vmatmul.mubr.f32.gmra.mxu0 %v587
        %v2204 = vpop.f32.mrf.mxu0
        %v2205 = vadd.f32 0.0, %v2204
        %v2206 = vpop.f32.mrf.mxu0
        %v2207 = vadd.f32 0.0, %v2206
        %2208 = vmatprep.mubr.f32.mxu0 0.0
        %2209 = vmatmul.mubr.f32.gmra.mxu0 %v590
        %v2210 = vpop.f32.mrf.mxu0
        %v2211 = vadd.f32 0.0, %v2210
        %v2212 = vpop.f32.mrf.mxu0
        %v2213 = vadd.f32 0.0, %v2212
        %2214 = vmatprep.mubr.f32.mxu0 0.0
        %2215 = vmatmul.mubr.f32.gmra.mxu0 %v593
        %v2216 = vpop.f32.mrf.mxu0
        %v2217 = vadd.f32 0.0, %v2216
        %v2218 = vpop.f32.mrf.mxu0
        %v2219 = vadd.f32 0.0, %v2218
        %2220 = vmatprep.mubr.f32.mxu0 0.0
        %2221 = vmatmul.mubr.f32.gmra.mxu0 %v596
        %v2222 = vpop.f32.mrf.mxu0
        %v2223 = vadd.f32 0.0, %v2222
        %v2224 = vpop.f32.mrf.mxu0
        %v2225 = vadd.f32 0.0, %v2224
        %2226 = vmatprep.mubr.f32.mxu0 0.0
        %2227 = vmatmul.mubr.f32.gmra.mxu0 %v599
        %v2228 = vpop.f32.mrf.mxu0
        %v2229 = vadd.f32 0.0, %v2228
        %v2230 = vpop.f32.mrf.mxu0
        %v2231 = vadd.f32 0.0, %v2230
        %2232 = vmatprep.mubr.f32.mxu0 0.0
        %2233 = vmatmul.mubr.f32.gmra.mxu0 %v602
        %v2234 = vpop.f32.mrf.mxu0
        %v2235 = vadd.f32 0.0, %v2234
        %v2236 = vpop.f32.mrf.mxu0
        %v2237 = vadd.f32 0.0, %v2236
        %2238 = vmatprep.mubr.f32.mxu0 0.0
        %2239 = vmatmul.mubr.f32.gmra.mxu0 %v605
        %v2240 = vpop.f32.mrf.mxu0
        %v2241 = vadd.f32 0.0, %v2240
        %v2242 = vpop.f32.mrf.mxu0
        %v2243 = vadd.f32 0.0, %v2242
        %2244 = vmatprep.mubr.f32.mxu0 0.0
        %2245 = vmatmul.mubr.f32.gmra.mxu0 %v608
        %v2246 = vpop.f32.mrf.mxu0
        %v2247 = vadd.f32 0.0, %v2246
        %v2248 = vpop.f32.mrf.mxu0
        %v2249 = vadd.f32 0.0, %v2248
        %2250 = vmatprep.mubr.f32.mxu0 0.0
        %2251 = vmatmul.mubr.f32.gmra.mxu0 %v611
        %v2252 = vpop.f32.mrf.mxu0
        %v2253 = vadd.f32 0.0, %v2252
        %v2254 = vpop.f32.mrf.mxu0
        %v2255 = vadd.f32 0.0, %v2254
        %2256 = vmatprep.mubr.f32.mxu0 0.0
        %2257 = vmatmul.mubr.f32.gmra.mxu0 %v2007
        %v2258 = vpop.f32.mrf.mxu0
        %v2259 = vadd.f32 0.0, %v2258
        %v2260 = vpop.f32.mrf.mxu0
        %v2261 = vadd.f32 0.0, %v2260
        %2262 = vmatprep.mubr.f32.mxu0 0.0
        %2263 = vmatmul.mubr.f32.gmra.mxu0 %v2010
        %v2264 = vpop.f32.mrf.mxu0
        %v2265 = vadd.f32 0.0, %v2264
        %v2266 = vpop.f32.mrf.mxu0
        %v2267 = vadd.f32 0.0, %v2266
        %2268 = vdwg.mxu0
        %v2269 = vadd.f32 %v1925, %v2079
        %v2270 = vadd.f32 %v1926, %v2081
        %v2271 = vadd.f32 %v1927, %v2085
        %v2272 = vadd.f32 %v1928, %v2087
        %v2273 = vadd.f32 %v1929, %v2091
        %v2274 = vadd.f32 %v1930, %v2093
        %v2275 = vadd.f32 %v1931, %v2097
        %v2276 = vadd.f32 %v1932, %v2099
        %v2277 = vadd.f32 %v1933, %v2103
        %v2278 = vadd.f32 %v1934, %v2105
        %v2279 = vadd.f32 %v1935, %v2109
        %v2280 = vadd.f32 %v1936, %v2111
        %v2281 = vadd.f32 %v1937, %v2115
        %v2282 = vadd.f32 %v1938, %v2117
        %v2283 = vadd.f32 %v1939, %v2121
        %v2284 = vadd.f32 %v1940, %v2123
        %v2285 = vadd.f32 %v1941, %v2127
        %v2286 = vadd.f32 %v1942, %v2129
        %v2287 = vadd.f32 %v1943, %v2133
        %v2288 = vadd.f32 %v1944, %v2135
        %v2289 = vadd.f32 %v1945, %v2139
        %v2290 = vadd.f32 %v1946, %v2141
        %v2291 = vadd.f32 %v1947, %v2145
        %v2292 = vadd.f32 %v1948, %v2147
        %v2293 = vadd.f32 %v1949, %v2151
        %v2294 = vadd.f32 %v1950, %v2153
        %v2295 = vadd.f32 %v1951, %v2157
        %v2296 = vadd.f32 %v1952, %v2159
        %v2297 = vadd.f32 %v1953, %v2163
        %v2298 = vadd.f32 %v1954, %v2165
        %v2299 = vadd.f32 %v1955, %v2169
        %v2300 = vadd.f32 %v1956, %v2171
        %v2301 = vadd.f32 %v1957, %v2175
        %v2302 = vadd.f32 %v1958, %v2177
        %v2303 = vadd.f32 %v1959, %v2181
        %v2304 = vadd.f32 %v1960, %v2183
        %v2305 = vadd.f32 %v1961, %v2187
        %v2306 = vadd.f32 %v1962, %v2189
        %v2307 = vadd.f32 %v1963, %v2193
        %v2308 = vadd.f32 %v1964, %v2195
        %v2309 = vadd.f32 %v1965, %v2199
        %v2310 = vadd.f32 %v1966, %v2201
        %v2311 = vadd.f32 %v1967, %v2205
        %v2312 = vadd.f32 %v1968, %v2207
        %v2313 = vadd.f32 %v1969, %v2211
        %v2314 = vadd.f32 %v1970, %v2213
        %v2315 = vadd.f32 %v1971, %v2217
        %v2316 = vadd.f32 %v1972, %v2219
        %v2317 = vadd.f32 %v1973, %v2223
        %v2318 = vadd.f32 %v1974, %v2225
        %v2319 = vadd.f32 %v1975, %v2229
        %v2320 = vadd.f32 %v1976, %v2231
        %v2321 = vadd.f32 %v1977, %v2235
        %v2322 = vadd.f32 %v1978, %v2237
        %v2323 = vadd.f32 %v1979, %v2241
        %v2324 = vadd.f32 %v1980, %v2243
        %v2325 = vadd.f32 %v1981, %v2247
        %v2326 = vadd.f32 %v1982, %v2249
        %v2327 = vadd.f32 %v1983, %v2253
        %v2328 = vadd.f32 %v1984, %v2255
        %v2329 = vadd.f32 %v1985, %v2259
        %v2330 = vadd.f32 %v1986, %v2261
        %v2331 = vadd.f32 %v1987, %v2265
        %v2332 = vadd.f32 %v1988, %v2267
        %s2333 = scalar_lea.vmem [#allocation6], 640
        %v2334 = vld [vmem:[%s2333] sm:$0xff]
        %v2335 = vld [vmem:[%s2333 + $0x8] sm:$0xff]
        %v2336 = vld [vmem:[%s2333 + $0x10] sm:$0xff]
        %v2337 = vld [vmem:[%s2333 + $0x18] sm:$0xff]
        %v2338 = vld [vmem:[%s2333 + $0x20] sm:$0xff]
        %v2339 = vld [vmem:[%s2333 + $0x28] sm:$0xff]
        %v2340 = vld [vmem:[%s2333 + $0x30] sm:$0xff]
        %v2341 = vld [vmem:[%s2333 + $0x38] sm:$0xff]
        %v2342 = vld [vmem:[%s2333 + $0x40] sm:$0xff]
        %v2343 = vld [vmem:[%s2333 + $0x48] sm:$0xff]
        %v2344 = vld [vmem:[%s2333 + $0x50] sm:$0xff]
        %v2345 = vld [vmem:[%s2333 + $0x58] sm:$0xff]
        %v2346 = vld [vmem:[%s2333 + $0x60] sm:$0xff]
        %v2347 = vld [vmem:[%s2333 + $0x68] sm:$0xff]
        %v2348 = vld [vmem:[%s2333 + $0x70] sm:$0xff]
        %v2349 = vld [vmem:[%s2333 + $0x78] sm:$0xff]
        %v2351 = vsel %vm519, %v484, 0
        %v2354 = vsel %vm519, %v485, 0
        %2356 = vmatprep.subr.mxu0 0.0
        %2357 = vmatpush1.msra.mxu0 0.0
        %2358 = vmatprep.subr.mxu0 0.0
        %2359 = vmatpush1.msra.mxu0 0.0
        %2360 = vmatprep.subr.mxu0 0.0
        %2361 = vmatpush1.msra.mxu0 0.0
        %2362 = vmatprep.subr.mxu0 0.0
        %2363 = vmatpush1.msra.mxu0 0.0
        %2364 = vmatprep.subr.mxu0 0.0
        %2365 = vmatpush1.msra.mxu0 0.0
        %2366 = vmatprep.subr.mxu0 0.0
        %2367 = vmatpush1.msra.mxu0 0.0
        %2368 = vmatprep.subr.mxu0 0.0
        %2369 = vmatpush1.msra.mxu0 0.0
        %2370 = vmatprep.subr.mxu0 0.0
        %2371 = vmatpush1.msra.mxu0 0.0
        %2372 = vmatprep.subr.mxu0 %v2349
        %2373 = vmatpush1.msra.mxu0 %v2348
        %2374 = vmatprep.subr.mxu0 %v2347
        %2375 = vmatpush1.msra.mxu0 %v2346
        %2376 = vmatprep.subr.mxu0 %v2345
        %2377 = vmatpush1.msra.mxu0 %v2344
        %2378 = vmatprep.subr.mxu0 %v2343
        %2379 = vmatpush1.msra.mxu0 %v2342
        %2380 = vmatprep.subr.mxu0 %v2341
        %2381 = vmatpush1.msra.mxu0 %v2340
        %2382 = vmatprep.subr.mxu0 %v2339
        %2383 = vmatpush1.msra.mxu0 %v2338
        %2384 = vmatprep.subr.mxu0 %v2337
        %2385 = vmatpush1.msra.mxu0 %v2336
        %2386 = vmatprep.subr.mxu0 %v2335
        %2387 = vmatpush1.msra.mxu0 %v2334
        %2388 = vmatprep.subr.mxu0 0.0
        %2389 = vmatpush2.msra.mxu0 0.0
        %2390 = vmatprep.subr.mxu0 0.0
        %2391 = vmatpush2.msra.mxu0 0.0
        %2392 = vmatprep.subr.mxu0 0.0
        %2393 = vmatpush2.msra.mxu0 0.0
        %2394 = vmatprep.subr.mxu0 0.0
        %2395 = vmatpush2.msra.mxu0 0.0
        %2396 = vmatprep.subr.mxu0 0.0
        %2397 = vmatpush2.msra.mxu0 0.0
        %2398 = vmatprep.subr.mxu0 0.0
        %2399 = vmatpush2.msra.mxu0 0.0
        %2400 = vmatprep.subr.mxu0 0.0
        %2401 = vmatpush2.msra.mxu0 0.0
        %2402 = vmatprep.subr.mxu0 0.0
        %2403 = vmatpush2.msra.mxu0 0.0
        %2404 = vmatprep.subr.mxu0 0.0
        %2405 = vmatpush2.msra.mxu0 0.0
        %2406 = vmatprep.subr.mxu0 0.0
        %2407 = vmatpush2.msra.mxu0 0.0
        %2408 = vmatprep.subr.mxu0 0.0
        %2409 = vmatpush2.msra.mxu0 0.0
        %2410 = vmatprep.subr.mxu0 0.0
        %2411 = vmatpush2.msra.mxu0 0.0
        %2412 = vmatprep.subr.mxu0 0.0
        %2413 = vmatpush2.msra.mxu0 0.0
        %2414 = vmatprep.subr.mxu0 0.0
        %2415 = vmatpush2.msra.mxu0 0.0
        %2416 = vmatprep.subr.mxu0 0.0
        %2417 = vmatpush2.msra.mxu0 0.0
        %2418 = vmatprep.subr.mxu0 0.0
        %2419 = vmatpush2.msra.mxu0 0.0
        %2420 = vmatprep.mubr.f32.mxu0 0.0
        %2421 = vmatmul.mubr.f32.gmra.mxu0 %v1235
        %v2422 = vpop.f32.mrf.mxu0
        %v2423 = vadd.f32 0.0, %v2422
        %v2424 = vpop.f32.mrf.mxu0
        %v2425 = vadd.f32 0.0, %v2424
        %2426 = vmatprep.mubr.f32.mxu0 0.0
        %2427 = vmatmul.mubr.f32.gmra.mxu0 %v1238
        %v2428 = vpop.f32.mrf.mxu0
        %v2429 = vadd.f32 0.0, %v2428
        %v2430 = vpop.f32.mrf.mxu0
        %v2431 = vadd.f32 0.0, %v2430
        %2432 = vmatprep.mubr.f32.mxu0 0.0
        %2433 = vmatmul.mubr.f32.gmra.mxu0 %v1241
        %v2434 = vpop.f32.mrf.mxu0
        %v2435 = vadd.f32 0.0, %v2434
        %v2436 = vpop.f32.mrf.mxu0
        %v2437 = vadd.f32 0.0, %v2436
        %2438 = vmatprep.mubr.f32.mxu0 0.0
        %2439 = vmatmul.mubr.f32.gmra.mxu0 %v1244
        %v2440 = vpop.f32.mrf.mxu0
        %v2441 = vadd.f32 0.0, %v2440
        %v2442 = vpop.f32.mrf.mxu0
        %v2443 = vadd.f32 0.0, %v2442
        %2444 = vmatprep.mubr.f32.mxu0 0.0
        %2445 = vmatmul.mubr.f32.gmra.mxu0 %v1247
        %v2446 = vpop.f32.mrf.mxu0
        %v2447 = vadd.f32 0.0, %v2446
        %v2448 = vpop.f32.mrf.mxu0
        %v2449 = vadd.f32 0.0, %v2448
        %2450 = vmatprep.mubr.f32.mxu0 0.0
        %2451 = vmatmul.mubr.f32.gmra.mxu0 %v1250
        %v2452 = vpop.f32.mrf.mxu0
        %v2453 = vadd.f32 0.0, %v2452
        %v2454 = vpop.f32.mrf.mxu0
        %v2455 = vadd.f32 0.0, %v2454
        %2456 = vmatprep.mubr.f32.mxu0 0.0
        %2457 = vmatmul.mubr.f32.gmra.mxu0 %v1253
        %v2458 = vpop.f32.mrf.mxu0
        %v2459 = vadd.f32 0.0, %v2458
        %v2460 = vpop.f32.mrf.mxu0
        %v2461 = vadd.f32 0.0, %v2460
        %2462 = vmatprep.mubr.f32.mxu0 0.0
        %2463 = vmatmul.mubr.f32.gmra.mxu0 %v1256
        %v2464 = vpop.f32.mrf.mxu0
        %v2465 = vadd.f32 0.0, %v2464
        %v2466 = vpop.f32.mrf.mxu0
        %v2467 = vadd.f32 0.0, %v2466
        %2468 = vmatprep.mubr.f32.mxu0 0.0
        %2469 = vmatmul.mubr.f32.gmra.mxu0 %v1259
        %v2470 = vpop.f32.mrf.mxu0
        %v2471 = vadd.f32 0.0, %v2470
        %v2472 = vpop.f32.mrf.mxu0
        %v2473 = vadd.f32 0.0, %v2472
        %2474 = vmatprep.mubr.f32.mxu0 0.0
        %2475 = vmatmul.mubr.f32.gmra.mxu0 %v1262
        %v2476 = vpop.f32.mrf.mxu0
        %v2477 = vadd.f32 0.0, %v2476
        %v2478 = vpop.f32.mrf.mxu0
        %v2479 = vadd.f32 0.0, %v2478
        %2480 = vmatprep.mubr.f32.mxu0 0.0
        %2481 = vmatmul.mubr.f32.gmra.mxu0 %v1265
        %v2482 = vpop.f32.mrf.mxu0
        %v2483 = vadd.f32 0.0, %v2482
        %v2484 = vpop.f32.mrf.mxu0
        %v2485 = vadd.f32 0.0, %v2484
        %2486 = vmatprep.mubr.f32.mxu0 0.0
        %2487 = vmatmul.mubr.f32.gmra.mxu0 %v1268
        %v2488 = vpop.f32.mrf.mxu0
        %v2489 = vadd.f32 0.0, %v2488
        %v2490 = vpop.f32.mrf.mxu0
        %v2491 = vadd.f32 0.0, %v2490
        %2492 = vmatprep.mubr.f32.mxu0 0.0
        %2493 = vmatmul.mubr.f32.gmra.mxu0 %v1271
        %v2494 = vpop.f32.mrf.mxu0
        %v2495 = vadd.f32 0.0, %v2494
        %v2496 = vpop.f32.mrf.mxu0
        %v2497 = vadd.f32 0.0, %v2496
        %2498 = vmatprep.mubr.f32.mxu0 0.0
        %2499 = vmatmul.mubr.f32.gmra.mxu0 %v1274
        %v2500 = vpop.f32.mrf.mxu0
        %v2501 = vadd.f32 0.0, %v2500
        %v2502 = vpop.f32.mrf.mxu0
        %v2503 = vadd.f32 0.0, %v2502
        %2504 = vmatprep.mubr.f32.mxu0 0.0
        %2505 = vmatmul.mubr.f32.gmra.mxu0 %v1277
        %v2506 = vpop.f32.mrf.mxu0
        %v2507 = vadd.f32 0.0, %v2506
        %v2508 = vpop.f32.mrf.mxu0
        %v2509 = vadd.f32 0.0, %v2508
        %2510 = vmatprep.mubr.f32.mxu0 0.0
        %2511 = vmatmul.mubr.f32.gmra.mxu0 %v1280
        %v2512 = vpop.f32.mrf.mxu0
        %v2513 = vadd.f32 0.0, %v2512
        %v2514 = vpop.f32.mrf.mxu0
        %v2515 = vadd.f32 0.0, %v2514
        %2516 = vmatprep.mubr.f32.mxu0 0.0
        %2517 = vmatmul.mubr.f32.gmra.mxu0 %v1283
        %v2518 = vpop.f32.mrf.mxu0
        %v2519 = vadd.f32 0.0, %v2518
        %v2520 = vpop.f32.mrf.mxu0
        %v2521 = vadd.f32 0.0, %v2520
        %2522 = vmatprep.mubr.f32.mxu0 0.0
        %2523 = vmatmul.mubr.f32.gmra.mxu0 %v1286
        %v2524 = vpop.f32.mrf.mxu0
        %v2525 = vadd.f32 0.0, %v2524
        %v2526 = vpop.f32.mrf.mxu0
        %v2527 = vadd.f32 0.0, %v2526
        %2528 = vmatprep.mubr.f32.mxu0 0.0
        %2529 = vmatmul.mubr.f32.gmra.mxu0 %v1289
        %v2530 = vpop.f32.mrf.mxu0
        %v2531 = vadd.f32 0.0, %v2530
        %v2532 = vpop.f32.mrf.mxu0
        %v2533 = vadd.f32 0.0, %v2532
        %2534 = vmatprep.mubr.f32.mxu0 0.0
        %2535 = vmatmul.mubr.f32.gmra.mxu0 %v1292
        %v2536 = vpop.f32.mrf.mxu0
        %v2537 = vadd.f32 0.0, %v2536
        %v2538 = vpop.f32.mrf.mxu0
        %v2539 = vadd.f32 0.0, %v2538
        %2540 = vmatprep.mubr.f32.mxu0 0.0
        %2541 = vmatmul.mubr.f32.gmra.mxu0 %v1295
        %v2542 = vpop.f32.mrf.mxu0
        %v2543 = vadd.f32 0.0, %v2542
        %v2544 = vpop.f32.mrf.mxu0
        %v2545 = vadd.f32 0.0, %v2544
        %2546 = vmatprep.mubr.f32.mxu0 0.0
        %2547 = vmatmul.mubr.f32.gmra.mxu0 %v1298
        %v2548 = vpop.f32.mrf.mxu0
        %v2549 = vadd.f32 0.0, %v2548
        %v2550 = vpop.f32.mrf.mxu0
        %v2551 = vadd.f32 0.0, %v2550
        %2552 = vmatprep.mubr.f32.mxu0 0.0
        %2553 = vmatmul.mubr.f32.gmra.mxu0 %v1301
        %v2554 = vpop.f32.mrf.mxu0
        %v2555 = vadd.f32 0.0, %v2554
        %v2556 = vpop.f32.mrf.mxu0
        %v2557 = vadd.f32 0.0, %v2556
        %2558 = vmatprep.mubr.f32.mxu0 0.0
        %2559 = vmatmul.mubr.f32.gmra.mxu0 %v1304
        %v2560 = vpop.f32.mrf.mxu0
        %v2561 = vadd.f32 0.0, %v2560
        %v2562 = vpop.f32.mrf.mxu0
        %v2563 = vadd.f32 0.0, %v2562
        %2564 = vmatprep.mubr.f32.mxu0 0.0
        %2565 = vmatmul.mubr.f32.gmra.mxu0 %v1307
        %v2566 = vpop.f32.mrf.mxu0
        %v2567 = vadd.f32 0.0, %v2566
        %v2568 = vpop.f32.mrf.mxu0
        %v2569 = vadd.f32 0.0, %v2568
        %2570 = vmatprep.mubr.f32.mxu0 0.0
        %2571 = vmatmul.mubr.f32.gmra.mxu0 %v1310
        %v2572 = vpop.f32.mrf.mxu0
        %v2573 = vadd.f32 0.0, %v2572
        %v2574 = vpop.f32.mrf.mxu0
        %v2575 = vadd.f32 0.0, %v2574
        %2576 = vmatprep.mubr.f32.mxu0 0.0
        %2577 = vmatmul.mubr.f32.gmra.mxu0 %v1313
        %v2578 = vpop.f32.mrf.mxu0
        %v2579 = vadd.f32 0.0, %v2578
        %v2580 = vpop.f32.mrf.mxu0
        %v2581 = vadd.f32 0.0, %v2580
        %2582 = vmatprep.mubr.f32.mxu0 0.0
        %2583 = vmatmul.mubr.f32.gmra.mxu0 %v1316
        %v2584 = vpop.f32.mrf.mxu0
        %v2585 = vadd.f32 0.0, %v2584
        %v2586 = vpop.f32.mrf.mxu0
        %v2587 = vadd.f32 0.0, %v2586
        %2588 = vmatprep.mubr.f32.mxu0 0.0
        %2589 = vmatmul.mubr.f32.gmra.mxu0 %v1319
        %v2590 = vpop.f32.mrf.mxu0
        %v2591 = vadd.f32 0.0, %v2590
        %v2592 = vpop.f32.mrf.mxu0
        %v2593 = vadd.f32 0.0, %v2592
        %2594 = vmatprep.mubr.f32.mxu0 0.0
        %2595 = vmatmul.mubr.f32.gmra.mxu0 %v1322
        %v2596 = vpop.f32.mrf.mxu0
        %v2597 = vadd.f32 0.0, %v2596
        %v2598 = vpop.f32.mrf.mxu0
        %v2599 = vadd.f32 0.0, %v2598
        %2600 = vmatprep.mubr.f32.mxu0 0.0
        %2601 = vmatmul.mubr.f32.gmra.mxu0 %v2351
        %v2602 = vpop.f32.mrf.mxu0
        %v2603 = vadd.f32 0.0, %v2602
        %v2604 = vpop.f32.mrf.mxu0
        %v2605 = vadd.f32 0.0, %v2604
        %2606 = vmatprep.mubr.f32.mxu0 0.0
        %2607 = vmatmul.mubr.f32.gmra.mxu0 %v2354
        %v2608 = vpop.f32.mrf.mxu0
        %v2609 = vadd.f32 0.0, %v2608
        %v2610 = vpop.f32.mrf.mxu0
        %v2611 = vadd.f32 0.0, %v2610
        %2612 = vdwg.mxu0
        %v2613 = vadd.f32 %v2269, %v2423
        %v2614 = vadd.f32 %v2270, %v2425
        %v2615 = vadd.f32 %v2271, %v2429
        %v2616 = vadd.f32 %v2272, %v2431
        %v2617 = vadd.f32 %v2273, %v2435
        %v2618 = vadd.f32 %v2274, %v2437
        %v2619 = vadd.f32 %v2275, %v2441
        %v2620 = vadd.f32 %v2276, %v2443
        %v2621 = vadd.f32 %v2277, %v2447
        %v2622 = vadd.f32 %v2278, %v2449
        %v2623 = vadd.f32 %v2279, %v2453
        %v2624 = vadd.f32 %v2280, %v2455
        %v2625 = vadd.f32 %v2281, %v2459
        %v2626 = vadd.f32 %v2282, %v2461
        %v2627 = vadd.f32 %v2283, %v2465
        %v2628 = vadd.f32 %v2284, %v2467
        %v2629 = vadd.f32 %v2285, %v2471
        %v2630 = vadd.f32 %v2286, %v2473
        %v2631 = vadd.f32 %v2287, %v2477
        %v2632 = vadd.f32 %v2288, %v2479
        %v2633 = vadd.f32 %v2289, %v2483
        %v2634 = vadd.f32 %v2290, %v2485
        %v2635 = vadd.f32 %v2291, %v2489
        %v2636 = vadd.f32 %v2292, %v2491
        %v2637 = vadd.f32 %v2293, %v2495
        %v2638 = vadd.f32 %v2294, %v2497
        %v2639 = vadd.f32 %v2295, %v2501
        %v2640 = vadd.f32 %v2296, %v2503
        %v2641 = vadd.f32 %v2297, %v2507
        %v2642 = vadd.f32 %v2298, %v2509
        %v2643 = vadd.f32 %v2299, %v2513
        %v2644 = vadd.f32 %v2300, %v2515
        %v2645 = vadd.f32 %v2301, %v2519
        %v2646 = vadd.f32 %v2302, %v2521
        %v2647 = vadd.f32 %v2303, %v2525
        %v2648 = vadd.f32 %v2304, %v2527
        %v2649 = vadd.f32 %v2305, %v2531
        %v2650 = vadd.f32 %v2306, %v2533
        %v2651 = vadd.f32 %v2307, %v2537
        %v2652 = vadd.f32 %v2308, %v2539
        %v2653 = vadd.f32 %v2309, %v2543
        %v2654 = vadd.f32 %v2310, %v2545
        %v2655 = vadd.f32 %v2311, %v2549
        %v2656 = vadd.f32 %v2312, %v2551
        %v2657 = vadd.f32 %v2313, %v2555
        %v2658 = vadd.f32 %v2314, %v2557
        %v2659 = vadd.f32 %v2315, %v2561
        %v2660 = vadd.f32 %v2316, %v2563
        %v2661 = vadd.f32 %v2317, %v2567
        %v2662 = vadd.f32 %v2318, %v2569
        %v2663 = vadd.f32 %v2319, %v2573
        %v2664 = vadd.f32 %v2320, %v2575
        %v2665 = vadd.f32 %v2321, %v2579
        %v2666 = vadd.f32 %v2322, %v2581
        %v2667 = vadd.f32 %v2323, %v2585
        %v2668 = vadd.f32 %v2324, %v2587
        %v2669 = vadd.f32 %v2325, %v2591
        %v2670 = vadd.f32 %v2326, %v2593
        %v2671 = vadd.f32 %v2327, %v2597
        %v2672 = vadd.f32 %v2328, %v2599
        %v2673 = vadd.f32 %v2329, %v2603
        %v2674 = vadd.f32 %v2330, %v2605
        %v2675 = vadd.f32 %v2331, %v2609
        %v2676 = vadd.f32 %v2332, %v2611
        %s2677 = scalar_lea.vmem [#allocation6], 768
        %v2678 = vld [vmem:[%s2677] sm:$0xff]
        %v2679 = vld [vmem:[%s2677 + $0x8] sm:$0xff]
        %v2680 = vld [vmem:[%s2677 + $0x10] sm:$0xff]
        %v2681 = vld [vmem:[%s2677 + $0x18] sm:$0xff]
        %v2682 = vld [vmem:[%s2677 + $0x20] sm:$0xff]
        %v2683 = vld [vmem:[%s2677 + $0x28] sm:$0xff]
        %v2684 = vld [vmem:[%s2677 + $0x30] sm:$0xff]
        %v2685 = vld [vmem:[%s2677 + $0x38] sm:$0xff]
        %v2686 = vld [vmem:[%s2677 + $0x40] sm:$0xff]
        %v2687 = vld [vmem:[%s2677 + $0x48] sm:$0xff]
        %v2688 = vld [vmem:[%s2677 + $0x50] sm:$0xff]
        %v2689 = vld [vmem:[%s2677 + $0x58] sm:$0xff]
        %v2690 = vld [vmem:[%s2677 + $0x60] sm:$0xff]
        %v2691 = vld [vmem:[%s2677 + $0x68] sm:$0xff]
        %v2692 = vld [vmem:[%s2677 + $0x70] sm:$0xff]
        %v2693 = vld [vmem:[%s2677 + $0x78] sm:$0xff]
        %2694 = vmatprep.subr.mxu0 0.0
        %2695 = vmatpush1.msra.mxu0 0.0
        %2696 = vmatprep.subr.mxu0 0.0
        %2697 = vmatpush1.msra.mxu0 0.0
        %2698 = vmatprep.subr.mxu0 0.0
        %2699 = vmatpush1.msra.mxu0 0.0
        %2700 = vmatprep.subr.mxu0 0.0
        %2701 = vmatpush1.msra.mxu0 0.0
        %2702 = vmatprep.subr.mxu0 0.0
        %2703 = vmatpush1.msra.mxu0 0.0
        %2704 = vmatprep.subr.mxu0 0.0
        %2705 = vmatpush1.msra.mxu0 0.0
        %2706 = vmatprep.subr.mxu0 0.0
        %2707 = vmatpush1.msra.mxu0 0.0
        %2708 = vmatprep.subr.mxu0 0.0
        %2709 = vmatpush1.msra.mxu0 0.0
        %2710 = vmatprep.subr.mxu0 %v2693
        %2711 = vmatpush1.msra.mxu0 %v2692
        %2712 = vmatprep.subr.mxu0 %v2691
        %2713 = vmatpush1.msra.mxu0 %v2690
        %2714 = vmatprep.subr.mxu0 %v2689
        %2715 = vmatpush1.msra.mxu0 %v2688
        %2716 = vmatprep.subr.mxu0 %v2687
        %2717 = vmatpush1.msra.mxu0 %v2686
        %2718 = vmatprep.subr.mxu0 %v2685
        %2719 = vmatpush1.msra.mxu0 %v2684
        %2720 = vmatprep.subr.mxu0 %v2683
        %2721 = vmatpush1.msra.mxu0 %v2682
        %2722 = vmatprep.subr.mxu0 %v2681
        %2723 = vmatpush1.msra.mxu0 %v2680
        %2724 = vmatprep.subr.mxu0 %v2679
        %2725 = vmatpush1.msra.mxu0 %v2678
        %2726 = vmatprep.subr.mxu0 0.0
        %2727 = vmatpush2.msra.mxu0 0.0
        %2728 = vmatprep.subr.mxu0 0.0
        %2729 = vmatpush2.msra.mxu0 0.0
        %2730 = vmatprep.subr.mxu0 0.0
        %2731 = vmatpush2.msra.mxu0 0.0
        %2732 = vmatprep.subr.mxu0 0.0
        %2733 = vmatpush2.msra.mxu0 0.0
        %2734 = vmatprep.subr.mxu0 0.0
        %2735 = vmatpush2.msra.mxu0 0.0
        %2736 = vmatprep.subr.mxu0 0.0
        %2737 = vmatpush2.msra.mxu0 0.0
        %2738 = vmatprep.subr.mxu0 0.0
        %2739 = vmatpush2.msra.mxu0 0.0
        %2740 = vmatprep.subr.mxu0 0.0
        %2741 = vmatpush2.msra.mxu0 0.0
        %2742 = vmatprep.subr.mxu0 0.0
        %2743 = vmatpush2.msra.mxu0 0.0
        %2744 = vmatprep.subr.mxu0 0.0
        %2745 = vmatpush2.msra.mxu0 0.0
        %2746 = vmatprep.subr.mxu0 0.0
        %2747 = vmatpush2.msra.mxu0 0.0
        %2748 = vmatprep.subr.mxu0 0.0
        %2749 = vmatpush2.msra.mxu0 0.0
        %2750 = vmatprep.subr.mxu0 0.0
        %2751 = vmatpush2.msra.mxu0 0.0
        %2752 = vmatprep.subr.mxu0 0.0
        %2753 = vmatpush2.msra.mxu0 0.0
        %2754 = vmatprep.subr.mxu0 0.0
        %2755 = vmatpush2.msra.mxu0 0.0
        %2756 = vmatprep.subr.mxu0 0.0
        %2757 = vmatpush2.msra.mxu0 0.0
        %2758 = vmatprep.mubr.f32.mxu0 0.0
        %2759 = vmatmul.mubr.f32.gmra.mxu0 %v877
        %v2760 = vpop.f32.mrf.mxu0
        %v2761 = vadd.f32 0.0, %v2760
        %v2762 = vpop.f32.mrf.mxu0
        %v2763 = vadd.f32 0.0, %v2762
        %2764 = vmatprep.mubr.f32.mxu0 0.0
        %2765 = vmatmul.mubr.f32.gmra.mxu0 %v880
        %v2766 = vpop.f32.mrf.mxu0
        %v2767 = vadd.f32 0.0, %v2766
        %v2768 = vpop.f32.mrf.mxu0
        %v2769 = vadd.f32 0.0, %v2768
        %2770 = vmatprep.mubr.f32.mxu0 0.0
        %2771 = vmatmul.mubr.f32.gmra.mxu0 %v883
        %v2772 = vpop.f32.mrf.mxu0
        %v2773 = vadd.f32 0.0, %v2772
        %v2774 = vpop.f32.mrf.mxu0
        %v2775 = vadd.f32 0.0, %v2774
        %2776 = vmatprep.mubr.f32.mxu0 0.0
        %2777 = vmatmul.mubr.f32.gmra.mxu0 %v886
        %v2778 = vpop.f32.mrf.mxu0
        %v2779 = vadd.f32 0.0, %v2778
        %v2780 = vpop.f32.mrf.mxu0
        %v2781 = vadd.f32 0.0, %v2780
        %2782 = vmatprep.mubr.f32.mxu0 0.0
        %2783 = vmatmul.mubr.f32.gmra.mxu0 %v889
        %v2784 = vpop.f32.mrf.mxu0
        %v2785 = vadd.f32 0.0, %v2784
        %v2786 = vpop.f32.mrf.mxu0
        %v2787 = vadd.f32 0.0, %v2786
        %2788 = vmatprep.mubr.f32.mxu0 0.0
        %2789 = vmatmul.mubr.f32.gmra.mxu0 %v892
        %v2790 = vpop.f32.mrf.mxu0
        %v2791 = vadd.f32 0.0, %v2790
        %v2792 = vpop.f32.mrf.mxu0
        %v2793 = vadd.f32 0.0, %v2792
        %2794 = vmatprep.mubr.f32.mxu0 0.0
        %2795 = vmatmul.mubr.f32.gmra.mxu0 %v895
        %v2796 = vpop.f32.mrf.mxu0
        %v2797 = vadd.f32 0.0, %v2796
        %v2798 = vpop.f32.mrf.mxu0
        %v2799 = vadd.f32 0.0, %v2798
        %2800 = vmatprep.mubr.f32.mxu0 0.0
        %2801 = vmatmul.mubr.f32.gmra.mxu0 %v898
        %v2802 = vpop.f32.mrf.mxu0
        %v2803 = vadd.f32 0.0, %v2802
        %v2804 = vpop.f32.mrf.mxu0
        %v2805 = vadd.f32 0.0, %v2804
        %2806 = vmatprep.mubr.f32.mxu0 0.0
        %2807 = vmatmul.mubr.f32.gmra.mxu0 %v901
        %v2808 = vpop.f32.mrf.mxu0
        %v2809 = vadd.f32 0.0, %v2808
        %v2810 = vpop.f32.mrf.mxu0
        %v2811 = vadd.f32 0.0, %v2810
        %2812 = vmatprep.mubr.f32.mxu0 0.0
        %2813 = vmatmul.mubr.f32.gmra.mxu0 %v904
        %v2814 = vpop.f32.mrf.mxu0
        %v2815 = vadd.f32 0.0, %v2814
        %v2816 = vpop.f32.mrf.mxu0
        %v2817 = vadd.f32 0.0, %v2816
        %2818 = vmatprep.mubr.f32.mxu0 0.0
        %2819 = vmatmul.mubr.f32.gmra.mxu0 %v907
        %v2820 = vpop.f32.mrf.mxu0
        %v2821 = vadd.f32 0.0, %v2820
        %v2822 = vpop.f32.mrf.mxu0
        %v2823 = vadd.f32 0.0, %v2822
        %2824 = vmatprep.mubr.f32.mxu0 0.0
        %2825 = vmatmul.mubr.f32.gmra.mxu0 %v910
        %v2826 = vpop.f32.mrf.mxu0
        %v2827 = vadd.f32 0.0, %v2826
        %v2828 = vpop.f32.mrf.mxu0
        %v2829 = vadd.f32 0.0, %v2828
        %2830 = vmatprep.mubr.f32.mxu0 0.0
        %2831 = vmatmul.mubr.f32.gmra.mxu0 %v913
        %v2832 = vpop.f32.mrf.mxu0
        %v2833 = vadd.f32 0.0, %v2832
        %v2834 = vpop.f32.mrf.mxu0
        %v2835 = vadd.f32 0.0, %v2834
        %2836 = vmatprep.mubr.f32.mxu0 0.0
        %2837 = vmatmul.mubr.f32.gmra.mxu0 %v916
        %v2838 = vpop.f32.mrf.mxu0
        %v2839 = vadd.f32 0.0, %v2838
        %v2840 = vpop.f32.mrf.mxu0
        %v2841 = vadd.f32 0.0, %v2840
        %2842 = vmatprep.mubr.f32.mxu0 0.0
        %2843 = vmatmul.mubr.f32.gmra.mxu0 %v919
        %v2844 = vpop.f32.mrf.mxu0
        %v2845 = vadd.f32 0.0, %v2844
        %v2846 = vpop.f32.mrf.mxu0
        %v2847 = vadd.f32 0.0, %v2846
        %2848 = vmatprep.mubr.f32.mxu0 0.0
        %2849 = vmatmul.mubr.f32.gmra.mxu0 %v922
        %v2850 = vpop.f32.mrf.mxu0
        %v2851 = vadd.f32 0.0, %v2850
        %v2852 = vpop.f32.mrf.mxu0
        %v2853 = vadd.f32 0.0, %v2852
        %2854 = vmatprep.mubr.f32.mxu0 0.0
        %2855 = vmatmul.mubr.f32.gmra.mxu0 %v925
        %v2856 = vpop.f32.mrf.mxu0
        %v2857 = vadd.f32 0.0, %v2856
        %v2858 = vpop.f32.mrf.mxu0
        %v2859 = vadd.f32 0.0, %v2858
        %2860 = vmatprep.mubr.f32.mxu0 0.0
        %2861 = vmatmul.mubr.f32.gmra.mxu0 %v928
        %v2862 = vpop.f32.mrf.mxu0
        %v2863 = vadd.f32 0.0, %v2862
        %v2864 = vpop.f32.mrf.mxu0
        %v2865 = vadd.f32 0.0, %v2864
        %2866 = vmatprep.mubr.f32.mxu0 0.0
        %2867 = vmatmul.mubr.f32.gmra.mxu0 %v931
        %v2868 = vpop.f32.mrf.mxu0
        %v2869 = vadd.f32 0.0, %v2868
        %v2870 = vpop.f32.mrf.mxu0
        %v2871 = vadd.f32 0.0, %v2870
        %2872 = vmatprep.mubr.f32.mxu0 0.0
        %2873 = vmatmul.mubr.f32.gmra.mxu0 %v934
        %v2874 = vpop.f32.mrf.mxu0
        %v2875 = vadd.f32 0.0, %v2874
        %v2876 = vpop.f32.mrf.mxu0
        %v2877 = vadd.f32 0.0, %v2876
        %2878 = vmatprep.mubr.f32.mxu0 0.0
        %2879 = vmatmul.mubr.f32.gmra.mxu0 %v937
        %v2880 = vpop.f32.mrf.mxu0
        %v2881 = vadd.f32 0.0, %v2880
        %v2882 = vpop.f32.mrf.mxu0
        %v2883 = vadd.f32 0.0, %v2882
        %2884 = vmatprep.mubr.f32.mxu0 0.0
        %2885 = vmatmul.mubr.f32.gmra.mxu0 %v940
        %v2886 = vpop.f32.mrf.mxu0
        %v2887 = vadd.f32 0.0, %v2886
        %v2888 = vpop.f32.mrf.mxu0
        %v2889 = vadd.f32 0.0, %v2888
        %2890 = vmatprep.mubr.f32.mxu0 0.0
        %2891 = vmatmul.mubr.f32.gmra.mxu0 %v943
        %v2892 = vpop.f32.mrf.mxu0
        %v2893 = vadd.f32 0.0, %v2892
        %v2894 = vpop.f32.mrf.mxu0
        %v2895 = vadd.f32 0.0, %v2894
        %2896 = vmatprep.mubr.f32.mxu0 0.0
        %2897 = vmatmul.mubr.f32.gmra.mxu0 %v946
        %v2898 = vpop.f32.mrf.mxu0
        %v2899 = vadd.f32 0.0, %v2898
        %v2900 = vpop.f32.mrf.mxu0
        %v2901 = vadd.f32 0.0, %v2900
        %2902 = vmatprep.mubr.f32.mxu0 0.0
        %2903 = vmatmul.mubr.f32.gmra.mxu0 %v949
        %v2904 = vpop.f32.mrf.mxu0
        %v2905 = vadd.f32 0.0, %v2904
        %v2906 = vpop.f32.mrf.mxu0
        %v2907 = vadd.f32 0.0, %v2906
        %2908 = vmatprep.mubr.f32.mxu0 0.0
        %2909 = vmatmul.mubr.f32.gmra.mxu0 %v952
        %v2910 = vpop.f32.mrf.mxu0
        %v2911 = vadd.f32 0.0, %v2910
        %v2912 = vpop.f32.mrf.mxu0
        %v2913 = vadd.f32 0.0, %v2912
        %2914 = vmatprep.mubr.f32.mxu0 0.0
        %2915 = vmatmul.mubr.f32.gmra.mxu0 %v955
        %v2916 = vpop.f32.mrf.mxu0
        %v2917 = vadd.f32 0.0, %v2916
        %v2918 = vpop.f32.mrf.mxu0
        %v2919 = vadd.f32 0.0, %v2918
        %2920 = vmatprep.mubr.f32.mxu0 0.0
        %2921 = vmatmul.mubr.f32.gmra.mxu0 %v958
        %v2922 = vpop.f32.mrf.mxu0
        %v2923 = vadd.f32 0.0, %v2922
        %v2924 = vpop.f32.mrf.mxu0
        %v2925 = vadd.f32 0.0, %v2924
        %2926 = vmatprep.mubr.f32.mxu0 0.0
        %2927 = vmatmul.mubr.f32.gmra.mxu0 %v1663
        %v2928 = vpop.f32.mrf.mxu0
        %v2929 = vadd.f32 0.0, %v2928
        %v2930 = vpop.f32.mrf.mxu0
        %v2931 = vadd.f32 0.0, %v2930
        %2932 = vmatprep.mubr.f32.mxu0 0.0
        %2933 = vmatmul.mubr.f32.gmra.mxu0 %v1666
        %v2934 = vpop.f32.mrf.mxu0
        %v2935 = vadd.f32 0.0, %v2934
        %v2936 = vpop.f32.mrf.mxu0
        %v2937 = vadd.f32 0.0, %v2936
        %2938 = vmatprep.mubr.f32.mxu0 0.0
        %2939 = vmatmul.mubr.f32.gmra.mxu0 %v521
        %v2940 = vpop.f32.mrf.mxu0
        %v2941 = vadd.f32 0.0, %v2940
        %v2942 = vpop.f32.mrf.mxu0
        %v2943 = vadd.f32 0.0, %v2942
        %2944 = vmatprep.mubr.f32.mxu0 0.0
        %2945 = vmatmul.mubr.f32.gmra.mxu0 %v521
        %v2946 = vpop.f32.mrf.mxu0
        %v2947 = vadd.f32 0.0, %v2946
        %v2948 = vpop.f32.mrf.mxu0
        %v2949 = vadd.f32 0.0, %v2948
        %2950 = vdwg.mxu0
        %v2951 = vadd.f32 %v2613, %v2761
        %v2952 = vadd.f32 %v2614, %v2763
        %v2953 = vadd.f32 %v2615, %v2767
        %v2954 = vadd.f32 %v2616, %v2769
        %v2955 = vadd.f32 %v2617, %v2773
        %v2956 = vadd.f32 %v2618, %v2775
        %v2957 = vadd.f32 %v2619, %v2779
        %v2958 = vadd.f32 %v2620, %v2781
        %v2959 = vadd.f32 %v2621, %v2785
        %v2960 = vadd.f32 %v2622, %v2787
        %v2961 = vadd.f32 %v2623, %v2791
        %v2962 = vadd.f32 %v2624, %v2793
        %v2963 = vadd.f32 %v2625, %v2797
        %v2964 = vadd.f32 %v2626, %v2799
        %v2965 = vadd.f32 %v2627, %v2803
        %v2966 = vadd.f32 %v2628, %v2805
        %v2967 = vadd.f32 %v2629, %v2809
        %v2968 = vadd.f32 %v2630, %v2811
        %v2969 = vadd.f32 %v2631, %v2815
        %v2970 = vadd.f32 %v2632, %v2817
        %v2971 = vadd.f32 %v2633, %v2821
        %v2972 = vadd.f32 %v2634, %v2823
        %v2973 = vadd.f32 %v2635, %v2827
        %v2974 = vadd.f32 %v2636, %v2829
        %v2975 = vadd.f32 %v2637, %v2833
        %v2976 = vadd.f32 %v2638, %v2835
        %v2977 = vadd.f32 %v2639, %v2839
        %v2978 = vadd.f32 %v2640, %v2841
        %v2979 = vadd.f32 %v2641, %v2845
        %v2980 = vadd.f32 %v2642, %v2847
        %v2981 = vadd.f32 %v2643, %v2851
        %v2982 = vadd.f32 %v2644, %v2853
        %v2983 = vadd.f32 %v2645, %v2857
        %v2984 = vadd.f32 %v2646, %v2859
        %v2985 = vadd.f32 %v2647, %v2863
        %v2986 = vadd.f32 %v2648, %v2865
        %v2987 = vadd.f32 %v2649, %v2869
        %v2988 = vadd.f32 %v2650, %v2871
        %v2989 = vadd.f32 %v2651, %v2875
        %v2990 = vadd.f32 %v2652, %v2877
        %v2991 = vadd.f32 %v2653, %v2881
        %v2992 = vadd.f32 %v2654, %v2883
        %v2993 = vadd.f32 %v2655, %v2887
        %v2994 = vadd.f32 %v2656, %v2889
        %v2995 = vadd.f32 %v2657, %v2893
        %v2996 = vadd.f32 %v2658, %v2895
        %v2997 = vadd.f32 %v2659, %v2899
        %v2998 = vadd.f32 %v2660, %v2901
        %v2999 = vadd.f32 %v2661, %v2905
        %v3000 = vadd.f32 %v2662, %v2907
        %v3001 = vadd.f32 %v2663, %v2911
        %v3002 = vadd.f32 %v2664, %v2913
        %v3003 = vadd.f32 %v2665, %v2917
        %v3004 = vadd.f32 %v2666, %v2919
        %v3005 = vadd.f32 %v2667, %v2923
        %v3006 = vadd.f32 %v2668, %v2925
        %v3007 = vadd.f32 %v2669, %v2929
        %v3008 = vadd.f32 %v2670, %v2931
        %v3009 = vadd.f32 %v2671, %v2935
        %v3010 = vadd.f32 %v2672, %v2937
        %v3011 = vadd.f32 %v2673, %v2941
        %v3012 = vadd.f32 %v2674, %v2943
        %v3013 = vadd.f32 %v2675, %v2947
        %v3014 = vadd.f32 %v2676, %v2949
        %s3015 = scalar_lea.vmem [#allocation6], 896
        %v3016 = vld [vmem:[%s3015] sm:$0xff]
        %v3017 = vld [vmem:[%s3015 + $0x8] sm:$0xff]
        %v3018 = vld [vmem:[%s3015 + $0x10] sm:$0xff]
        %v3019 = vld [vmem:[%s3015 + $0x18] sm:$0xff]
        %v3020 = vld [vmem:[%s3015 + $0x20] sm:$0xff]
        %v3021 = vld [vmem:[%s3015 + $0x28] sm:$0xff]
        %v3022 = vld [vmem:[%s3015 + $0x30] sm:$0xff]
        %v3023 = vld [vmem:[%s3015 + $0x38] sm:$0xff]
        %v3024 = vld [vmem:[%s3015 + $0x40] sm:$0xff]
        %v3025 = vld [vmem:[%s3015 + $0x48] sm:$0xff]
        %v3026 = vld [vmem:[%s3015 + $0x50] sm:$0xff]
        %v3027 = vld [vmem:[%s3015 + $0x58] sm:$0xff]
        %v3028 = vld [vmem:[%s3015 + $0x60] sm:$0xff]
        %v3029 = vld [vmem:[%s3015 + $0x68] sm:$0xff]
        %v3030 = vld [vmem:[%s3015 + $0x70] sm:$0xff]
        %v3031 = vld [vmem:[%s3015 + $0x78] sm:$0xff]
        %3032 = vmatprep.subr.mxu0 0.0
        %3033 = vmatpush1.msra.mxu0 0.0
        %3034 = vmatprep.subr.mxu0 0.0
        %3035 = vmatpush1.msra.mxu0 0.0
        %3036 = vmatprep.subr.mxu0 0.0
        %3037 = vmatpush1.msra.mxu0 0.0
        %3038 = vmatprep.subr.mxu0 0.0
        %3039 = vmatpush1.msra.mxu0 0.0
        %3040 = vmatprep.subr.mxu0 0.0
        %3041 = vmatpush1.msra.mxu0 0.0
        %3042 = vmatprep.subr.mxu0 0.0
        %3043 = vmatpush1.msra.mxu0 0.0
        %3044 = vmatprep.subr.mxu0 0.0
        %3045 = vmatpush1.msra.mxu0 0.0
        %3046 = vmatprep.subr.mxu0 0.0
        %3047 = vmatpush1.msra.mxu0 0.0
        %3048 = vmatprep.subr.mxu0 %v3031
        %3049 = vmatpush1.msra.mxu0 %v3030
        %3050 = vmatprep.subr.mxu0 %v3029
        %3051 = vmatpush1.msra.mxu0 %v3028
        %3052 = vmatprep.subr.mxu0 %v3027
        %3053 = vmatpush1.msra.mxu0 %v3026
        %3054 = vmatprep.subr.mxu0 %v3025
        %3055 = vmatpush1.msra.mxu0 %v3024
        %3056 = vmatprep.subr.mxu0 %v3023
        %3057 = vmatpush1.msra.mxu0 %v3022
        %3058 = vmatprep.subr.mxu0 %v3021
        %3059 = vmatpush1.msra.mxu0 %v3020
        %3060 = vmatprep.subr.mxu0 %v3019
        %3061 = vmatpush1.msra.mxu0 %v3018
        %3062 = vmatprep.subr.mxu0 %v3017
        %3063 = vmatpush1.msra.mxu0 %v3016
        %3064 = vmatprep.subr.mxu0 0.0
        %3065 = vmatpush2.msra.mxu0 0.0
        %3066 = vmatprep.subr.mxu0 0.0
        %3067 = vmatpush2.msra.mxu0 0.0
        %3068 = vmatprep.subr.mxu0 0.0
        %3069 = vmatpush2.msra.mxu0 0.0
        %3070 = vmatprep.subr.mxu0 0.0
        %3071 = vmatpush2.msra.mxu0 0.0
        %3072 = vmatprep.subr.mxu0 0.0
        %3073 = vmatpush2.msra.mxu0 0.0
        %3074 = vmatprep.subr.mxu0 0.0
        %3075 = vmatpush2.msra.mxu0 0.0
        %3076 = vmatprep.subr.mxu0 0.0
        %3077 = vmatpush2.msra.mxu0 0.0
        %3078 = vmatprep.subr.mxu0 0.0
        %3079 = vmatpush2.msra.mxu0 0.0
        %3080 = vmatprep.subr.mxu0 0.0
        %3081 = vmatpush2.msra.mxu0 0.0
        %3082 = vmatprep.subr.mxu0 0.0
        %3083 = vmatpush2.msra.mxu0 0.0
        %3084 = vmatprep.subr.mxu0 0.0
        %3085 = vmatpush2.msra.mxu0 0.0
        %3086 = vmatprep.subr.mxu0 0.0
        %3087 = vmatpush2.msra.mxu0 0.0
        %3088 = vmatprep.subr.mxu0 0.0
        %3089 = vmatpush2.msra.mxu0 0.0
        %3090 = vmatprep.subr.mxu0 0.0
        %3091 = vmatpush2.msra.mxu0 0.0
        %3092 = vmatprep.subr.mxu0 0.0
        %3093 = vmatpush2.msra.mxu0 0.0
        %3094 = vmatprep.subr.mxu0 0.0
        %3095 = vmatpush2.msra.mxu0 0.0
        %3096 = vmatprep.mubr.f32.mxu0 0.0
        %3097 = vmatmul.mubr.f32.gmra.mxu0 %v530
        %v3098 = vpop.f32.mrf.mxu0
        %v3099 = vadd.f32 0.0, %v3098
        %v3100 = vpop.f32.mrf.mxu0
        %v3101 = vadd.f32 0.0, %v3100
        %3102 = vmatprep.mubr.f32.mxu0 0.0
        %3103 = vmatmul.mubr.f32.gmra.mxu0 %v533
        %v3104 = vpop.f32.mrf.mxu0
        %v3105 = vadd.f32 0.0, %v3104
        %v3106 = vpop.f32.mrf.mxu0
        %v3107 = vadd.f32 0.0, %v3106
        %3108 = vmatprep.mubr.f32.mxu0 0.0
        %3109 = vmatmul.mubr.f32.gmra.mxu0 %v536
        %v3110 = vpop.f32.mrf.mxu0
        %v3111 = vadd.f32 0.0, %v3110
        %v3112 = vpop.f32.mrf.mxu0
        %v3113 = vadd.f32 0.0, %v3112
        %3114 = vmatprep.mubr.f32.mxu0 0.0
        %3115 = vmatmul.mubr.f32.gmra.mxu0 %v539
        %v3116 = vpop.f32.mrf.mxu0
        %v3117 = vadd.f32 0.0, %v3116
        %v3118 = vpop.f32.mrf.mxu0
        %v3119 = vadd.f32 0.0, %v3118
        %3120 = vmatprep.mubr.f32.mxu0 0.0
        %3121 = vmatmul.mubr.f32.gmra.mxu0 %v542
        %v3122 = vpop.f32.mrf.mxu0
        %v3123 = vadd.f32 0.0, %v3122
        %v3124 = vpop.f32.mrf.mxu0
        %v3125 = vadd.f32 0.0, %v3124
        %3126 = vmatprep.mubr.f32.mxu0 0.0
        %3127 = vmatmul.mubr.f32.gmra.mxu0 %v545
        %v3128 = vpop.f32.mrf.mxu0
        %v3129 = vadd.f32 0.0, %v3128
        %v3130 = vpop.f32.mrf.mxu0
        %v3131 = vadd.f32 0.0, %v3130
        %3132 = vmatprep.mubr.f32.mxu0 0.0
        %3133 = vmatmul.mubr.f32.gmra.mxu0 %v548
        %v3134 = vpop.f32.mrf.mxu0
        %v3135 = vadd.f32 0.0, %v3134
        %v3136 = vpop.f32.mrf.mxu0
        %v3137 = vadd.f32 0.0, %v3136
        %3138 = vmatprep.mubr.f32.mxu0 0.0
        %3139 = vmatmul.mubr.f32.gmra.mxu0 %v551
        %v3140 = vpop.f32.mrf.mxu0
        %v3141 = vadd.f32 0.0, %v3140
        %v3142 = vpop.f32.mrf.mxu0
        %v3143 = vadd.f32 0.0, %v3142
        %3144 = vmatprep.mubr.f32.mxu0 0.0
        %3145 = vmatmul.mubr.f32.gmra.mxu0 %v554
        %v3146 = vpop.f32.mrf.mxu0
        %v3147 = vadd.f32 0.0, %v3146
        %v3148 = vpop.f32.mrf.mxu0
        %v3149 = vadd.f32 0.0, %v3148
        %3150 = vmatprep.mubr.f32.mxu0 0.0
        %3151 = vmatmul.mubr.f32.gmra.mxu0 %v557
        %v3152 = vpop.f32.mrf.mxu0
        %v3153 = vadd.f32 0.0, %v3152
        %v3154 = vpop.f32.mrf.mxu0
        %v3155 = vadd.f32 0.0, %v3154
        %3156 = vmatprep.mubr.f32.mxu0 0.0
        %3157 = vmatmul.mubr.f32.gmra.mxu0 %v560
        %v3158 = vpop.f32.mrf.mxu0
        %v3159 = vadd.f32 0.0, %v3158
        %v3160 = vpop.f32.mrf.mxu0
        %v3161 = vadd.f32 0.0, %v3160
        %3162 = vmatprep.mubr.f32.mxu0 0.0
        %3163 = vmatmul.mubr.f32.gmra.mxu0 %v563
        %v3164 = vpop.f32.mrf.mxu0
        %v3165 = vadd.f32 0.0, %v3164
        %v3166 = vpop.f32.mrf.mxu0
        %v3167 = vadd.f32 0.0, %v3166
        %3168 = vmatprep.mubr.f32.mxu0 0.0
        %3169 = vmatmul.mubr.f32.gmra.mxu0 %v566
        %v3170 = vpop.f32.mrf.mxu0
        %v3171 = vadd.f32 0.0, %v3170
        %v3172 = vpop.f32.mrf.mxu0
        %v3173 = vadd.f32 0.0, %v3172
        %3174 = vmatprep.mubr.f32.mxu0 0.0
        %3175 = vmatmul.mubr.f32.gmra.mxu0 %v569
        %v3176 = vpop.f32.mrf.mxu0
        %v3177 = vadd.f32 0.0, %v3176
        %v3178 = vpop.f32.mrf.mxu0
        %v3179 = vadd.f32 0.0, %v3178
        %3180 = vmatprep.mubr.f32.mxu0 0.0
        %3181 = vmatmul.mubr.f32.gmra.mxu0 %v572
        %v3182 = vpop.f32.mrf.mxu0
        %v3183 = vadd.f32 0.0, %v3182
        %v3184 = vpop.f32.mrf.mxu0
        %v3185 = vadd.f32 0.0, %v3184
        %3186 = vmatprep.mubr.f32.mxu0 0.0
        %3187 = vmatmul.mubr.f32.gmra.mxu0 %v575
        %v3188 = vpop.f32.mrf.mxu0
        %v3189 = vadd.f32 0.0, %v3188
        %v3190 = vpop.f32.mrf.mxu0
        %v3191 = vadd.f32 0.0, %v3190
        %3192 = vmatprep.mubr.f32.mxu0 0.0
        %3193 = vmatmul.mubr.f32.gmra.mxu0 %v578
        %v3194 = vpop.f32.mrf.mxu0
        %v3195 = vadd.f32 0.0, %v3194
        %v3196 = vpop.f32.mrf.mxu0
        %v3197 = vadd.f32 0.0, %v3196
        %3198 = vmatprep.mubr.f32.mxu0 0.0
        %3199 = vmatmul.mubr.f32.gmra.mxu0 %v581
        %v3200 = vpop.f32.mrf.mxu0
        %v3201 = vadd.f32 0.0, %v3200
        %v3202 = vpop.f32.mrf.mxu0
        %v3203 = vadd.f32 0.0, %v3202
        %3204 = vmatprep.mubr.f32.mxu0 0.0
        %3205 = vmatmul.mubr.f32.gmra.mxu0 %v584
        %v3206 = vpop.f32.mrf.mxu0
        %v3207 = vadd.f32 0.0, %v3206
        %v3208 = vpop.f32.mrf.mxu0
        %v3209 = vadd.f32 0.0, %v3208
        %3210 = vmatprep.mubr.f32.mxu0 0.0
        %3211 = vmatmul.mubr.f32.gmra.mxu0 %v587
        %v3212 = vpop.f32.mrf.mxu0
        %v3213 = vadd.f32 0.0, %v3212
        %v3214 = vpop.f32.mrf.mxu0
        %v3215 = vadd.f32 0.0, %v3214
        %3216 = vmatprep.mubr.f32.mxu0 0.0
        %3217 = vmatmul.mubr.f32.gmra.mxu0 %v590
        %v3218 = vpop.f32.mrf.mxu0
        %v3219 = vadd.f32 0.0, %v3218
        %v3220 = vpop.f32.mrf.mxu0
        %v3221 = vadd.f32 0.0, %v3220
        %3222 = vmatprep.mubr.f32.mxu0 0.0
        %3223 = vmatmul.mubr.f32.gmra.mxu0 %v593
        %v3224 = vpop.f32.mrf.mxu0
        %v3225 = vadd.f32 0.0, %v3224
        %v3226 = vpop.f32.mrf.mxu0
        %v3227 = vadd.f32 0.0, %v3226
        %3228 = vmatprep.mubr.f32.mxu0 0.0
        %3229 = vmatmul.mubr.f32.gmra.mxu0 %v596
        %v3230 = vpop.f32.mrf.mxu0
        %v3231 = vadd.f32 0.0, %v3230
        %v3232 = vpop.f32.mrf.mxu0
        %v3233 = vadd.f32 0.0, %v3232
        %3234 = vmatprep.mubr.f32.mxu0 0.0
        %3235 = vmatmul.mubr.f32.gmra.mxu0 %v599
        %v3236 = vpop.f32.mrf.mxu0
        %v3237 = vadd.f32 0.0, %v3236
        %v3238 = vpop.f32.mrf.mxu0
        %v3239 = vadd.f32 0.0, %v3238
        %3240 = vmatprep.mubr.f32.mxu0 0.0
        %3241 = vmatmul.mubr.f32.gmra.mxu0 %v602
        %v3242 = vpop.f32.mrf.mxu0
        %v3243 = vadd.f32 0.0, %v3242
        %v3244 = vpop.f32.mrf.mxu0
        %v3245 = vadd.f32 0.0, %v3244
        %3246 = vmatprep.mubr.f32.mxu0 0.0
        %3247 = vmatmul.mubr.f32.gmra.mxu0 %v605
        %v3248 = vpop.f32.mrf.mxu0
        %v3249 = vadd.f32 0.0, %v3248
        %v3250 = vpop.f32.mrf.mxu0
        %v3251 = vadd.f32 0.0, %v3250
        %3252 = vmatprep.mubr.f32.mxu0 0.0
        %3253 = vmatmul.mubr.f32.gmra.mxu0 %v608
        %v3254 = vpop.f32.mrf.mxu0
        %v3255 = vadd.f32 0.0, %v3254
        %v3256 = vpop.f32.mrf.mxu0
        %v3257 = vadd.f32 0.0, %v3256
        %3258 = vmatprep.mubr.f32.mxu0 0.0
        %3259 = vmatmul.mubr.f32.gmra.mxu0 %v611
        %v3260 = vpop.f32.mrf.mxu0
        %v3261 = vadd.f32 0.0, %v3260
        %v3262 = vpop.f32.mrf.mxu0
        %v3263 = vadd.f32 0.0, %v3262
        %3264 = vmatprep.mubr.f32.mxu0 0.0
        %3265 = vmatmul.mubr.f32.gmra.mxu0 %v2007
        %v3266 = vpop.f32.mrf.mxu0
        %v3267 = vadd.f32 0.0, %v3266
        %v3268 = vpop.f32.mrf.mxu0
        %v3269 = vadd.f32 0.0, %v3268
        %3270 = vmatprep.mubr.f32.mxu0 0.0
        %3271 = vmatmul.mubr.f32.gmra.mxu0 %v2010
        %v3272 = vpop.f32.mrf.mxu0
        %v3273 = vadd.f32 0.0, %v3272
        %v3274 = vpop.f32.mrf.mxu0
        %v3275 = vadd.f32 0.0, %v3274
        %3276 = vmatprep.mubr.f32.mxu0 0.0
        %3277 = vmatmul.mubr.f32.gmra.mxu0 %v521
        %v3278 = vpop.f32.mrf.mxu0
        %v3279 = vadd.f32 0.0, %v3278
        %v3280 = vpop.f32.mrf.mxu0
        %v3281 = vadd.f32 0.0, %v3280
        %3282 = vmatprep.mubr.f32.mxu0 0.0
        %3283 = vmatmul.mubr.f32.gmra.mxu0 %v521
        %v3284 = vpop.f32.mrf.mxu0
        %v3285 = vadd.f32 0.0, %v3284
        %v3286 = vpop.f32.mrf.mxu0
        %v3287 = vadd.f32 0.0, %v3286
        %3288 = vdwg.mxu0
        %v3289 = vadd.f32 %v2951, %v3099
        %v3290 = vadd.f32 %v2952, %v3101
        %v3291 = vadd.f32 %v2953, %v3105
        %v3292 = vadd.f32 %v2954, %v3107
        %v3293 = vadd.f32 %v2955, %v3111
        %v3294 = vadd.f32 %v2956, %v3113
        %v3295 = vadd.f32 %v2957, %v3117
        %v3296 = vadd.f32 %v2958, %v3119
        %v3297 = vadd.f32 %v2959, %v3123
        %v3298 = vadd.f32 %v2960, %v3125
        %v3299 = vadd.f32 %v2961, %v3129
        %v3300 = vadd.f32 %v2962, %v3131
        %v3301 = vadd.f32 %v2963, %v3135
        %v3302 = vadd.f32 %v2964, %v3137
        %v3303 = vadd.f32 %v2965, %v3141
        %v3304 = vadd.f32 %v2966, %v3143
        %v3305 = vadd.f32 %v2967, %v3147
        %v3306 = vadd.f32 %v2968, %v3149
        %v3307 = vadd.f32 %v2969, %v3153
        %v3308 = vadd.f32 %v2970, %v3155
        %v3309 = vadd.f32 %v2971, %v3159
        %v3310 = vadd.f32 %v2972, %v3161
        %v3311 = vadd.f32 %v2973, %v3165
        %v3312 = vadd.f32 %v2974, %v3167
        %v3313 = vadd.f32 %v2975, %v3171
        %v3314 = vadd.f32 %v2976, %v3173
        %v3315 = vadd.f32 %v2977, %v3177
        %v3316 = vadd.f32 %v2978, %v3179
        %v3317 = vadd.f32 %v2979, %v3183
        %v3318 = vadd.f32 %v2980, %v3185
        %v3319 = vadd.f32 %v2981, %v3189
        %v3320 = vadd.f32 %v2982, %v3191
        %v3321 = vadd.f32 %v2983, %v3195
        %v3322 = vadd.f32 %v2984, %v3197
        %v3323 = vadd.f32 %v2985, %v3201
        %v3324 = vadd.f32 %v2986, %v3203
        %v3325 = vadd.f32 %v2987, %v3207
        %v3326 = vadd.f32 %v2988, %v3209
        %v3327 = vadd.f32 %v2989, %v3213
        %v3328 = vadd.f32 %v2990, %v3215
        %v3329 = vadd.f32 %v2991, %v3219
        %v3330 = vadd.f32 %v2992, %v3221
        %v3331 = vadd.f32 %v2993, %v3225
        %v3332 = vadd.f32 %v2994, %v3227
        %v3333 = vadd.f32 %v2995, %v3231
        %v3334 = vadd.f32 %v2996, %v3233
        %v3335 = vadd.f32 %v2997, %v3237
        %v3336 = vadd.f32 %v2998, %v3239
        %v3337 = vadd.f32 %v2999, %v3243
        %v3338 = vadd.f32 %v3000, %v3245
        %v3339 = vadd.f32 %v3001, %v3249
        %v3340 = vadd.f32 %v3002, %v3251
        %v3341 = vadd.f32 %v3003, %v3255
        %v3342 = vadd.f32 %v3004, %v3257
        %v3343 = vadd.f32 %v3005, %v3261
        %v3344 = vadd.f32 %v3006, %v3263
        %v3345 = vadd.f32 %v3007, %v3267
        %v3346 = vadd.f32 %v3008, %v3269
        %v3347 = vadd.f32 %v3009, %v3273
        %v3348 = vadd.f32 %v3010, %v3275
        %v3349 = vadd.f32 %v3011, %v3279
        %v3350 = vadd.f32 %v3012, %v3281
        %v3351 = vadd.f32 %v3013, %v3285
        %v3352 = vadd.f32 %v3014, %v3287
        %s3353 = scalar_lea.vmem [#allocation6], 1024
        %v3354 = vld [vmem:[%s3353] sm:$0xff]
        %v3355 = vld [vmem:[%s3353 + $0x8] sm:$0xff]
        %v3356 = vld [vmem:[%s3353 + $0x10] sm:$0xff]
        %v3357 = vld [vmem:[%s3353 + $0x18] sm:$0xff]
        %v3358 = vld [vmem:[%s3353 + $0x20] sm:$0xff]
        %v3359 = vld [vmem:[%s3353 + $0x28] sm:$0xff]
        %v3360 = vld [vmem:[%s3353 + $0x30] sm:$0xff]
        %v3361 = vld [vmem:[%s3353 + $0x38] sm:$0xff]
        %v3362 = vld [vmem:[%s3353 + $0x40] sm:$0xff]
        %v3363 = vld [vmem:[%s3353 + $0x48] sm:$0xff]
        %v3364 = vld [vmem:[%s3353 + $0x50] sm:$0xff]
        %v3365 = vld [vmem:[%s3353 + $0x58] sm:$0xff]
        %v3366 = vld [vmem:[%s3353 + $0x60] sm:$0xff]
        %v3367 = vld [vmem:[%s3353 + $0x68] sm:$0xff]
        %v3368 = vld [vmem:[%s3353 + $0x70] sm:$0xff]
        %v3369 = vld [vmem:[%s3353 + $0x78] sm:$0xff]
        %3370 = vmatprep.subr.mxu0 0.0
        %3371 = vmatpush1.msra.mxu0 0.0
        %3372 = vmatprep.subr.mxu0 0.0
        %3373 = vmatpush1.msra.mxu0 0.0
        %3374 = vmatprep.subr.mxu0 0.0
        %3375 = vmatpush1.msra.mxu0 0.0
        %3376 = vmatprep.subr.mxu0 0.0
        %3377 = vmatpush1.msra.mxu0 0.0
        %3378 = vmatprep.subr.mxu0 0.0
        %3379 = vmatpush1.msra.mxu0 0.0
        %3380 = vmatprep.subr.mxu0 0.0
        %3381 = vmatpush1.msra.mxu0 0.0
        %3382 = vmatprep.subr.mxu0 0.0
        %3383 = vmatpush1.msra.mxu0 0.0
        %3384 = vmatprep.subr.mxu0 0.0
        %3385 = vmatpush1.msra.mxu0 0.0
        %3386 = vmatprep.subr.mxu0 %v3369
        %3387 = vmatpush1.msra.mxu0 %v3368
        %3388 = vmatprep.subr.mxu0 %v3367
        %3389 = vmatpush1.msra.mxu0 %v3366
        %3390 = vmatprep.subr.mxu0 %v3365
        %3391 = vmatpush1.msra.mxu0 %v3364
        %3392 = vmatprep.subr.mxu0 %v3363
        %3393 = vmatpush1.msra.mxu0 %v3362
        %3394 = vmatprep.subr.mxu0 %v3361
        %3395 = vmatpush1.msra.mxu0 %v3360
        %3396 = vmatprep.subr.mxu0 %v3359
        %3397 = vmatpush1.msra.mxu0 %v3358
        %3398 = vmatprep.subr.mxu0 %v3357
        %3399 = vmatpush1.msra.mxu0 %v3356
        %3400 = vmatprep.subr.mxu0 %v3355
        %3401 = vmatpush1.msra.mxu0 %v3354
        %3402 = vmatprep.subr.mxu0 0.0
        %3403 = vmatpush2.msra.mxu0 0.0
        %3404 = vmatprep.subr.mxu0 0.0
        %3405 = vmatpush2.msra.mxu0 0.0
        %3406 = vmatprep.subr.mxu0 0.0
        %3407 = vmatpush2.msra.mxu0 0.0
        %3408 = vmatprep.subr.mxu0 0.0
        %3409 = vmatpush2.msra.mxu0 0.0
        %3410 = vmatprep.subr.mxu0 0.0
        %3411 = vmatpush2.msra.mxu0 0.0
        %3412 = vmatprep.subr.mxu0 0.0
        %3413 = vmatpush2.msra.mxu0 0.0
        %3414 = vmatprep.subr.mxu0 0.0
        %3415 = vmatpush2.msra.mxu0 0.0
        %3416 = vmatprep.subr.mxu0 0.0
        %3417 = vmatpush2.msra.mxu0 0.0
        %3418 = vmatprep.subr.mxu0 0.0
        %3419 = vmatpush2.msra.mxu0 0.0
        %3420 = vmatprep.subr.mxu0 0.0
        %3421 = vmatpush2.msra.mxu0 0.0
        %3422 = vmatprep.subr.mxu0 0.0
        %3423 = vmatpush2.msra.mxu0 0.0
        %3424 = vmatprep.subr.mxu0 0.0
        %3425 = vmatpush2.msra.mxu0 0.0
        %3426 = vmatprep.subr.mxu0 0.0
        %3427 = vmatpush2.msra.mxu0 0.0
        %3428 = vmatprep.subr.mxu0 0.0
        %3429 = vmatpush2.msra.mxu0 0.0
        %3430 = vmatprep.subr.mxu0 0.0
        %3431 = vmatpush2.msra.mxu0 0.0
        %3432 = vmatprep.subr.mxu0 0.0
        %3433 = vmatpush2.msra.mxu0 0.0
        %3434 = vmatprep.mubr.f32.mxu0 0.0
        %3435 = vmatmul.mubr.f32.gmra.mxu0 %v1241
        %v3436 = vpop.f32.mrf.mxu0
        %v3437 = vadd.f32 0.0, %v3436
        %v3438 = vpop.f32.mrf.mxu0
        %v3439 = vadd.f32 0.0, %v3438
        %3440 = vmatprep.mubr.f32.mxu0 0.0
        %3441 = vmatmul.mubr.f32.gmra.mxu0 %v1244
        %v3442 = vpop.f32.mrf.mxu0
        %v3443 = vadd.f32 0.0, %v3442
        %v3444 = vpop.f32.mrf.mxu0
        %v3445 = vadd.f32 0.0, %v3444
        %3446 = vmatprep.mubr.f32.mxu0 0.0
        %3447 = vmatmul.mubr.f32.gmra.mxu0 %v1247
        %v3448 = vpop.f32.mrf.mxu0
        %v3449 = vadd.f32 0.0, %v3448
        %v3450 = vpop.f32.mrf.mxu0
        %v3451 = vadd.f32 0.0, %v3450
        %3452 = vmatprep.mubr.f32.mxu0 0.0
        %3453 = vmatmul.mubr.f32.gmra.mxu0 %v1250
        %v3454 = vpop.f32.mrf.mxu0
        %v3455 = vadd.f32 0.0, %v3454
        %v3456 = vpop.f32.mrf.mxu0
        %v3457 = vadd.f32 0.0, %v3456
        %3458 = vmatprep.mubr.f32.mxu0 0.0
        %3459 = vmatmul.mubr.f32.gmra.mxu0 %v1253
        %v3460 = vpop.f32.mrf.mxu0
        %v3461 = vadd.f32 0.0, %v3460
        %v3462 = vpop.f32.mrf.mxu0
        %v3463 = vadd.f32 0.0, %v3462
        %3464 = vmatprep.mubr.f32.mxu0 0.0
        %3465 = vmatmul.mubr.f32.gmra.mxu0 %v1256
        %v3466 = vpop.f32.mrf.mxu0
        %v3467 = vadd.f32 0.0, %v3466
        %v3468 = vpop.f32.mrf.mxu0
        %v3469 = vadd.f32 0.0, %v3468
        %3470 = vmatprep.mubr.f32.mxu0 0.0
        %3471 = vmatmul.mubr.f32.gmra.mxu0 %v1259
        %v3472 = vpop.f32.mrf.mxu0
        %v3473 = vadd.f32 0.0, %v3472
        %v3474 = vpop.f32.mrf.mxu0
        %v3475 = vadd.f32 0.0, %v3474
        %3476 = vmatprep.mubr.f32.mxu0 0.0
        %3477 = vmatmul.mubr.f32.gmra.mxu0 %v1262
        %v3478 = vpop.f32.mrf.mxu0
        %v3479 = vadd.f32 0.0, %v3478
        %v3480 = vpop.f32.mrf.mxu0
        %v3481 = vadd.f32 0.0, %v3480
        %3482 = vmatprep.mubr.f32.mxu0 0.0
        %3483 = vmatmul.mubr.f32.gmra.mxu0 %v1265
        %v3484 = vpop.f32.mrf.mxu0
        %v3485 = vadd.f32 0.0, %v3484
        %v3486 = vpop.f32.mrf.mxu0
        %v3487 = vadd.f32 0.0, %v3486
        %3488 = vmatprep.mubr.f32.mxu0 0.0
        %3489 = vmatmul.mubr.f32.gmra.mxu0 %v1268
        %v3490 = vpop.f32.mrf.mxu0
        %v3491 = vadd.f32 0.0, %v3490
        %v3492 = vpop.f32.mrf.mxu0
        %v3493 = vadd.f32 0.0, %v3492
        %3494 = vmatprep.mubr.f32.mxu0 0.0
        %3495 = vmatmul.mubr.f32.gmra.mxu0 %v1271
        %v3496 = vpop.f32.mrf.mxu0
        %v3497 = vadd.f32 0.0, %v3496
        %v3498 = vpop.f32.mrf.mxu0
        %v3499 = vadd.f32 0.0, %v3498
        %3500 = vmatprep.mubr.f32.mxu0 0.0
        %3501 = vmatmul.mubr.f32.gmra.mxu0 %v1274
        %v3502 = vpop.f32.mrf.mxu0
        %v3503 = vadd.f32 0.0, %v3502
        %v3504 = vpop.f32.mrf.mxu0
        %v3505 = vadd.f32 0.0, %v3504
        %3506 = vmatprep.mubr.f32.mxu0 0.0
        %3507 = vmatmul.mubr.f32.gmra.mxu0 %v1277
        %v3508 = vpop.f32.mrf.mxu0
        %v3509 = vadd.f32 0.0, %v3508
        %v3510 = vpop.f32.mrf.mxu0
        %v3511 = vadd.f32 0.0, %v3510
        %3512 = vmatprep.mubr.f32.mxu0 0.0
        %3513 = vmatmul.mubr.f32.gmra.mxu0 %v1280
        %v3514 = vpop.f32.mrf.mxu0
        %v3515 = vadd.f32 0.0, %v3514
        %v3516 = vpop.f32.mrf.mxu0
        %v3517 = vadd.f32 0.0, %v3516
        %3518 = vmatprep.mubr.f32.mxu0 0.0
        %3519 = vmatmul.mubr.f32.gmra.mxu0 %v1283
        %v3520 = vpop.f32.mrf.mxu0
        %v3521 = vadd.f32 0.0, %v3520
        %v3522 = vpop.f32.mrf.mxu0
        %v3523 = vadd.f32 0.0, %v3522
        %3524 = vmatprep.mubr.f32.mxu0 0.0
        %3525 = vmatmul.mubr.f32.gmra.mxu0 %v1286
        %v3526 = vpop.f32.mrf.mxu0
        %v3527 = vadd.f32 0.0, %v3526
        %v3528 = vpop.f32.mrf.mxu0
        %v3529 = vadd.f32 0.0, %v3528
        %3530 = vmatprep.mubr.f32.mxu0 0.0
        %3531 = vmatmul.mubr.f32.gmra.mxu0 %v1289
        %v3532 = vpop.f32.mrf.mxu0
        %v3533 = vadd.f32 0.0, %v3532
        %v3534 = vpop.f32.mrf.mxu0
        %v3535 = vadd.f32 0.0, %v3534
        %3536 = vmatprep.mubr.f32.mxu0 0.0
        %3537 = vmatmul.mubr.f32.gmra.mxu0 %v1292
        %v3538 = vpop.f32.mrf.mxu0
        %v3539 = vadd.f32 0.0, %v3538
        %v3540 = vpop.f32.mrf.mxu0
        %v3541 = vadd.f32 0.0, %v3540
        %3542 = vmatprep.mubr.f32.mxu0 0.0
        %3543 = vmatmul.mubr.f32.gmra.mxu0 %v1295
        %v3544 = vpop.f32.mrf.mxu0
        %v3545 = vadd.f32 0.0, %v3544
        %v3546 = vpop.f32.mrf.mxu0
        %v3547 = vadd.f32 0.0, %v3546
        %3548 = vmatprep.mubr.f32.mxu0 0.0
        %3549 = vmatmul.mubr.f32.gmra.mxu0 %v1298
        %v3550 = vpop.f32.mrf.mxu0
        %v3551 = vadd.f32 0.0, %v3550
        %v3552 = vpop.f32.mrf.mxu0
        %v3553 = vadd.f32 0.0, %v3552
        %3554 = vmatprep.mubr.f32.mxu0 0.0
        %3555 = vmatmul.mubr.f32.gmra.mxu0 %v1301
        %v3556 = vpop.f32.mrf.mxu0
        %v3557 = vadd.f32 0.0, %v3556
        %v3558 = vpop.f32.mrf.mxu0
        %v3559 = vadd.f32 0.0, %v3558
        %3560 = vmatprep.mubr.f32.mxu0 0.0
        %3561 = vmatmul.mubr.f32.gmra.mxu0 %v1304
        %v3562 = vpop.f32.mrf.mxu0
        %v3563 = vadd.f32 0.0, %v3562
        %v3564 = vpop.f32.mrf.mxu0
        %v3565 = vadd.f32 0.0, %v3564
        %3566 = vmatprep.mubr.f32.mxu0 0.0
        %3567 = vmatmul.mubr.f32.gmra.mxu0 %v1307
        %v3568 = vpop.f32.mrf.mxu0
        %v3569 = vadd.f32 0.0, %v3568
        %v3570 = vpop.f32.mrf.mxu0
        %v3571 = vadd.f32 0.0, %v3570
        %3572 = vmatprep.mubr.f32.mxu0 0.0
        %3573 = vmatmul.mubr.f32.gmra.mxu0 %v1310
        %v3574 = vpop.f32.mrf.mxu0
        %v3575 = vadd.f32 0.0, %v3574
        %v3576 = vpop.f32.mrf.mxu0
        %v3577 = vadd.f32 0.0, %v3576
        %3578 = vmatprep.mubr.f32.mxu0 0.0
        %3579 = vmatmul.mubr.f32.gmra.mxu0 %v1313
        %v3580 = vpop.f32.mrf.mxu0
        %v3581 = vadd.f32 0.0, %v3580
        %v3582 = vpop.f32.mrf.mxu0
        %v3583 = vadd.f32 0.0, %v3582
        %3584 = vmatprep.mubr.f32.mxu0 0.0
        %3585 = vmatmul.mubr.f32.gmra.mxu0 %v1316
        %v3586 = vpop.f32.mrf.mxu0
        %v3587 = vadd.f32 0.0, %v3586
        %v3588 = vpop.f32.mrf.mxu0
        %v3589 = vadd.f32 0.0, %v3588
        %3590 = vmatprep.mubr.f32.mxu0 0.0
        %3591 = vmatmul.mubr.f32.gmra.mxu0 %v1319
        %v3592 = vpop.f32.mrf.mxu0
        %v3593 = vadd.f32 0.0, %v3592
        %v3594 = vpop.f32.mrf.mxu0
        %v3595 = vadd.f32 0.0, %v3594
        %3596 = vmatprep.mubr.f32.mxu0 0.0
        %3597 = vmatmul.mubr.f32.gmra.mxu0 %v1322
        %v3598 = vpop.f32.mrf.mxu0
        %v3599 = vadd.f32 0.0, %v3598
        %v3600 = vpop.f32.mrf.mxu0
        %v3601 = vadd.f32 0.0, %v3600
        %3602 = vmatprep.mubr.f32.mxu0 0.0
        %3603 = vmatmul.mubr.f32.gmra.mxu0 %v2351
        %v3604 = vpop.f32.mrf.mxu0
        %v3605 = vadd.f32 0.0, %v3604
        %v3606 = vpop.f32.mrf.mxu0
        %v3607 = vadd.f32 0.0, %v3606
        %3608 = vmatprep.mubr.f32.mxu0 0.0
        %3609 = vmatmul.mubr.f32.gmra.mxu0 %v2354
        %v3610 = vpop.f32.mrf.mxu0
        %v3611 = vadd.f32 0.0, %v3610
        %v3612 = vpop.f32.mrf.mxu0
        %v3613 = vadd.f32 0.0, %v3612
        %3614 = vmatprep.mubr.f32.mxu0 0.0
        %3615 = vmatmul.mubr.f32.gmra.mxu0 %v521
        %v3616 = vpop.f32.mrf.mxu0
        %v3617 = vadd.f32 0.0, %v3616
        %v3618 = vpop.f32.mrf.mxu0
        %v3619 = vadd.f32 0.0, %v3618
        %3620 = vmatprep.mubr.f32.mxu0 0.0
        %3621 = vmatmul.mubr.f32.gmra.mxu0 %v521
        %v3622 = vpop.f32.mrf.mxu0
        %v3623 = vadd.f32 0.0, %v3622
        %v3624 = vpop.f32.mrf.mxu0
        %v3625 = vadd.f32 0.0, %v3624
        %3626 = vdwg.mxu0
        %v3627 = vadd.f32 %v3289, %v3437
        %v3628 = vadd.f32 %v3290, %v3439
        %v3629 = vadd.f32 %v3291, %v3443
        %v3630 = vadd.f32 %v3292, %v3445
        %v3631 = vadd.f32 %v3293, %v3449
        %v3632 = vadd.f32 %v3294, %v3451
        %v3633 = vadd.f32 %v3295, %v3455
        %v3634 = vadd.f32 %v3296, %v3457
        %v3635 = vadd.f32 %v3297, %v3461
        %v3636 = vadd.f32 %v3298, %v3463
        %v3637 = vadd.f32 %v3299, %v3467
        %v3638 = vadd.f32 %v3300, %v3469
        %v3639 = vadd.f32 %v3301, %v3473
        %v3640 = vadd.f32 %v3302, %v3475
        %v3641 = vadd.f32 %v3303, %v3479
        %v3642 = vadd.f32 %v3304, %v3481
        %v3643 = vadd.f32 %v3305, %v3485
        %v3644 = vadd.f32 %v3306, %v3487
        %v3645 = vadd.f32 %v3307, %v3491
        %v3646 = vadd.f32 %v3308, %v3493
        %v3647 = vadd.f32 %v3309, %v3497
        %v3648 = vadd.f32 %v3310, %v3499
        %v3649 = vadd.f32 %v3311, %v3503
        %v3650 = vadd.f32 %v3312, %v3505
        %v3651 = vadd.f32 %v3313, %v3509
        %v3652 = vadd.f32 %v3314, %v3511
        %v3653 = vadd.f32 %v3315, %v3515
        %v3654 = vadd.f32 %v3316, %v3517
        %v3655 = vadd.f32 %v3317, %v3521
        %v3656 = vadd.f32 %v3318, %v3523
        %v3657 = vadd.f32 %v3319, %v3527
        %v3658 = vadd.f32 %v3320, %v3529
        %v3659 = vadd.f32 %v3321, %v3533
        %v3660 = vadd.f32 %v3322, %v3535
        %v3661 = vadd.f32 %v3323, %v3539
        %v3662 = vadd.f32 %v3324, %v3541
        %v3663 = vadd.f32 %v3325, %v3545
        %v3664 = vadd.f32 %v3326, %v3547
        %v3665 = vadd.f32 %v3327, %v3551
        %v3666 = vadd.f32 %v3328, %v3553
        %v3667 = vadd.f32 %v3329, %v3557
        %v3668 = vadd.f32 %v3330, %v3559
        %v3669 = vadd.f32 %v3331, %v3563
        %v3670 = vadd.f32 %v3332, %v3565
        %v3671 = vadd.f32 %v3333, %v3569
        %v3672 = vadd.f32 %v3334, %v3571
        %v3673 = vadd.f32 %v3335, %v3575
        %v3674 = vadd.f32 %v3336, %v3577
        %v3675 = vadd.f32 %v3337, %v3581
        %v3676 = vadd.f32 %v3338, %v3583
        %v3677 = vadd.f32 %v3339, %v3587
        %v3678 = vadd.f32 %v3340, %v3589
        %v3679 = vadd.f32 %v3341, %v3593
        %v3680 = vadd.f32 %v3342, %v3595
        %v3681 = vadd.f32 %v3343, %v3599
        %v3682 = vadd.f32 %v3344, %v3601
        %v3683 = vadd.f32 %v3345, %v3605
        %v3684 = vadd.f32 %v3346, %v3607
        %v3685 = vadd.f32 %v3347, %v3611
        %v3686 = vadd.f32 %v3348, %v3613
        %v3687 = vadd.f32 %v3349, %v3617
        %v3688 = vadd.f32 %v3350, %v3619
        %v3689 = vadd.f32 %v3351, %v3623
        %v3690 = vadd.f32 %v3352, %v3625
        %v3691 = vld [vmem:[%s2] sm:$0x3]
        %v3693 = vlaneseq
        %v3694 = vshrl.u32 %v3693, 7
        %v3695 = vsub.s32 0, %v3694
        %v3696 = vrot.slane %v3691, %v3695
        %v3697 = vlaneseq
        %v3698 = vshrl.u32 %v3697, 7
        %v3699 = vsub.s32 1, %v3698
        %v3700 = vrot.slane %v3691, %v3699
        %v3703 = vadd.f32 %v3627, %v3696
        %v3704 = vadd.f32 %v3628, %v3700
        %v3705 = vadd.f32 %v3629, %v3696
        %v3706 = vadd.f32 %v3630, %v3700
        %v3707 = vadd.f32 %v3631, %v3696
        %v3708 = vadd.f32 %v3632, %v3700
        %v3709 = vadd.f32 %v3633, %v3696
        %v3710 = vadd.f32 %v3634, %v3700
        %v3711 = vadd.f32 %v3635, %v3696
        %v3712 = vadd.f32 %v3636, %v3700
        %v3713 = vadd.f32 %v3637, %v3696
        %v3714 = vadd.f32 %v3638, %v3700
        %v3715 = vadd.f32 %v3639, %v3696
        %v3716 = vadd.f32 %v3640, %v3700
        %v3717 = vadd.f32 %v3641, %v3696
        %v3718 = vadd.f32 %v3642, %v3700
        %v3719 = vadd.f32 %v3643, %v3696
        %v3720 = vadd.f32 %v3644, %v3700
        %v3721 = vadd.f32 %v3645, %v3696
        %v3722 = vadd.f32 %v3646, %v3700
        %v3723 = vadd.f32 %v3647, %v3696
        %v3724 = vadd.f32 %v3648, %v3700
        %v3725 = vadd.f32 %v3649, %v3696
        %v3726 = vadd.f32 %v3650, %v3700
        %v3727 = vadd.f32 %v3651, %v3696
        %v3728 = vadd.f32 %v3652, %v3700
        %v3729 = vadd.f32 %v3653, %v3696
        %v3730 = vadd.f32 %v3654, %v3700
        %v3731 = vadd.f32 %v3655, %v3696
        %v3732 = vadd.f32 %v3656, %v3700
        %v3733 = vadd.f32 %v3657, %v3696
        %v3734 = vadd.f32 %v3658, %v3700
        %v3735 = vadd.f32 %v3659, %v3696
        %v3736 = vadd.f32 %v3660, %v3700
        %v3737 = vadd.f32 %v3661, %v3696
        %v3738 = vadd.f32 %v3662, %v3700
        %v3739 = vadd.f32 %v3663, %v3696
        %v3740 = vadd.f32 %v3664, %v3700
        %v3741 = vadd.f32 %v3665, %v3696
        %v3742 = vadd.f32 %v3666, %v3700
        %v3743 = vadd.f32 %v3667, %v3696
        %v3744 = vadd.f32 %v3668, %v3700
        %v3745 = vadd.f32 %v3669, %v3696
        %v3746 = vadd.f32 %v3670, %v3700
        %v3747 = vadd.f32 %v3671, %v3696
        %v3748 = vadd.f32 %v3672, %v3700
        %v3749 = vadd.f32 %v3673, %v3696
        %v3750 = vadd.f32 %v3674, %v3700
        %v3751 = vadd.f32 %v3675, %v3696
        %v3752 = vadd.f32 %v3676, %v3700
        %v3753 = vadd.f32 %v3677, %v3696
        %v3754 = vadd.f32 %v3678, %v3700
        %v3755 = vadd.f32 %v3679, %v3696
        %v3756 = vadd.f32 %v3680, %v3700
        %v3757 = vadd.f32 %v3681, %v3696
        %v3758 = vadd.f32 %v3682, %v3700
        %v3759 = vadd.f32 %v3683, %v3696
        %v3760 = vadd.f32 %v3684, %v3700
        %v3761 = vadd.f32 %v3685, %v3696
        %v3762 = vadd.f32 %v3686, %v3700
        %v3763 = vadd.f32 %v3687, %v3696
        %v3764 = vadd.f32 %v3688, %v3700
        %v3765 = vadd.f32 %v3689, %v3696
        %v3766 = vadd.f32 %v3690, %v3700
        %vm3767 = vcmp.ge.f32.partialorder %v3703, 0.0
        %vm3768 = vcmp.ge.f32.partialorder %v3704, 0.0
        %vm3769 = vcmp.ge.f32.partialorder %v3705, 0.0
        %vm3770 = vcmp.ge.f32.partialorder %v3706, 0.0
        %vm3771 = vcmp.ge.f32.partialorder %v3707, 0.0
        %vm3772 = vcmp.ge.f32.partialorder %v3708, 0.0
        %vm3773 = vcmp.ge.f32.partialorder %v3709, 0.0
        %vm3774 = vcmp.ge.f32.partialorder %v3710, 0.0
        %vm3775 = vcmp.ge.f32.partialorder %v3711, 0.0
        %vm3776 = vcmp.ge.f32.partialorder %v3712, 0.0
        %vm3777 = vcmp.ge.f32.partialorder %v3713, 0.0
        %vm3778 = vcmp.ge.f32.partialorder %v3714, 0.0
        %vm3779 = vcmp.ge.f32.partialorder %v3715, 0.0
        %vm3780 = vcmp.ge.f32.partialorder %v3716, 0.0
        %vm3781 = vcmp.ge.f32.partialorder %v3717, 0.0
        %vm3782 = vcmp.ge.f32.partialorder %v3718, 0.0
        %vm3783 = vcmp.ge.f32.partialorder %v3719, 0.0
        %vm3784 = vcmp.ge.f32.partialorder %v3720, 0.0
        %vm3785 = vcmp.ge.f32.partialorder %v3721, 0.0
        %vm3786 = vcmp.ge.f32.partialorder %v3722, 0.0
        %vm3787 = vcmp.ge.f32.partialorder %v3723, 0.0
        %vm3788 = vcmp.ge.f32.partialorder %v3724, 0.0
        %vm3789 = vcmp.ge.f32.partialorder %v3725, 0.0
        %vm3790 = vcmp.ge.f32.partialorder %v3726, 0.0
        %vm3791 = vcmp.ge.f32.partialorder %v3727, 0.0
        %vm3792 = vcmp.ge.f32.partialorder %v3728, 0.0
        %vm3793 = vcmp.ge.f32.partialorder %v3729, 0.0
        %vm3794 = vcmp.ge.f32.partialorder %v3730, 0.0
        %vm3795 = vcmp.ge.f32.partialorder %v3731, 0.0
        %vm3796 = vcmp.ge.f32.partialorder %v3732, 0.0
        %vm3797 = vcmp.ge.f32.partialorder %v3733, 0.0
        %vm3798 = vcmp.ge.f32.partialorder %v3734, 0.0
        %vm3799 = vcmp.ge.f32.partialorder %v3735, 0.0
        %vm3800 = vcmp.ge.f32.partialorder %v3736, 0.0
        %vm3801 = vcmp.ge.f32.partialorder %v3737, 0.0
        %vm3802 = vcmp.ge.f32.partialorder %v3738, 0.0
        %vm3803 = vcmp.ge.f32.partialorder %v3739, 0.0
        %vm3804 = vcmp.ge.f32.partialorder %v3740, 0.0
        %vm3805 = vcmp.ge.f32.partialorder %v3741, 0.0
        %vm3806 = vcmp.ge.f32.partialorder %v3742, 0.0
        %vm3807 = vcmp.ge.f32.partialorder %v3743, 0.0
        %vm3808 = vcmp.ge.f32.partialorder %v3744, 0.0
        %vm3809 = vcmp.ge.f32.partialorder %v3745, 0.0
        %vm3810 = vcmp.ge.f32.partialorder %v3746, 0.0
        %vm3811 = vcmp.ge.f32.partialorder %v3747, 0.0
        %vm3812 = vcmp.ge.f32.partialorder %v3748, 0.0
        %vm3813 = vcmp.ge.f32.partialorder %v3749, 0.0
        %vm3814 = vcmp.ge.f32.partialorder %v3750, 0.0
        %vm3815 = vcmp.ge.f32.partialorder %v3751, 0.0
        %vm3816 = vcmp.ge.f32.partialorder %v3752, 0.0
        %vm3817 = vcmp.ge.f32.partialorder %v3753, 0.0
        %vm3818 = vcmp.ge.f32.partialorder %v3754, 0.0
        %vm3819 = vcmp.ge.f32.partialorder %v3755, 0.0
        %vm3820 = vcmp.ge.f32.partialorder %v3756, 0.0
        %vm3821 = vcmp.ge.f32.partialorder %v3757, 0.0
        %vm3822 = vcmp.ge.f32.partialorder %v3758, 0.0
        %vm3823 = vcmp.ge.f32.partialorder %v3759, 0.0
        %vm3824 = vcmp.ge.f32.partialorder %v3760, 0.0
        %vm3825 = vcmp.ge.f32.partialorder %v3761, 0.0
        %vm3826 = vcmp.ge.f32.partialorder %v3762, 0.0
        %vm3827 = vcmp.ge.f32.partialorder %v3763, 0.0
        %vm3828 = vcmp.ge.f32.partialorder %v3764, 0.0
        %vm3829 = vcmp.ge.f32.partialorder %v3765, 0.0
        %vm3830 = vcmp.ge.f32.partialorder %v3766, 0.0
        %v3831 = vstv %s232
        %v3832 = vmul.f32 %v3831, %v3703
        %v3833 = vmul.f32 %v3831, %v3704
        %v3834 = vmul.f32 %v3831, %v3705
        %v3835 = vmul.f32 %v3831, %v3706
        %v3836 = vmul.f32 %v3831, %v3707
        %v3837 = vmul.f32 %v3831, %v3708
        %v3838 = vmul.f32 %v3831, %v3709
        %v3839 = vmul.f32 %v3831, %v3710
        %v3840 = vmul.f32 %v3831, %v3711
        %v3841 = vmul.f32 %v3831, %v3712
        %v3842 = vmul.f32 %v3831, %v3713
        %v3843 = vmul.f32 %v3831, %v3714
        %v3844 = vmul.f32 %v3831, %v3715
        %v3845 = vmul.f32 %v3831, %v3716
        %v3846 = vmul.f32 %v3831, %v3717
        %v3847 = vmul.f32 %v3831, %v3718
        %v3848 = vmul.f32 %v3831, %v3719
        %v3849 = vmul.f32 %v3831, %v3720
        %v3850 = vmul.f32 %v3831, %v3721
        %v3851 = vmul.f32 %v3831, %v3722
        %v3852 = vmul.f32 %v3831, %v3723
        %v3853 = vmul.f32 %v3831, %v3724
        %v3854 = vmul.f32 %v3831, %v3725
        %v3855 = vmul.f32 %v3831, %v3726
        %v3856 = vmul.f32 %v3831, %v3727
        %v3857 = vmul.f32 %v3831, %v3728
        %v3858 = vmul.f32 %v3831, %v3729
        %v3859 = vmul.f32 %v3831, %v3730
        %v3860 = vmul.f32 %v3831, %v3731
        %v3861 = vmul.f32 %v3831, %v3732
        %v3862 = vmul.f32 %v3831, %v3733
        %v3863 = vmul.f32 %v3831, %v3734
        %v3864 = vmul.f32 %v3831, %v3735
        %v3865 = vmul.f32 %v3831, %v3736
        %v3866 = vmul.f32 %v3831, %v3737
        %v3867 = vmul.f32 %v3831, %v3738
        %v3868 = vmul.f32 %v3831, %v3739
        %v3869 = vmul.f32 %v3831, %v3740
        %v3870 = vmul.f32 %v3831, %v3741
        %v3871 = vmul.f32 %v3831, %v3742
        %v3872 = vmul.f32 %v3831, %v3743
        %v3873 = vmul.f32 %v3831, %v3744
        %v3874 = vmul.f32 %v3831, %v3745
        %v3875 = vmul.f32 %v3831, %v3746
        %v3876 = vmul.f32 %v3831, %v3747
        %v3877 = vmul.f32 %v3831, %v3748
        %v3878 = vmul.f32 %v3831, %v3749
        %v3879 = vmul.f32 %v3831, %v3750
        %v3880 = vmul.f32 %v3831, %v3751
        %v3881 = vmul.f32 %v3831, %v3752
        %v3882 = vmul.f32 %v3831, %v3753
        %v3883 = vmul.f32 %v3831, %v3754
        %v3884 = vmul.f32 %v3831, %v3755
        %v3885 = vmul.f32 %v3831, %v3756
        %v3886 = vmul.f32 %v3831, %v3757
        %v3887 = vmul.f32 %v3831, %v3758
        %v3888 = vmul.f32 %v3831, %v3759
        %v3889 = vmul.f32 %v3831, %v3760
        %v3890 = vmul.f32 %v3831, %v3761
        %v3891 = vmul.f32 %v3831, %v3762
        %v3892 = vmul.f32 %v3831, %v3763
        %v3893 = vmul.f32 %v3831, %v3764
        %v3894 = vmul.f32 %v3831, %v3765
        %v3895 = vmul.f32 %v3831, %v3766
        %v3896 = vsel %vm3767, %v3703, %v3832
        %v3897 = vsel %vm3768, %v3704, %v3833
        %v3898 = vsel %vm3769, %v3705, %v3834
        %v3899 = vsel %vm3770, %v3706, %v3835
        %v3900 = vsel %vm3771, %v3707, %v3836
        %v3901 = vsel %vm3772, %v3708, %v3837
        %v3902 = vsel %vm3773, %v3709, %v3838
        %v3903 = vsel %vm3774, %v3710, %v3839
        %v3904 = vsel %vm3775, %v3711, %v3840
        %v3905 = vsel %vm3776, %v3712, %v3841
        %v3906 = vsel %vm3777, %v3713, %v3842
        %v3907 = vsel %vm3778, %v3714, %v3843
        %v3908 = vsel %vm3779, %v3715, %v3844
        %v3909 = vsel %vm3780, %v3716, %v3845
        %v3910 = vsel %vm3781, %v3717, %v3846
        %v3911 = vsel %vm3782, %v3718, %v3847
        %v3912 = vsel %vm3783, %v3719, %v3848
        %v3913 = vsel %vm3784, %v3720, %v3849
        %v3914 = vsel %vm3785, %v3721, %v3850
        %v3915 = vsel %vm3786, %v3722, %v3851
        %v3916 = vsel %vm3787, %v3723, %v3852
        %v3917 = vsel %vm3788, %v3724, %v3853
        %v3918 = vsel %vm3789, %v3725, %v3854
        %v3919 = vsel %vm3790, %v3726, %v3855
        %v3920 = vsel %vm3791, %v3727, %v3856
        %v3921 = vsel %vm3792, %v3728, %v3857
        %v3922 = vsel %vm3793, %v3729, %v3858
        %v3923 = vsel %vm3794, %v3730, %v3859
        %v3924 = vsel %vm3795, %v3731, %v3860
        %v3925 = vsel %vm3796, %v3732, %v3861
        %v3926 = vsel %vm3797, %v3733, %v3862
        %v3927 = vsel %vm3798, %v3734, %v3863
        %v3928 = vsel %vm3799, %v3735, %v3864
        %v3929 = vsel %vm3800, %v3736, %v3865
        %v3930 = vsel %vm3801, %v3737, %v3866
        %v3931 = vsel %vm3802, %v3738, %v3867
        %v3932 = vsel %vm3803, %v3739, %v3868
        %v3933 = vsel %vm3804, %v3740, %v3869
        %v3934 = vsel %vm3805, %v3741, %v3870
        %v3935 = vsel %vm3806, %v3742, %v3871
        %v3936 = vsel %vm3807, %v3743, %v3872
        %v3937 = vsel %vm3808, %v3744, %v3873
        %v3938 = vsel %vm3809, %v3745, %v3874
        %v3939 = vsel %vm3810, %v3746, %v3875
        %v3940 = vsel %vm3811, %v3747, %v3876
        %v3941 = vsel %vm3812, %v3748, %v3877
        %v3942 = vsel %vm3813, %v3749, %v3878
        %v3943 = vsel %vm3814, %v3750, %v3879
        %v3944 = vsel %vm3815, %v3751, %v3880
        %v3945 = vsel %vm3816, %v3752, %v3881
        %v3946 = vsel %vm3817, %v3753, %v3882
        %v3947 = vsel %vm3818, %v3754, %v3883
        %v3948 = vsel %vm3819, %v3755, %v3884
        %v3949 = vsel %vm3820, %v3756, %v3885
        %v3950 = vsel %vm3821, %v3757, %v3886
        %v3951 = vsel %vm3822, %v3758, %v3887
        %v3952 = vsel %vm3823, %v3759, %v3888
        %v3953 = vsel %vm3824, %v3760, %v3889
        %v3954 = vsel %vm3825, %v3761, %v3890
        %v3955 = vsel %vm3826, %v3762, %v3891
        %v3956 = vsel %vm3827, %v3763, %v3892
        %v3957 = vsel %vm3828, %v3764, %v3893
        %v3958 = vsel %vm3829, %v3765, %v3894
        %v3959 = vsel %vm3830, %v3766, %v3895
        %3960 = vst [vmem:[%s231] sm:$0xff] %v3896
        %3961 = vst [vmem:[%s231 + $0x8] sm:$0xff] %v3897
        %3962 = vst [vmem:[%s231 + $0x10] sm:$0xff] %v3898
        %3963 = vst [vmem:[%s231 + $0x18] sm:$0xff] %v3899
        %3964 = vst [vmem:[%s231 + $0x20] sm:$0xff] %v3900
        %3965 = vst [vmem:[%s231 + $0x28] sm:$0xff] %v3901
        %3966 = vst [vmem:[%s231 + $0x30] sm:$0xff] %v3902
        %3967 = vst [vmem:[%s231 + $0x38] sm:$0xff] %v3903
        %3968 = vst [vmem:[%s231 + $0x40] sm:$0xff] %v3904
        %3969 = vst [vmem:[%s231 + $0x48] sm:$0xff] %v3905
        %3970 = vst [vmem:[%s231 + $0x50] sm:$0xff] %v3906
        %3971 = vst [vmem:[%s231 + $0x58] sm:$0xff] %v3907
        %3972 = vst [vmem:[%s231 + $0x60] sm:$0xff] %v3908
        %3973 = vst [vmem:[%s231 + $0x68] sm:$0xff] %v3909
        %3974 = vst [vmem:[%s231 + $0x70] sm:$0xff] %v3910
        %3975 = vst [vmem:[%s231 + $0x78] sm:$0xff] %v3911
        %3976 = vst [vmem:[%s231 + $0x80] sm:$0xff] %v3912
        %3977 = vst [vmem:[%s231 + $0x88] sm:$0xff] %v3913
        %3978 = vst [vmem:[%s231 + $0x90] sm:$0xff] %v3914
        %3979 = vst [vmem:[%s231 + $0x98] sm:$0xff] %v3915
        %3980 = vst [vmem:[%s231 + $0xa0] sm:$0xff] %v3916
        %3981 = vst [vmem:[%s231 + $0xa8] sm:$0xff] %v3917
        %3982 = vst [vmem:[%s231 + $0xb0] sm:$0xff] %v3918
        %3983 = vst [vmem:[%s231 + $0xb8] sm:$0xff] %v3919
        %3984 = vst [vmem:[%s231 + $0xc0] sm:$0xff] %v3920
        %3985 = vst [vmem:[%s231 + $0xc8] sm:$0xff] %v3921
        %3986 = vst [vmem:[%s231 + $0xd0] sm:$0xff] %v3922
        %3987 = vst [vmem:[%s231 + $0xd8] sm:$0xff] %v3923
        %3988 = vst [vmem:[%s231 + $0xe0] sm:$0xff] %v3924
        %3989 = vst [vmem:[%s231 + $0xe8] sm:$0xff] %v3925
        %3990 = vst [vmem:[%s231 + $0xf0] sm:$0xff] %v3926
        %3991 = vst [vmem:[%s231 + $0xf8] sm:$0xff] %v3927
        %3992 = vst [vmem:[%s231 + $0x100] sm:$0xff] %v3928
        %3993 = vst [vmem:[%s231 + $0x108] sm:$0xff] %v3929
        %3994 = vst [vmem:[%s231 + $0x110] sm:$0xff] %v3930
        %3995 = vst [vmem:[%s231 + $0x118] sm:$0xff] %v3931
        %3996 = vst [vmem:[%s231 + $0x120] sm:$0xff] %v3932
        %3997 = vst [vmem:[%s231 + $0x128] sm:$0xff] %v3933
        %3998 = vst [vmem:[%s231 + $0x130] sm:$0xff] %v3934
        %3999 = vst [vmem:[%s231 + $0x138] sm:$0xff] %v3935
        %4000 = vst [vmem:[%s231 + $0x140] sm:$0xff] %v3936
        %4001 = vst [vmem:[%s231 + $0x148] sm:$0xff] %v3937
        %4002 = vst [vmem:[%s231 + $0x150] sm:$0xff] %v3938
        %4003 = vst [vmem:[%s231 + $0x158] sm:$0xff] %v3939
        %4004 = vst [vmem:[%s231 + $0x160] sm:$0xff] %v3940
        %4005 = vst [vmem:[%s231 + $0x168] sm:$0xff] %v3941
        %4006 = vst [vmem:[%s231 + $0x170] sm:$0xff] %v3942
        %4007 = vst [vmem:[%s231 + $0x178] sm:$0xff] %v3943
        %4008 = vst [vmem:[%s231 + $0x180] sm:$0xff] %v3944
        %4009 = vst [vmem:[%s231 + $0x188] sm:$0xff] %v3945
        %4010 = vst [vmem:[%s231 + $0x190] sm:$0xff] %v3946
        %4011 = vst [vmem:[%s231 + $0x198] sm:$0xff] %v3947
        %4012 = vst [vmem:[%s231 + $0x1a0] sm:$0xff] %v3948
        %4013 = vst [vmem:[%s231 + $0x1a8] sm:$0xff] %v3949
        %4014 = vst [vmem:[%s231 + $0x1b0] sm:$0xff] %v3950
        %4015 = vst [vmem:[%s231 + $0x1b8] sm:$0xff] %v3951
        %4016 = vst [vmem:[%s231 + $0x1c0] sm:$0xff] %v3952
        %4017 = vst [vmem:[%s231 + $0x1c8] sm:$0xff] %v3953
        %4018 = vst [vmem:[%s231 + $0x1d0] sm:$0xff] %v3954
        %4019 = vst [vmem:[%s231 + $0x1d8] sm:$0xff] %v3955
        %4020 = vst [vmem:[%s231 + $0x1e0] sm:$0xff] %v3956
        %4021 = vst [vmem:[%s231 + $0x1e8] sm:$0xff] %v3957
        %4022 = vst [vmem:[%s231 + $0x1f0] sm:$0xff] %v3958
        %4023 = vst [vmem:[%s231 + $0x1f8] sm:$0xff] %v3959
        %s4024 = sand.u32 %s120, 1
        %s4025 = scalar_lea.sflag [#allocation5], %s4024
        %s4026 = sand.u32 %s120, 1
        %s4027 = smul.addr %s4026, 512
        %s4028 = scalar_lea.vmem [#allocation8], %s4027
        // Predicated region
        $region45: #{tpu_custom_call.1} parent=35 // pred_check
          %p4029 = pneg %p130
        $region46: #{tpu_custom_call.1} parent=35 // pred_check_branch
          %4031 = sbr.rel (%p4029) target = $region48
        $region47: #{tpu_custom_call.1} parent=35 // pred_region
          %s4033 = ssub.s32 8192, 8192
          %4034 = vsyncadd %s4025, %s4033
          %s4035 = smul.addr %s23, 64
          %s4036 = smul.addr %s4035, 128
          %s4037 = scalar_lea.hbm %s4, %s4036
          %s4038 = sshll.u32 %s4028, 4
          %s4039 = int_to_ptr.vmem [resolvable:$true] %s4038
          %4044 = dma.vmem_to_hbm [thread:$0]  %s4039, 8192, %s4037, %s4025, 256, 256, 16
        $region48: #{tpu_custom_call.1} parent=35 // pred_fallthru
          _
      $region36: #{tpu_custom_call.1} parent=5 // pred_fallthru
        _
      %p4045 = scmp.le.s32.totalorder 2, %s18
      // Predicated region
      $region49: #{tpu_custom_call.1} parent=5 // pred_check
        %p4046 = pneg %p4045
      $region50: #{tpu_custom_call.1} parent=5 // pred_check_branch
        %4048 = sbr.rel (%p4046) target = $region52
      $region51: #{tpu_custom_call.1} parent=5 // pred_region
        %s4049 = ssub.s32 %s18, 2
        // Predicated region
        $region53: #{tpu_custom_call.1} parent=51 // pred_check
          %p4050 = pneg %p136
        $region54: #{tpu_custom_call.1} parent=51 // pred_check_branch
          %4052 = sbr.rel (%p4050) target = $region56
        $region55: #{tpu_custom_call.1} parent=51 // pred_region
          %s4053 = sand.u32 %s121, 1
          %s4054 = scalar_lea.sflag [#allocation5], %s4053
          %s4055 = sand.u32 %s121, 1
          %s4056 = smul.addr %s4055, 512
          %s4057 = scalar_lea.vmem [#allocation8], %s4056
          %4058 = dma.done %s4054, 8192
        $region56: #{tpu_custom_call.1} parent=51 // pred_fallthru
          _
      $region52: #{tpu_custom_call.1} parent=5 // pred_fallthru
        _
    $region6: #{tpu_custom_call.1} parent=1 // loop_footer
      %s22 = sadd.s32 1, %s18
    $region7: #{tpu_custom_call.1} parent=1 // loop_footer_branch
      %17 = sbr.rel target = $region3
    $region8: #{tpu_custom_call.1} parent=1 // loop_exit
      _
    %4059 = vsyncpa [#allocation4], 1
    %s4060 = scalar_lea.sflag [#allocation4], 1
    %4061 = vsyncpa %s4060, 1
    %4062 = vsyncpa [#allocation7], 1
    %4063 = vsyncpa [#allocation5], 1
    %s4064 = scalar_lea.sflag [#allocation5], 1
    %4065 = vsyncpa %s4064, 1

</llo_original>
